<compile_context>
chip_gen: v7x
topology: tpu7x:2x2x1
jax: 0.10.0
libtpu: 0.0.40
codegen_flags: <defaults>
</compile_context>

<pallas_src>
import jax
import jax.numpy as jnp
from jax import lax
from jax.experimental import pallas as pl
from jax.experimental.pallas import tpu as pltpu

N_STATS = 9  # cosine partial sums emitted per sample by the gram kernel


# ----------------------- Kernel A: fused branch pipeline -----------------------

def _branch_kernel(x_ref, cw_ref, cb_ref, pmat_ref, w1_ref, b1_ref,
                   w2_ref, b2_ref, queue_ref,
                   feat_ref, z_ref, logits_ref, pooled_acc):
    mt = pl.program_id(1)

    @pl.when(mt == 0)
    def _():
        pooled_acc[...] = jnp.zeros_like(pooled_acc)

    # 1x1 conv as a token matmul (bf16 MXU operands, f32 accumulate) + ReLU.
    x = x_ref[0]                                             # (TM, Cin) bf16
    w = cw_ref[0].astype(jnp.bfloat16)                       # (Cin, Cf)
    feat = jnp.dot(x, w, preferred_element_type=jnp.float32) + cb_ref[0]
    feat = jnp.maximum(feat, 0.0)                            # (TM, Cf) f32
    feat_bf = feat.astype(jnp.bfloat16)
    feat_ref[0] = feat_bf                                    # bf16 feature tile

    # Partial adaptive average pool via a pooling matrix (MXU, no reshapes).
    pooled_acc[...] += jnp.dot(pmat_ref[...], feat_bf,
                               preferred_element_type=jnp.float32)  # (B, Cf)

    @pl.when(mt == pl.num_programs(1) - 1)
    def _():
        pooled = pooled_acc[...]                             # (B, Cf) f32
        h = jnp.dot(pooled.astype(jnp.bfloat16),
                    w1_ref[0].astype(jnp.bfloat16),
                    preferred_element_type=jnp.float32) + b1_ref[0]
        h = jnp.maximum(h, 0.0)
        z = jnp.dot(h.astype(jnp.bfloat16),
                    w2_ref[0].astype(jnp.bfloat16),
                    preferred_element_type=jnp.float32) + b2_ref[0]
        # F.normalize(dim=1): rsqrt on the EUP slot.
        inv = lax.rsqrt(jnp.maximum(jnp.sum(z * z, axis=1, keepdims=True),
                                    1e-24))
        zn = z * inv                                         # (B, D) f32
        z_ref[0] = zn
        # Fused contrastive logits against the (VMEM-resident) queue.
        logits_ref[0] = jnp.dot(zn.astype(jnp.bfloat16),
                                queue_ref[...].astype(jnp.bfloat16),
                                preferred_element_type=jnp.float32)


def branch_forward(x_stack, conv_w, conv_b, pool_mat, w1, b1, w2, b2, queue,
                   *, token_tile=256):
    NB, BHW, Cin = x_stack.shape
    B = pool_mat.shape[0]
    Cf = conv_w.shape[-1]
    H1 = w1.shape[-1]
    D = w2.shape[-1]
    K = queue.shape[-1]
    TM = min(token_tile, BHW)
    assert BHW % TM == 0, "token count must be divisible by the token tile"

    return pl.pallas_call(
        _branch_kernel,
        out_shape=(jax.ShapeDtypeStruct((NB, BHW, Cf), jnp.bfloat16),
                   jax.ShapeDtypeStruct((NB, B, D), jnp.float32),
                   jax.ShapeDtypeStruct((NB, B, K), jnp.float32)),
        grid=(NB, BHW // TM),
        in_specs=[
            pl.BlockSpec((1, TM, Cin), lambda i, m: (i, m, 0)),
            pl.BlockSpec((1, Cin, Cf), lambda i, m: (i, 0, 0)),
            pl.BlockSpec((1, 1, Cf), lambda i, m: (i, 0, 0)),
            pl.BlockSpec((B, TM), lambda i, m: (0, m)),
            pl.BlockSpec((1, Cf, H1), lambda i, m: (i, 0, 0)),
            pl.BlockSpec((1, 1, H1), lambda i, m: (i, 0, 0)),
            pl.BlockSpec((1, H1, D), lambda i, m: (i, 0, 0)),
            pl.BlockSpec((1, 1, D), lambda i, m: (i, 0, 0)),
            pl.BlockSpec((D, K), lambda i, m: (0, 0)),
        ],
        out_specs=(
            pl.BlockSpec((1, TM, Cf), lambda i, m: (i, m, 0)),
            pl.BlockSpec((1, B, D), lambda i, m: (i, 0, 0)),
            pl.BlockSpec((1, B, K), lambda i, m: (i, 0, 0)),
        ),
        scratch_shapes=[pltpu.VMEM((B, Cf), jnp.float32)],
        compiler_params=pltpu.CompilerParams(
            dimension_semantics=("parallel", "arbitrary"),
            vmem_limit_bytes=32 * 1024 * 1024),
    )(x_stack, conv_w, conv_b, pool_mat, w1, b1, w2, b2, queue)


# ----------------------- Kernel B: fused gram-loss stats -----------------------

def _gram_stats_kernel(f1_ref, f2_ref, f3_ref, o_ref):
    dn = (((0,), (0,)), ((), ()))   # contract over spatial dim, no transpose

    def gram(a):
        return lax.dot_general(a, a, dimension_numbers=dn,
                               preferred_element_type=jnp.float32)

    f1 = f1_ref[0]                                            # (HW, Cf) bf16
    f2 = f2_ref[0]
    f3 = f3_ref[0]
    g1 = gram(f1)
    g2 = gram(f2)
    g3 = gram(f3)
    a12 = ((f1.astype(jnp.float32) + f2.astype(jnp.float32)) * 0.5
           ).astype(jnp.bfloat16)
    a13 = ((f1.astype(jnp.float32) + f3.astype(jnp.float32)) * 0.5
           ).astype(jnp.bfloat16)
    g12 = gram(a12)
    g13 = gram(a13)
    # fn_means: per-sample scalar mean; only the averaged gram is centered
    # (matches the reference's asymmetric centering).
    c12 = g12 - jnp.mean(g12, keepdims=True)
    c13 = g13 - jnp.mean(g13, keepdims=True)

    def s(x):                       # full reduce, kept 2-D: (1, 1)
        return jnp.sum(x, keepdims=True)

    stats = [s(c12 * g1), s(c12 * g2), s(c12 * c12), s(g1 * g1), s(g2 * g2),
             s(c13 * g1), s(c13 * g3), s(c13 * c13), s(g3 * g3)]
    lane = lax.broadcasted_iota(jnp.int32, (1, N_STATS), 1)
    row = jnp.zeros((1, N_STATS), jnp.float32)
    for i, v in enumerate(stats):
        row = row + jnp.where(lane == i, v, 0.0)
    o_ref[0] = row


def gram_stats(feats, *, batch, hw):
    NB, BHW, Cf = feats.shape
    assert NB == 3 and BHW == batch * hw

    def spec(branch):
        return pl.BlockSpec((1, hw, Cf), lambda b, _br=branch: (_br, b, 0))

    return pl.pallas_call(
        _gram_stats_kernel,
        out_shape=jax.ShapeDtypeStruct((batch, 1, N_STATS), jnp.float32),
        grid=(batch,),
        in_specs=[spec(0), spec(1), spec(2)],
        out_specs=pl.BlockSpec((1, 1, N_STATS), lambda b: (b, 0, 0)),
        compiler_params=pltpu.CompilerParams(
            dimension_semantics=("parallel",),
            vmem_limit_bytes=32 * 1024 * 1024),
    )(feats, feats, feats)


# ------------------------- Kernel C: soft cross-entropy -------------------------

def _soft_ce_kernel(logits_ref, qk_ref, qv_ref):
    lq = logits_ref[0] * (1.0 / 0.1)      # student logits / 0.1
    lk = logits_ref[1] * (1.0 / 0.04)     # teacher (k) logits / 0.04
    lv = logits_ref[2] * (1.0 / 0.04)     # teacher (v) logits / 0.04

    lq_sh = lq - jnp.max(lq, axis=1, keepdims=True)
    log_p = lq_sh - jnp.log(jnp.sum(jnp.exp(lq_sh), axis=1, keepdims=True))

    def softmax(l):
        e = jnp.exp(l - jnp.max(l, axis=1, keepdims=True))
        return e * pl.reciprocal(jnp.sum(e, axis=1, keepdims=True), approx=True)

    qk_ref[...] = -jnp.sum(softmax(lk) * log_p, axis=1, keepdims=True)
    qv_ref[...] = -jnp.sum(softmax(lv) * log_p, axis=1, keepdims=True)


def soft_ce_rows(logits):
    NB, B, K = logits.shape
    return pl.pallas_call(
        _soft_ce_kernel,
        out_shape=(jax.ShapeDtypeStruct((B, 1), jnp.float32),
                   jax.ShapeDtypeStruct((B, 1), jnp.float32)),
        grid=(1,),
        in_specs=[pl.BlockSpec((NB, B, K), lambda i: (0, 0, 0))],
        out_specs=(pl.BlockSpec((B, 1), lambda i: (0, 0)),
                   pl.BlockSpec((B, 1), lambda i: (0, 0))),
    )(logits)


# ------------------------------- plain-JAX glue -------------------------------

def init_params(key, c_in=4, c_feat=128, hidden=128, dim=128, queue_len=512):
    k0, k1, k2, k3 = jax.random.split(key, 4)
    params = dict(
        conv_w=jax.random.normal(k0, (c_in, c_feat), jnp.float32) * 0.1,
        conv_b=jnp.zeros((c_feat,), jnp.float32),
        w1=jax.random.normal(k1, (c_feat, hidden), jnp.float32) * 0.1,
        b1=jnp.zeros((hidden,), jnp.float32),
        w2=jax.random.normal(k2, (hidden, dim), jnp.float32) * 0.1,
        b2=jnp.zeros((dim,), jnp.float32),
    )
    queue = jax.random.normal(k3, (dim, queue_len), jnp.float32)
    queue = queue / jnp.linalg.norm(queue, axis=0, keepdims=True)
    return params, queue


def ressl_forward(params_q, params_k, params_style, queue, queue_ptr,
                  im1, im2, im3, m=0.99):
    # Momentum update of key / style encoders (parameters are identical copies
    # at init, so numerically a no-op, as in the reference).
    ema = lambda pk, pq: pk * m + pq * (1.0 - m)
    params_k = jax.tree_util.tree_map(ema, params_k, params_q)
    params_style = jax.tree_util.tree_map(ema, params_style, params_q)

    B, Cin, H, W = im1.shape
    HW = H * W

    # NCHW -> token-major (B*HW, Cin), stacked over the 3 branches, bf16.
    def tokens(x):
        return jnp.transpose(x, (0, 2, 3, 1)).reshape(B * HW, Cin)

    x_stack = jnp.stack([tokens(im1), tokens(im2), tokens(im3)]
                        ).astype(jnp.bfloat16)
    # TODO(synk): the reference's batch shuffle/unshuffle of im2/im3 only
    # de-biases BatchNorm; the synthetic backbone has no cross-sample stats,
    # so it is a numerical no-op and is skipped.

    def stack(name):
        return jnp.stack([params_q[name], params_k[name], params_style[name]])

    conv_w = stack("conv_w")
    conv_b = stack("conv_b")[:, None, :]
    w1 = stack("w1")
    b1 = stack("b1")[:, None, :]
    w2 = stack("w2")
    b2 = stack("b2")[:, None, :]

    # Pooling matrix for AdaptiveAvgPool2d(1): (B, B*HW), 1/HW in own block.
    pool_mat = (jnp.repeat(jnp.eye(B, dtype=jnp.float32), HW, axis=1)
                * (1.0 / HW)).astype(jnp.bfloat16)

    feats, zs, logits = branch_forward(
        x_stack, conv_w, conv_b, pool_mat, w1, b1, w2, b2, queue)
    q, k, v = zs[0], zs[1], zs[2]
    del q  # only needed through `logits` (already computed in-kernel)

    # Contrastive soft cross-entropies (logits were fused into kernel A).
    rows_qk, rows_qv = soft_ce_rows(logits)
    loss_qk = jnp.mean(rows_qk)
    loss_qv = jnp.mean(rows_qv)

    # Gram losses: all grams + centering + cosine partial sums fused in-kernel;
    # only 9 scalars per sample come back to XLA.
    stats = jnp.sum(gram_stats(feats, batch=B, hw=HW), axis=0)[0]   # (9,)
    eps = 1e-8

    def cos(d, na, nb):
        return d / (jnp.maximum(jnp.sqrt(na), eps) *
                    jnp.maximum(jnp.sqrt(nb), eps))

    loss2 = (0.5 * (1.0 - cos(stats[0], stats[2], stats[3])) +
             0.5 * (1.0 - cos(stats[1], stats[2], stats[4])))
    loss3 = (0.5 * (1.0 - cos(stats[5], stats[7], stats[3])) +
             0.5 * (1.0 - cos(stats[6], stats[7], stats[8])))

    # _dequeue_and_enqueue with a rotating pointer: enqueue k, then v.
    K = queue.shape[1]
    new_queue = lax.dynamic_update_slice_in_dim(queue, k.T, queue_ptr, axis=1)
    ptr = (queue_ptr + B) % K
    new_queue = lax.dynamic_update_slice_in_dim(new_queue, v.T, ptr, axis=1)
    new_ptr = (ptr + B) % K

    return loss2, loss3, loss_qk, loss_qv, new_queue, new_ptr


if __name__ == "__main__":
    key = jax.random.PRNGKey(0)
    kparam, ki1, ki2, ki3 = jax.random.split(key, 4)

    params_q, queue = init_params(kparam)
    # encoder_k / encoder_style start as exact copies of the query encoder.
    params_k = jax.tree_util.tree_map(lambda x: x, params_q)
    params_style = jax.tree_util.tree_map(lambda x: x, params_q)
    queue_ptr = jnp.array(0, jnp.int32)

    B, C, H, W = 2, 4, 16, 16
    im1 = jax.random.normal(ki1, (B, C, H, W), jnp.float32)
    im2 = jax.random.normal(ki2, (B, C, H, W), jnp.float32)
    im3 = jax.random.normal(ki3, (B, C, H, W), jnp.float32)

    fwd = jax.jit(ressl_forward)
    out = fwd(params_q, params_k, params_style, queue, queue_ptr,
              im1, im2, im3)
    jax.block_until_ready(out)
    print("KERNEL_OK")
</pallas_src>

<mosaic_0001>
module attributes {stable_mosaic.version = 11 : i64} {
  func.func @_branch_kernel(%arg0: i32, %arg1: i32, %arg2: memref<1x256x4xbf16, #tpu.memory_space<vmem>>, %arg3: memref<1x4x128xf32, #tpu.memory_space<vmem>>, %arg4: memref<1x1x128xf32, #tpu.memory_space<vmem>>, %arg5: memref<2x256xbf16, #tpu.memory_space<vmem>>, %arg6: memref<1x128x128xf32, #tpu.memory_space<vmem>>, %arg7: memref<1x1x128xf32, #tpu.memory_space<vmem>>, %arg8: memref<1x128x128xf32, #tpu.memory_space<vmem>>, %arg9: memref<1x1x128xf32, #tpu.memory_space<vmem>>, %arg10: memref<128x512xf32, #tpu.memory_space<vmem>>, %arg11: memref<1x256x128xbf16, #tpu.memory_space<vmem>>, %arg12: memref<1x2x128xf32, #tpu.memory_space<vmem>>, %arg13: memref<1x2x512xf32, #tpu.memory_space<vmem>>, %arg14: memref<2x128xf32, #tpu.memory_space<vmem>>) attributes {dimension_semantics = [#tpu.dimension_semantics<parallel>, #tpu.dimension_semantics<arbitrary>], iteration_bounds = array<i64: 3, 2>, scalar_prefetch = 0 : i64, scratch_operands = 1 : i64, tpu.core_type = #tpu.core_type<tc>, window_params = [{transform_indices = @transform_0, window_bounds = array<i64: 1, 256, 4>}, {transform_indices = @transform_1, window_bounds = array<i64: 1, 4, 128>}, {transform_indices = @transform_2, window_bounds = array<i64: 1, 1, 128>}, {transform_indices = @transform_3, window_bounds = array<i64: 2, 256>}, {transform_indices = @transform_4, window_bounds = array<i64: 1, 128, 128>}, {transform_indices = @transform_5, window_bounds = array<i64: 1, 1, 128>}, {transform_indices = @transform_6, window_bounds = array<i64: 1, 128, 128>}, {transform_indices = @transform_7, window_bounds = array<i64: 1, 1, 128>}, {pipeline_mode = #tpu.pipeline_mode<synchronous>, transform_indices = @transform_8, window_bounds = array<i64: 128, 512>}, {transform_indices = @transform_9, window_bounds = array<i64: 1, 256, 128>}, {transform_indices = @transform_10, window_bounds = array<i64: 1, 2, 128>}, {transform_indices = @transform_11, window_bounds = array<i64: 1, 2, 512>}]} {
    %c0_i32 = arith.constant 0 : i32
    %0 = arith.cmpi eq, %arg1, %c0_i32 : i32
    %1 = arith.extui %0 : i1 to i32
    %c0_i32_0 = arith.constant 0 : i32
    %2 = arith.cmpi ne, %1, %c0_i32_0 : i32
    scf.if %2 {
      %cst_21 = arith.constant 0.000000e+00 : f32
      %27 = vector.broadcast %cst_21 : f32 to vector<2x128xf32>
      %c0_22 = arith.constant 0 : index
      %c0_23 = arith.constant 0 : index
      %28 = vector.load %arg14[%c0_22, %c0_23] : memref<2x128xf32, #tpu.memory_space<vmem>>, vector<2x128xf32>
      tpu.vector_store %arg14[%c0_22, %c0_23], %27 {strides = array<i32>} : memref<2x128xf32, #tpu.memory_space<vmem>>, vector<2x128xf32>,
    } else {
    }
    %c0 = arith.constant 0 : index
    %c0_1 = arith.constant 0 : index
    %c0_2 = arith.constant 0 : index
    %3 = vector.load %arg2[%c0, %c0_1, %c0_2] : memref<1x256x4xbf16, #tpu.memory_space<vmem>>, vector<1x256x4xbf16>
    %4 = vector.shape_cast %3 : vector<1x256x4xbf16> to vector<256x4xbf16>
    %c0_3 = arith.constant 0 : index
    %c0_4 = arith.constant 0 : index
    %c0_5 = arith.constant 0 : index
    %5 = vector.load %arg3[%c0_3, %c0_4, %c0_5] : memref<1x4x128xf32, #tpu.memory_space<vmem>>, vector<1x4x128xf32>
    %6 = vector.shape_cast %5 : vector<1x4x128xf32> to vector<4x128xf32>
    %7 = arith.truncf %6 : vector<4x128xf32> to vector<4x128xbf16>
    %cst = arith.constant dense<0.000000e+00> : vector<256x128xf32>
    %8 = tpu.matmul %4, %7, %cst {dimension_numbers = #tpu.dot_dimension_numbers<[1], [0], [0], [1], [0, 0, 1, 1], [], []>} : vector<256x4xbf16>, vector<4x128xbf16>, vector<256x128xf32> -> vector<256x128xf32>
    %c0_6 = arith.constant 0 : index
    %c0_7 = arith.constant 0 : index
    %c0_8 = arith.constant 0 : index
    %9 = vector.load %arg4[%c0_6, %c0_7, %c0_8] : memref<1x1x128xf32, #tpu.memory_space<vmem>>, vector<1x1x128xf32>
    %10 = vector.shape_cast %9 : vector<1x1x128xf32> to vector<1x128xf32>
    %11 = vector.broadcast %10 : vector<1x128xf32> to vector<256x128xf32>
    %12 = arith.addf %8, %11 : vector<256x128xf32>
    %cst_9 = arith.constant 0.000000e+00 : f32
    %13 = vector.broadcast %cst_9 : f32 to vector<256x128xf32>
    %14 = arith.maximumf %12, %13 : vector<256x128xf32>
    %15 = arith.truncf %14 : vector<256x128xf32> to vector<256x128xbf16>
    %c0_10 = arith.constant 0 : index
    %c0_11 = arith.constant 0 : index
    %c0_12 = arith.constant 0 : index
    %16 = vector.load %arg11[%c0_10, %c0_11, %c0_12] : memref<1x256x128xbf16, #tpu.memory_space<vmem>>, vector<1x256x128xbf16>
    %17 = vector.shape_cast %16 : vector<1x256x128xbf16> to vector<256x128xbf16>
    %18 = vector.shape_cast %15 : vector<256x128xbf16> to vector<1x256x128xbf16>
    tpu.vector_store %arg11[%c0_10, %c0_11, %c0_12], %18 {strides = array<i32>} : memref<1x256x128xbf16, #tpu.memory_space<vmem>>, vector<1x256x128xbf16>,
    %c0_13 = arith.constant 0 : index
    %c0_14 = arith.constant 0 : index
    %19 = vector.load %arg14[%c0_13, %c0_14] : memref<2x128xf32, #tpu.memory_space<vmem>>, vector<2x128xf32>
    %c0_15 = arith.constant 0 : index
    %c0_16 = arith.constant 0 : index
    %20 = vector.load %arg5[%c0_15, %c0_16] : memref<2x256xbf16, #tpu.memory_space<vmem>>, vector<2x256xbf16>
    %cst_17 = arith.constant dense<0.000000e+00> : vector<2x128xf32>
    %21 = tpu.matmul %20, %15, %cst_17 {dimension_numbers = #tpu.dot_dimension_numbers<[1], [0], [0], [1], [0, 0, 1, 1], [], []>} : vector<2x256xbf16>, vector<256x128xbf16>, vector<2x128xf32> -> vector<2x128xf32>
    %22 = arith.addf %19, %21 : vector<2x128xf32>
    %c0_18 = arith.constant 0 : index
    %c0_19 = arith.constant 0 : index
    %23 = vector.load %arg14[%c0_18, %c0_19] : memref<2x128xf32, #tpu.memory_space<vmem>>, vector<2x128xf32>
    tpu.vector_store %arg14[%c0_18, %c0_19], %22 {strides = array<i32>} : memref<2x128xf32, #tpu.memory_space<vmem>>, vector<2x128xf32>,
    %c1_i32 = arith.constant 1 : i32
    %24 = arith.cmpi eq, %arg1, %c1_i32 : i32
    %25 = arith.extui %24 : i1 to i32
    %c0_i32_20 = arith.constant 0 : i32
    %26 = arith.cmpi ne, %25, %c0_i32_20 : i32
    scf.if %26 {
      %c0_21 = arith.constant 0 : index
      %c0_22 = arith.constant 0 : index
      %27 = vector.load %arg14[%c0_21, %c0_22] : memref<2x128xf32, #tpu.memory_space<vmem>>, vector<2x128xf32>
      %28 = arith.truncf %27 : vector<2x128xf32> to vector<2x128xbf16>
      %c0_23 = arith.constant 0 : index
      %c0_24 = arith.constant 0 : index
      %c0_25 = arith.constant 0 : index
      %29 = vector.load %arg6[%c0_23, %c0_24, %c0_25] : memref<1x128x128xf32, #tpu.memory_space<vmem>>, vector<1x128x128xf32>
      %30 = vector.shape_cast %29 : vector<1x128x128xf32> to vector<128x128xf32>
      %31 = arith.truncf %30 : vector<128x128xf32> to vector<128x128xbf16>
      %cst_26 = arith.constant dense<0.000000e+00> : vector<2x128xf32>
      %32 = tpu.matmul %28, %31, %cst_26 {dimension_numbers = #tpu.dot_dimension_numbers<[1], [0], [0], [1], [0, 0, 1, 1], [], []>} : vector<2x128xbf16>, vector<128x128xbf16>, vector<2x128xf32> -> vector<2x128xf32>
      %c0_27 = arith.constant 0 : index
      %c0_28 = arith.constant 0 : index
      %c0_29 = arith.constant 0 : index
      %33 = vector.load %arg7[%c0_27, %c0_28, %c0_29] : memref<1x1x128xf32, #tpu.memory_space<vmem>>, vector<1x1x128xf32>
      %34 = vector.shape_cast %33 : vector<1x1x128xf32> to vector<1x128xf32>
      %35 = vector.broadcast %34 : vector<1x128xf32> to vector<2x128xf32>
      %36 = arith.addf %32, %35 : vector<2x128xf32>
      %cst_30 = arith.constant 0.000000e+00 : f32
      %37 = vector.broadcast %cst_30 : f32 to vector<2x128xf32>
      %38 = arith.maximumf %36, %37 : vector<2x128xf32>
      %39 = arith.truncf %38 : vector<2x128xf32> to vector<2x128xbf16>
      %c0_31 = arith.constant 0 : index
      %c0_32 = arith.constant 0 : index
      %c0_33 = arith.constant 0 : index
      %40 = vector.load %arg8[%c0_31, %c0_32, %c0_33] : memref<1x128x128xf32, #tpu.memory_space<vmem>>, vector<1x128x128xf32>
      %41 = vector.shape_cast %40 : vector<1x128x128xf32> to vector<128x128xf32>
      %42 = arith.truncf %41 : vector<128x128xf32> to vector<128x128xbf16>
      %cst_34 = arith.constant dense<0.000000e+00> : vector<2x128xf32>
      %43 = tpu.matmul %39, %42, %cst_34 {dimension_numbers = #tpu.dot_dimension_numbers<[1], [0], [0], [1], [0, 0, 1, 1], [], []>} : vector<2x128xbf16>, vector<128x128xbf16>, vector<2x128xf32> -> vector<2x128xf32>
      %c0_35 = arith.constant 0 : index
      %c0_36 = arith.constant 0 : index
      %c0_37 = arith.constant 0 : index
      %44 = vector.load %arg9[%c0_35, %c0_36, %c0_37] : memref<1x1x128xf32, #tpu.memory_space<vmem>>, vector<1x1x128xf32>
      %45 = vector.shape_cast %44 : vector<1x1x128xf32> to vector<1x128xf32>
      %46 = vector.broadcast %45 : vector<1x128xf32> to vector<2x128xf32>
      %47 = arith.addf %43, %46 : vector<2x128xf32>
      %48 = arith.mulf %47, %47 : vector<2x128xf32>
      %cst_38 = arith.constant dense<0.000000e+00> : vector<2xf32>
      %49 = vector.multi_reduction <add>, %48, %cst_38 [1] : vector<2x128xf32> to vector<2xf32>
      %50 = vector.shape_cast %49 : vector<2xf32> to vector<2x1xf32>
      %cst_39 = arith.constant 1.000000e-24 : f32
      %51 = vector.broadcast %cst_39 : f32 to vector<2x1xf32>
      %52 = arith.maximumf %50, %51 : vector<2x1xf32>
      %53 = math.rsqrt %52 : vector<2x1xf32>
      %54 = vector.broadcast %53 : vector<2x1xf32> to vector<2x128xf32>
      %55 = arith.mulf %47, %54 : vector<2x128xf32>
      %c0_40 = arith.constant 0 : index
      %c0_41 = arith.constant 0 : index
      %c0_42 = arith.constant 0 : index
      %56 = vector.load %arg12[%c0_40, %c0_41, %c0_42] : memref<1x2x128xf32, #tpu.memory_space<vmem>>, vector<1x2x128xf32>
      %57 = vector.shape_cast %56 : vector<1x2x128xf32> to vector<2x128xf32>
      %58 = vector.shape_cast %55 : vector<2x128xf32> to vector<1x2x128xf32>
      tpu.vector_store %arg12[%c0_40, %c0_41, %c0_42], %58 {strides = array<i32>} : memref<1x2x128xf32, #tpu.memory_space<vmem>>, vector<1x2x128xf32>,
      %59 = arith.truncf %55 : vector<2x128xf32> to vector<2x128xbf16>
      %c0_43 = arith.constant 0 : index
      %c0_44 = arith.constant 0 : index
      %60 = vector.load %arg10[%c0_43, %c0_44] : memref<128x512xf32, #tpu.memory_space<vmem>>, vector<128x512xf32>
      %61 = arith.truncf %60 : vector<128x512xf32> to vector<128x512xbf16>
      %cst_45 = arith.constant dense<0.000000e+00> : vector<2x512xf32>
      %62 = tpu.matmul %59, %61, %cst_45 {dimension_numbers = #tpu.dot_dimension_numbers<[1], [0], [0], [1], [0, 0, 1, 1], [], []>} : vector<2x128xbf16>, vector<128x512xbf16>, vector<2x512xf32> -> vector<2x512xf32>
      %c0_46 = arith.constant 0 : index
      %c0_47 = arith.constant 0 : index
      %c0_48 = arith.constant 0 : index
      %63 = vector.load %arg13[%c0_46, %c0_47, %c0_48] : memref<1x2x512xf32, #tpu.memory_space<vmem>>, vector<1x2x512xf32>
      %64 = vector.shape_cast %63 : vector<1x2x512xf32> to vector<2x512xf32>
      %65 = vector.shape_cast %62 : vector<2x512xf32> to vector<1x2x512xf32>
      tpu.vector_store %arg13[%c0_46, %c0_47, %c0_48], %65 {strides = array<i32>} : memref<1x2x512xf32, #tpu.memory_space<vmem>>, vector<1x2x512xf32>,
    } else {
    }
    return
  }
  func.func @transform_0(%arg0: i32, %arg1: i32) -> (i32, i32, i32) {
    %c0_i32 = arith.constant 0 : i32
    %c0_i32_0 = arith.constant 0 : i32
    return %arg0, %arg1, %c0_i32 : i32, i32, i32
  }
  func.func @transform_1(%arg0: i32, %arg1: i32) -> (i32, i32, i32) {
    %c0_i32 = arith.constant 0 : i32
    %c0_i32_0 = arith.constant 0 : i32
    %c0_i32_1 = arith.constant 0 : i32
    return %arg0, %c0_i32, %c0_i32_0 : i32, i32, i32
  }
  func.func @transform_2(%arg0: i32, %arg1: i32) -> (i32, i32, i32) {
    %c0_i32 = arith.constant 0 : i32
    %c0_i32_0 = arith.constant 0 : i32
    %c0_i32_1 = arith.constant 0 : i32
    return %arg0, %c0_i32, %c0_i32_0 : i32, i32, i32
  }
  func.func @transform_3(%arg0: i32, %arg1: i32) -> (i32, i32) {
    %c0_i32 = arith.constant 0 : i32
    %c0_i32_0 = arith.constant 0 : i32
    return %c0_i32, %arg1 : i32, i32
  }
  func.func @transform_4(%arg0: i32, %arg1: i32) -> (i32, i32, i32) {
    %c0_i32 = arith.constant 0 : i32
    %c0_i32_0 = arith.constant 0 : i32
    %c0_i32_1 = arith.constant 0 : i32
    return %arg0, %c0_i32, %c0_i32_0 : i32, i32, i32
  }
  func.func @transform_5(%arg0: i32, %arg1: i32) -> (i32, i32, i32) {
    %c0_i32 = arith.constant 0 : i32
    %c0_i32_0 = arith.constant 0 : i32
    %c0_i32_1 = arith.constant 0 : i32
    return %arg0, %c0_i32, %c0_i32_0 : i32, i32, i32
  }
  func.func @transform_6(%arg0: i32, %arg1: i32) -> (i32, i32, i32) {
    %c0_i32 = arith.constant 0 : i32
    %c0_i32_0 = arith.constant 0 : i32
    %c0_i32_1 = arith.constant 0 : i32
    return %arg0, %c0_i32, %c0_i32_0 : i32, i32, i32
  }
  func.func @transform_7(%arg0: i32, %arg1: i32) -> (i32, i32, i32) {
    %c0_i32 = arith.constant 0 : i32
    %c0_i32_0 = arith.constant 0 : i32
    %c0_i32_1 = arith.constant 0 : i32
    return %arg0, %c0_i32, %c0_i32_0 : i32, i32, i32
  }
  func.func @transform_8(%arg0: i32, %arg1: i32) -> (i32, i32) {
    %c0_i32 = arith.constant 0 : i32
    %c0_i32_0 = arith.constant 0 : i32
    %c0_i32_1 = arith.constant 0 : i32
    return %c0_i32, %c0_i32_0 : i32, i32
  }
  func.func @transform_9(%arg0: i32, %arg1: i32) -> (i32, i32, i32) {
    %c0_i32 = arith.constant 0 : i32
    %c0_i32_0 = arith.constant 0 : i32
    return %arg0, %arg1, %c0_i32 : i32, i32, i32
  }
  func.func @transform_10(%arg0: i32, %arg1: i32) -> (i32, i32, i32) {
    %c0_i32 = arith.constant 0 : i32
    %c0_i32_0 = arith.constant 0 : i32
    %c0_i32_1 = arith.constant 0 : i32
    return %arg0, %c0_i32, %c0_i32_0 : i32, i32, i32
  }
  func.func @transform_11(%arg0: i32, %arg1: i32) -> (i32, i32, i32) {
    %c0_i32 = arith.constant 0 : i32
    %c0_i32_0 = arith.constant 0 : i32
    %c0_i32_1 = arith.constant 0 : i32
    return %arg0, %c0_i32, %c0_i32_0 : i32, i32, i32
  }
}

module attributes {stable_mosaic.version = 11 : i64} {
  func.func @_gram_stats_kernel(%arg0: i32, %arg1: memref<1x256x128xbf16, #tpu.memory_space<vmem>>, %arg2: memref<1x256x128xbf16, #tpu.memory_space<vmem>>, %arg3: memref<1x256x128xbf16, #tpu.memory_space<vmem>>, %arg4: memref<1x1x9xf32, #tpu.memory_space<vmem>>) attributes {dimension_semantics = [#tpu.dimension_semantics<parallel>], iteration_bounds = array<i64: 2>, scalar_prefetch = 0 : i64, scratch_operands = 0 : i64, tpu.core_type = #tpu.core_type<tc>, window_params = [{transform_indices = @transform_0, window_bounds = array<i64: 1, 256, 128>}, {transform_indices = @transform_1, window_bounds = array<i64: 1, 256, 128>}, {transform_indices = @transform_2, window_bounds = array<i64: 1, 256, 128>}, {transform_indices = @transform_3, window_bounds = array<i64: 1, 1, 9>}]} {
    %c0 = arith.constant 0 : index
    %c0_0 = arith.constant 0 : index
    %c0_1 = arith.constant 0 : index
    %0 = vector.load %arg1[%c0, %c0_0, %c0_1] : memref<1x256x128xbf16, #tpu.memory_space<vmem>>, vector<1x256x128xbf16>
    %1 = vector.shape_cast %0 : vector<1x256x128xbf16> to vector<256x128xbf16>
    %c0_2 = arith.constant 0 : index
    %c0_3 = arith.constant 0 : index
    %c0_4 = arith.constant 0 : index
    %2 = vector.load %arg2[%c0_2, %c0_3, %c0_4] : memref<1x256x128xbf16, #tpu.memory_space<vmem>>, vector<1x256x128xbf16>
    %3 = vector.shape_cast %2 : vector<1x256x128xbf16> to vector<256x128xbf16>
    %c0_5 = arith.constant 0 : index
    %c0_6 = arith.constant 0 : index
    %c0_7 = arith.constant 0 : index
    %4 = vector.load %arg3[%c0_5, %c0_6, %c0_7] : memref<1x256x128xbf16, #tpu.memory_space<vmem>>, vector<1x256x128xbf16>
    %5 = vector.shape_cast %4 : vector<1x256x128xbf16> to vector<256x128xbf16>
    %cst = arith.constant dense<0.000000e+00> : vector<128x128xf32>
    %6 = tpu.matmul %1, %1, %cst {dimension_numbers = #tpu.dot_dimension_numbers<[0], [0], [1], [1], [0, 1, 1, 1], [], []>} : vector<256x128xbf16>, vector<256x128xbf16>, vector<128x128xf32> -> vector<128x128xf32>
    %cst_8 = arith.constant dense<0.000000e+00> : vector<128x128xf32>
    %7 = tpu.matmul %3, %3, %cst_8 {dimension_numbers = #tpu.dot_dimension_numbers<[0], [0], [1], [1], [0, 1, 1, 1], [], []>} : vector<256x128xbf16>, vector<256x128xbf16>, vector<128x128xf32> -> vector<128x128xf32>
    %cst_9 = arith.constant dense<0.000000e+00> : vector<128x128xf32>
    %8 = tpu.matmul %5, %5, %cst_9 {dimension_numbers = #tpu.dot_dimension_numbers<[0], [0], [1], [1], [0, 1, 1, 1], [], []>} : vector<256x128xbf16>, vector<256x128xbf16>, vector<128x128xf32> -> vector<128x128xf32>
    %9 = arith.extf %1 : vector<256x128xbf16> to vector<256x128xf32>
    %10 = arith.extf %3 : vector<256x128xbf16> to vector<256x128xf32>
    %11 = arith.addf %9, %10 : vector<256x128xf32>
    %cst_10 = arith.constant 5.000000e-01 : f32
    %12 = vector.broadcast %cst_10 : f32 to vector<256x128xf32>
    %13 = arith.mulf %11, %12 : vector<256x128xf32>
    %14 = arith.truncf %13 : vector<256x128xf32> to vector<256x128xbf16>
    %15 = arith.extf %1 : vector<256x128xbf16> to vector<256x128xf32>
    %16 = arith.extf %5 : vector<256x128xbf16> to vector<256x128xf32>
    %17 = arith.addf %15, %16 : vector<256x128xf32>
    %cst_11 = arith.constant 5.000000e-01 : f32
    %18 = vector.broadcast %cst_11 : f32 to vector<256x128xf32>
    %19 = arith.mulf %17, %18 : vector<256x128xf32>
    %20 = arith.truncf %19 : vector<256x128xf32> to vector<256x128xbf16>
    %cst_12 = arith.constant dense<0.000000e+00> : vector<128x128xf32>
    %21 = tpu.matmul %14, %14, %cst_12 {dimension_numbers = #tpu.dot_dimension_numbers<[0], [0], [1], [1], [0, 1, 1, 1], [], []>} : vector<256x128xbf16>, vector<256x128xbf16>, vector<128x128xf32> -> vector<128x128xf32>
    %cst_13 = arith.constant dense<0.000000e+00> : vector<128x128xf32>
    %22 = tpu.matmul %20, %20, %cst_13 {dimension_numbers = #tpu.dot_dimension_numbers<[0], [0], [1], [1], [0, 1, 1, 1], [], []>} : vector<256x128xbf16>, vector<256x128xbf16>, vector<128x128xf32> -> vector<128x128xf32>
    %23 = vector.shape_cast %21 : vector<128x128xf32> to vector<1x128x128xf32>
    %cst_14 = arith.constant dense<0.000000e+00> : vector<1xf32>
    %24 = vector.multi_reduction <add>, %23, %cst_14 [1, 2] : vector<1x128x128xf32> to vector<1xf32>
    %25 = vector.shape_cast %24 : vector<1xf32> to vector<1x1x1xf32>
    %26 = vector.extract %25[0, 0, 0] : f32 from vector<1x1x1xf32>
    %27 = vector.broadcast %26 : f32 to vector<1x1xf32>
    %cst_15 = arith.constant 1.638400e+04 : f32
    %28 = vector.broadcast %cst_15 : f32 to vector<1x1xf32>
    %29 = arith.divf %27, %28 : vector<1x1xf32>
    %30 = vector.broadcast %29 : vector<1x1xf32> to vector<128x128xf32>
    %31 = arith.subf %21, %30 : vector<128x128xf32>
    %32 = vector.shape_cast %22 : vector<128x128xf32> to vector<1x128x128xf32>
    %cst_16 = arith.constant dense<0.000000e+00> : vector<1xf32>
    %33 = vector.multi_reduction <add>, %32, %cst_16 [1, 2] : vector<1x128x128xf32> to vector<1xf32>
    %34 = vector.shape_cast %33 : vector<1xf32> to vector<1x1x1xf32>
    %35 = vector.extract %34[0, 0, 0] : f32 from vector<1x1x1xf32>
    %36 = vector.broadcast %35 : f32 to vector<1x1xf32>
    %cst_17 = arith.constant 1.638400e+04 : f32
    %37 = vector.broadcast %cst_17 : f32 to vector<1x1xf32>
    %38 = arith.divf %36, %37 : vector<1x1xf32>
    %39 = vector.broadcast %38 : vector<1x1xf32> to vector<128x128xf32>
    %40 = arith.subf %22, %39 : vector<128x128xf32>
    %41 = arith.mulf %31, %6 : vector<128x128xf32>
    %42 = vector.shape_cast %41 : vector<128x128xf32> to vector<1x128x128xf32>
    %cst_18 = arith.constant dense<0.000000e+00> : vector<1xf32>
    %43 = vector.multi_reduction <add>, %42, %cst_18 [1, 2] : vector<1x128x128xf32> to vector<1xf32>
    %44 = vector.shape_cast %43 : vector<1xf32> to vector<1x1x1xf32>
    %45 = vector.extract %44[0, 0, 0] : f32 from vector<1x1x1xf32>
    %46 = vector.broadcast %45 : f32 to vector<1x1xf32>
    %47 = arith.mulf %31, %7 : vector<128x128xf32>
    %48 = vector.shape_cast %47 : vector<128x128xf32> to vector<1x128x128xf32>
    %cst_19 = arith.constant dense<0.000000e+00> : vector<1xf32>
    %49 = vector.multi_reduction <add>, %48, %cst_19 [1, 2] : vector<1x128x128xf32> to vector<1xf32>
    %50 = vector.shape_cast %49 : vector<1xf32> to vector<1x1x1xf32>
    %51 = vector.extract %50[0, 0, 0] : f32 from vector<1x1x1xf32>
    %52 = vector.broadcast %51 : f32 to vector<1x1xf32>
    %53 = arith.mulf %31, %31 : vector<128x128xf32>
    %54 = vector.shape_cast %53 : vector<128x128xf32> to vector<1x128x128xf32>
    %cst_20 = arith.constant dense<0.000000e+00> : vector<1xf32>
    %55 = vector.multi_reduction <add>, %54, %cst_20 [1, 2] : vector<1x128x128xf32> to vector<1xf32>
    %56 = vector.shape_cast %55 : vector<1xf32> to vector<1x1x1xf32>
    %57 = vector.extract %56[0, 0, 0] : f32 from vector<1x1x1xf32>
    %58 = vector.broadcast %57 : f32 to vector<1x1xf32>
    %59 = arith.mulf %6, %6 : vector<128x128xf32>
    %60 = vector.shape_cast %59 : vector<128x128xf32> to vector<1x128x128xf32>
    %cst_21 = arith.constant dense<0.000000e+00> : vector<1xf32>
    %61 = vector.multi_reduction <add>, %60, %cst_21 [1, 2] : vector<1x128x128xf32> to vector<1xf32>
    %62 = vector.shape_cast %61 : vector<1xf32> to vector<1x1x1xf32>
    %63 = vector.extract %62[0, 0, 0] : f32 from vector<1x1x1xf32>
    %64 = vector.broadcast %63 : f32 to vector<1x1xf32>
    %65 = arith.mulf %7, %7 : vector<128x128xf32>
    %66 = vector.shape_cast %65 : vector<128x128xf32> to vector<1x128x128xf32>
    %cst_22 = arith.constant dense<0.000000e+00> : vector<1xf32>
    %67 = vector.multi_reduction <add>, %66, %cst_22 [1, 2] : vector<1x128x128xf32> to vector<1xf32>
    %68 = vector.shape_cast %67 : vector<1xf32> to vector<1x1x1xf32>
    %69 = vector.extract %68[0, 0, 0] : f32 from vector<1x1x1xf32>
    %70 = vector.broadcast %69 : f32 to vector<1x1xf32>
    %71 = arith.mulf %40, %6 : vector<128x128xf32>
    %72 = vector.shape_cast %71 : vector<128x128xf32> to vector<1x128x128xf32>
    %cst_23 = arith.constant dense<0.000000e+00> : vector<1xf32>
    %73 = vector.multi_reduction <add>, %72, %cst_23 [1, 2] : vector<1x128x128xf32> to vector<1xf32>
    %74 = vector.shape_cast %73 : vector<1xf32> to vector<1x1x1xf32>
    %75 = vector.extract %74[0, 0, 0] : f32 from vector<1x1x1xf32>
    %76 = vector.broadcast %75 : f32 to vector<1x1xf32>
    %77 = arith.mulf %40, %8 : vector<128x128xf32>
    %78 = vector.shape_cast %77 : vector<128x128xf32> to vector<1x128x128xf32>
    %cst_24 = arith.constant dense<0.000000e+00> : vector<1xf32>
    %79 = vector.multi_reduction <add>, %78, %cst_24 [1, 2] : vector<1x128x128xf32> to vector<1xf32>
    %80 = vector.shape_cast %79 : vector<1xf32> to vector<1x1x1xf32>
    %81 = vector.extract %80[0, 0, 0] : f32 from vector<1x1x1xf32>
    %82 = vector.broadcast %81 : f32 to vector<1x1xf32>
    %83 = arith.mulf %40, %40 : vector<128x128xf32>
    %84 = vector.shape_cast %83 : vector<128x128xf32> to vector<1x128x128xf32>
    %cst_25 = arith.constant dense<0.000000e+00> : vector<1xf32>
    %85 = vector.multi_reduction <add>, %84, %cst_25 [1, 2] : vector<1x128x128xf32> to vector<1xf32>
    %86 = vector.shape_cast %85 : vector<1xf32> to vector<1x1x1xf32>
    %87 = vector.extract %86[0, 0, 0] : f32 from vector<1x1x1xf32>
    %88 = vector.broadcast %87 : f32 to vector<1x1xf32>
    %89 = arith.mulf %8, %8 : vector<128x128xf32>
    %90 = vector.shape_cast %89 : vector<128x128xf32> to vector<1x128x128xf32>
    %cst_26 = arith.constant dense<0.000000e+00> : vector<1xf32>
    %91 = vector.multi_reduction <add>, %90, %cst_26 [1, 2] : vector<1x128x128xf32> to vector<1xf32>
    %92 = vector.shape_cast %91 : vector<1xf32> to vector<1x1x1xf32>
    %93 = vector.extract %92[0, 0, 0] : f32 from vector<1x1x1xf32>
    %94 = vector.broadcast %93 : f32 to vector<1x1xf32>
    %95 = tpu.iota {dimensions = array<i32: 1>} : vector<1x9xi32>
    %cst_27 = arith.constant 0.000000e+00 : f32
    %96 = vector.broadcast %cst_27 : f32 to vector<1x9xf32>
    %c0_i32 = arith.constant 0 : i32
    %97 = vector.broadcast %c0_i32 : i32 to vector<1x9xi32>
    %98 = arith.cmpi eq, %95, %97 : vector<1x9xi32>
    %cst_28 = arith.constant 0.000000e+00 : f32
    %99 = vector.shape_cast %46 : vector<1x1xf32> to vector<1x1xf32>
    %100 = vector.broadcast %99 : vector<1x1xf32> to vector<1x9xf32>
    %101 = vector.broadcast %cst_28 : f32 to vector<1x9xf32>
    %102 = arith.select %98, %100, %101 : vector<1x9xi1>, vector<1x9xf32>
    %103 = arith.addf %96, %102 : vector<1x9xf32>
    %c1_i32 = arith.constant 1 : i32
    %104 = vector.broadcast %c1_i32 : i32 to vector<1x9xi32>
    %105 = arith.cmpi eq, %95, %104 : vector<1x9xi32>
    %cst_29 = arith.constant 0.000000e+00 : f32
    %106 = vector.shape_cast %52 : vector<1x1xf32> to vector<1x1xf32>
    %107 = vector.broadcast %106 : vector<1x1xf32> to vector<1x9xf32>
    %108 = vector.broadcast %cst_29 : f32 to vector<1x9xf32>
    %109 = arith.select %105, %107, %108 : vector<1x9xi1>, vector<1x9xf32>
    %110 = arith.addf %103, %109 : vector<1x9xf32>
    %c2_i32 = arith.constant 2 : i32
    %111 = vector.broadcast %c2_i32 : i32 to vector<1x9xi32>
    %112 = arith.cmpi eq, %95, %111 : vector<1x9xi32>
    %cst_30 = arith.constant 0.000000e+00 : f32
    %113 = vector.shape_cast %58 : vector<1x1xf32> to vector<1x1xf32>
    %114 = vector.broadcast %113 : vector<1x1xf32> to vector<1x9xf32>
    %115 = vector.broadcast %cst_30 : f32 to vector<1x9xf32>
    %116 = arith.select %112, %114, %115 : vector<1x9xi1>, vector<1x9xf32>
    %117 = arith.addf %110, %116 : vector<1x9xf32>
    %c3_i32 = arith.constant 3 : i32
    %118 = vector.broadcast %c3_i32 : i32 to vector<1x9xi32>
    %119 = arith.cmpi eq, %95, %118 : vector<1x9xi32>
    %cst_31 = arith.constant 0.000000e+00 : f32
    %120 = vector.shape_cast %64 : vector<1x1xf32> to vector<1x1xf32>
    %121 = vector.broadcast %120 : vector<1x1xf32> to vector<1x9xf32>
    %122 = vector.broadcast %cst_31 : f32 to vector<1x9xf32>
    %123 = arith.select %119, %121, %122 : vector<1x9xi1>, vector<1x9xf32>
    %124 = arith.addf %117, %123 : vector<1x9xf32>
    %c4_i32 = arith.constant 4 : i32
    %125 = vector.broadcast %c4_i32 : i32 to vector<1x9xi32>
    %126 = arith.cmpi eq, %95, %125 : vector<1x9xi32>
    %cst_32 = arith.constant 0.000000e+00 : f32
    %127 = vector.shape_cast %70 : vector<1x1xf32> to vector<1x1xf32>
    %128 = vector.broadcast %127 : vector<1x1xf32> to vector<1x9xf32>
    %129 = vector.broadcast %cst_32 : f32 to vector<1x9xf32>
    %130 = arith.select %126, %128, %129 : vector<1x9xi1>, vector<1x9xf32>
    %131 = arith.addf %124, %130 : vector<1x9xf32>
    %c5_i32 = arith.constant 5 : i32
    %132 = vector.broadcast %c5_i32 : i32 to vector<1x9xi32>
    %133 = arith.cmpi eq, %95, %132 : vector<1x9xi32>
    %cst_33 = arith.constant 0.000000e+00 : f32
    %134 = vector.shape_cast %76 : vector<1x1xf32> to vector<1x1xf32>
    %135 = vector.broadcast %134 : vector<1x1xf32> to vector<1x9xf32>
    %136 = vector.broadcast %cst_33 : f32 to vector<1x9xf32>
    %137 = arith.select %133, %135, %136 : vector<1x9xi1>, vector<1x9xf32>
    %138 = arith.addf %131, %137 : vector<1x9xf32>
    %c6_i32 = arith.constant 6 : i32
    %139 = vector.broadcast %c6_i32 : i32 to vector<1x9xi32>
    %140 = arith.cmpi eq, %95, %139 : vector<1x9xi32>
    %cst_34 = arith.constant 0.000000e+00 : f32
    %141 = vector.shape_cast %82 : vector<1x1xf32> to vector<1x1xf32>
    %142 = vector.broadcast %141 : vector<1x1xf32> to vector<1x9xf32>
    %143 = vector.broadcast %cst_34 : f32 to vector<1x9xf32>
    %144 = arith.select %140, %142, %143 : vector<1x9xi1>, vector<1x9xf32>
    %145 = arith.addf %138, %144 : vector<1x9xf32>
    %c7_i32 = arith.constant 7 : i32
    %146 = vector.broadcast %c7_i32 : i32 to vector<1x9xi32>
    %147 = arith.cmpi eq, %95, %146 : vector<1x9xi32>
    %cst_35 = arith.constant 0.000000e+00 : f32
    %148 = vector.shape_cast %88 : vector<1x1xf32> to vector<1x1xf32>
    %149 = vector.broadcast %148 : vector<1x1xf32> to vector<1x9xf32>
    %150 = vector.broadcast %cst_35 : f32 to vector<1x9xf32>
    %151 = arith.select %147, %149, %150 : vector<1x9xi1>, vector<1x9xf32>
    %152 = arith.addf %145, %151 : vector<1x9xf32>
    %c8_i32 = arith.constant 8 : i32
    %153 = vector.broadcast %c8_i32 : i32 to vector<1x9xi32>
    %154 = arith.cmpi eq, %95, %153 : vector<1x9xi32>
    %cst_36 = arith.constant 0.000000e+00 : f32
    %155 = vector.shape_cast %94 : vector<1x1xf32> to vector<1x1xf32>
    %156 = vector.broadcast %155 : vector<1x1xf32> to vector<1x9xf32>
    %157 = vector.broadcast %cst_36 : f32 to vector<1x9xf32>
    %158 = arith.select %154, %156, %157 : vector<1x9xi1>, vector<1x9xf32>
    %159 = arith.addf %152, %158 : vector<1x9xf32>
    %c0_37 = arith.constant 0 : index
    %c0_38 = arith.constant 0 : index
    %c0_39 = arith.constant 0 : index
    %160 = vector.load %arg4[%c0_37, %c0_38, %c0_39] : memref<1x1x9xf32, #tpu.memory_space<vmem>>, vector<1x1x9xf32>
    %161 = vector.shape_cast %160 : vector<1x1x9xf32> to vector<1x9xf32>
    %162 = vector.shape_cast %159 : vector<1x9xf32> to vector<1x1x9xf32>
    tpu.vector_store %arg4[%c0_37, %c0_38, %c0_39], %162 {strides = array<i32>} : memref<1x1x9xf32, #tpu.memory_space<vmem>>, vector<1x1x9xf32>,
    return
  }
  func.func @transform_0(%arg0: i32) -> (i32, i32, i32) {
    %c0_i32 = arith.constant 0 : i32
    %c0_i32_0 = arith.constant 0 : i32
    %c0_i32_1 = arith.constant 0 : i32
    return %c0_i32, %arg0, %c0_i32_0 : i32, i32, i32
  }
  func.func @transform_1(%arg0: i32) -> (i32, i32, i32) {
    %c1_i32 = arith.constant 1 : i32
    %c0_i32 = arith.constant 0 : i32
    %c0_i32_0 = arith.constant 0 : i32
    return %c1_i32, %arg0, %c0_i32 : i32, i32, i32
  }
  func.func @transform_2(%arg0: i32) -> (i32, i32, i32) {
    %c2_i32 = arith.constant 2 : i32
    %c0_i32 = arith.constant 0 : i32
    %c0_i32_0 = arith.constant 0 : i32
    return %c2_i32, %arg0, %c0_i32 : i32, i32, i32
  }
  func.func @transform_3(%arg0: i32) -> (i32, i32, i32) {
    %c0_i32 = arith.constant 0 : i32
    %c0_i32_0 = arith.constant 0 : i32
    %c0_i32_1 = arith.constant 0 : i32
    return %arg0, %c0_i32, %c0_i32_0 : i32, i32, i32
  }
}

module attributes {stable_mosaic.version = 11 : i64} {
  func.func @_soft_ce_kernel(%arg0: i32, %arg1: memref<3x2x512xf32, #tpu.memory_space<vmem>>, %arg2: memref<2x1xf32, #tpu.memory_space<vmem>>, %arg3: memref<2x1xf32, #tpu.memory_space<vmem>>) attributes {dimension_semantics = [#tpu.dimension_semantics<arbitrary>], iteration_bounds = array<i64: 1>, scalar_prefetch = 0 : i64, scratch_operands = 0 : i64, tpu.core_type = #tpu.core_type<tc>, window_params = [{pipeline_mode = #tpu.pipeline_mode<synchronous>, transform_indices = @transform_0, window_bounds = array<i64: 3, 2, 512>}, {pipeline_mode = #tpu.pipeline_mode<synchronous>, transform_indices = @transform_1, window_bounds = array<i64: 2, 1>}, {pipeline_mode = #tpu.pipeline_mode<synchronous>, transform_indices = @transform_2, window_bounds = array<i64: 2, 1>}]} {
    %c0 = arith.constant 0 : index
    %c0_0 = arith.constant 0 : index
    %c0_1 = arith.constant 0 : index
    %0 = vector.load %arg1[%c0, %c0_0, %c0_1] : memref<3x2x512xf32, #tpu.memory_space<vmem>>, vector<1x2x512xf32>
    %1 = vector.shape_cast %0 : vector<1x2x512xf32> to vector<2x512xf32>
    %cst = arith.constant 1.000000e+01 : f32
    %2 = vector.broadcast %cst : f32 to vector<2x512xf32>
    %3 = arith.mulf %1, %2 : vector<2x512xf32>
    %c1 = arith.constant 1 : index
    %c0_2 = arith.constant 0 : index
    %c0_3 = arith.constant 0 : index
    %4 = vector.load %arg1[%c1, %c0_2, %c0_3] : memref<3x2x512xf32, #tpu.memory_space<vmem>>, vector<1x2x512xf32>
    %5 = vector.shape_cast %4 : vector<1x2x512xf32> to vector<2x512xf32>
    %cst_4 = arith.constant 2.500000e+01 : f32
    %6 = vector.broadcast %cst_4 : f32 to vector<2x512xf32>
    %7 = arith.mulf %5, %6 : vector<2x512xf32>
    %c2 = arith.constant 2 : index
    %c0_5 = arith.constant 0 : index
    %c0_6 = arith.constant 0 : index
    %8 = vector.load %arg1[%c2, %c0_5, %c0_6] : memref<3x2x512xf32, #tpu.memory_space<vmem>>, vector<1x2x512xf32>
    %9 = vector.shape_cast %8 : vector<1x2x512xf32> to vector<2x512xf32>
    %cst_7 = arith.constant 2.500000e+01 : f32
    %10 = vector.broadcast %cst_7 : f32 to vector<2x512xf32>
    %11 = arith.mulf %9, %10 : vector<2x512xf32>
    %cst_8 = arith.constant dense<0xFF800000> : vector<2xf32>
    %12 = vector.multi_reduction <maximumf>, %3, %cst_8 [1] : vector<2x512xf32> to vector<2xf32>
    %13 = vector.shape_cast %12 : vector<2xf32> to vector<2x1xf32>
    %14 = vector.broadcast %13 : vector<2x1xf32> to vector<2x512xf32>
    %15 = arith.subf %3, %14 : vector<2x512xf32>
    %16 = math.exp %15 : vector<2x512xf32>
    %cst_9 = arith.constant dense<0.000000e+00> : vector<2xf32>
    %17 = vector.multi_reduction <add>, %16, %cst_9 [1] : vector<2x512xf32> to vector<2xf32>
    %18 = vector.shape_cast %17 : vector<2xf32> to vector<2x1xf32>
    %19 = math.log %18 : vector<2x1xf32>
    %20 = vector.broadcast %19 : vector<2x1xf32> to vector<2x512xf32>
    %21 = arith.subf %15, %20 : vector<2x512xf32>
    %cst_10 = arith.constant dense<0xFF800000> : vector<2xf32>
    %22 = vector.multi_reduction <maximumf>, %7, %cst_10 [1] : vector<2x512xf32> to vector<2xf32>
    %23 = vector.shape_cast %22 : vector<2xf32> to vector<2x1xf32>
    %24 = vector.broadcast %23 : vector<2x1xf32> to vector<2x512xf32>
    %25 = arith.subf %7, %24 : vector<2x512xf32>
    %26 = math.exp %25 : vector<2x512xf32>
    %cst_11 = arith.constant dense<0.000000e+00> : vector<2xf32>
    %27 = vector.multi_reduction <add>, %26, %cst_11 [1] : vector<2x512xf32> to vector<2xf32>
    %28 = vector.shape_cast %27 : vector<2xf32> to vector<2x1xf32>
    %29 = tpu.reciprocal %28 {approx = true} : vector<2x1xf32> -> vector<2x1xf32>
    %30 = vector.broadcast %29 : vector<2x1xf32> to vector<2x512xf32>
    %31 = arith.mulf %26, %30 : vector<2x512xf32>
    %32 = arith.mulf %31, %21 : vector<2x512xf32>
    %cst_12 = arith.constant dense<0.000000e+00> : vector<2xf32>
    %33 = vector.multi_reduction <add>, %32, %cst_12 [1] : vector<2x512xf32> to vector<2xf32>
    %34 = vector.shape_cast %33 : vector<2xf32> to vector<2x1xf32>
    %cst_13 = arith.constant 0.000000e+00 : f32
    %35 = vector.broadcast %cst_13 : f32 to vector<2x1xf32>
    %36 = arith.subf %35, %34 : vector<2x1xf32>
    %c0_14 = arith.constant 0 : index
    %c0_15 = arith.constant 0 : index
    %37 = vector.load %arg2[%c0_14, %c0_15] : memref<2x1xf32, #tpu.memory_space<vmem>>, vector<2x1xf32>
    tpu.vector_store %arg2[%c0_14, %c0_15], %36 {strides = array<i32>} : memref<2x1xf32, #tpu.memory_space<vmem>>, vector<2x1xf32>,
    %cst_16 = arith.constant dense<0xFF800000> : vector<2xf32>
    %38 = vector.multi_reduction <maximumf>, %11, %cst_16 [1] : vector<2x512xf32> to vector<2xf32>
    %39 = vector.shape_cast %38 : vector<2xf32> to vector<2x1xf32>
    %40 = vector.broadcast %39 : vector<2x1xf32> to vector<2x512xf32>
    %41 = arith.subf %11, %40 : vector<2x512xf32>
    %42 = math.exp %41 : vector<2x512xf32>
    %cst_17 = arith.constant dense<0.000000e+00> : vector<2xf32>
    %43 = vector.multi_reduction <add>, %42, %cst_17 [1] : vector<2x512xf32> to vector<2xf32>
    %44 = vector.shape_cast %43 : vector<2xf32> to vector<2x1xf32>
    %45 = tpu.reciprocal %44 {approx = true} : vector<2x1xf32> -> vector<2x1xf32>
    %46 = vector.broadcast %45 : vector<2x1xf32> to vector<2x512xf32>
    %47 = arith.mulf %42, %46 : vector<2x512xf32>
    %48 = arith.mulf %47, %21 : vector<2x512xf32>
    %cst_18 = arith.constant dense<0.000000e+00> : vector<2xf32>
    %49 = vector.multi_reduction <add>, %48, %cst_18 [1] : vector<2x512xf32> to vector<2xf32>
    %50 = vector.shape_cast %49 : vector<2xf32> to vector<2x1xf32>
    %cst_19 = arith.constant 0.000000e+00 : f32
    %51 = vector.broadcast %cst_19 : f32 to vector<2x1xf32>
    %52 = arith.subf %51, %50 : vector<2x1xf32>
    %c0_20 = arith.constant 0 : index
    %c0_21 = arith.constant 0 : index
    %53 = vector.load %arg3[%c0_20, %c0_21] : memref<2x1xf32, #tpu.memory_space<vmem>>, vector<2x1xf32>
    tpu.vector_store %arg3[%c0_20, %c0_21], %52 {strides = array<i32>} : memref<2x1xf32, #tpu.memory_space<vmem>>, vector<2x1xf32>,
    return
  }
  func.func @transform_0(%arg0: i32) -> (i32, i32, i32) {
    %c0_i32 = arith.constant 0 : i32
    %c0_i32_0 = arith.constant 0 : i32
    %c0_i32_1 = arith.constant 0 : i32
    %c0_i32_2 = arith.constant 0 : i32
    return %c0_i32, %c0_i32_0, %c0_i32_1 : i32, i32, i32
  }
  func.func @transform_1(%arg0: i32) -> (i32, i32) {
    %c0_i32 = arith.constant 0 : i32
    %c0_i32_0 = arith.constant 0 : i32
    %c0_i32_1 = arith.constant 0 : i32
    return %c0_i32, %c0_i32_0 : i32, i32
  }
  func.func @transform_2(%arg0: i32) -> (i32, i32) {
    %c0_i32 = arith.constant 0 : i32
    %c0_i32_0 = arith.constant 0 : i32
    %c0_i32_1 = arith.constant 0 : i32
    return %c0_i32, %c0_i32_0 : i32, i32
  }
}

</mosaic_0001>

<llo_original>
// kernel: ressl_forward.4
$region0: #{ressl_forward.4}
  #allocation0 [shape = 'u32[]', space=smem, size = 0x4, offset = 0x4, fixed_abs, tag = 'smem constant byte address 0x4 - core index']
  #allocation1 [shape = 'u32[144,128]{1,0:T(1,128)}', space=vmem, size = 0x12000, scoped, tag = 'internal scratch']
  %s0 = inlined_call_operand.vmem [shape: f32[3,2,512], index: 0, kind: input, shape index: {}]
  %s1 = inlined_call_operand.vmem [shape: f32[2,1], index: 1, kind: output, shape index: {0}]
  %s2 = inlined_call_operand.vmem [shape: f32[2,1], index: 2, kind: output, shape index: {1}]
  %3 = xla_tuple %s1, %s2
  %s4 = sld [smem:[#allocation0]]
  $region22: #{ressl_forward.4} parent=0
    _
  %s6 = ssub.s32 1, %s4
  %s7 = scalar_select 0, %s6, %s4
  // Predicated region
  $region2: #{ressl_forward.4} parent=0 // pred_check
    _
  $region3: #{ressl_forward.4} parent=0 // pred_check_branch
    %9 = sbr.rel (0) target = $region5
  $region4: #{ressl_forward.4} parent=0 // pred_region
    _
  $region5: #{ressl_forward.4} parent=0 // pred_fallthru
    _
  %v10 = vld [vmem:[%s0] sm:$0xff]
  %v11 = vmul.f32 %v10, 10.0
  %s12 = scalar_lea.vmem %s0, 8
  %v13 = vld [vmem:[%s12] sm:$0xff]
  %v14 = vmul.f32 %v13, 25.0
  %s15 = scalar_lea.vmem %s0, 16
  %v16 = vld [vmem:[%s15] sm:$0xff]
  %v17 = vmul.f32 %v16, 25.0
  %v19 = vcombine.high %v11, %v11
  %v21 = vunpack.c.l.s4 1983009808
  %v22 = vunpack.c.0.s8 %v21
  %v23 = vlaneseq
  %v24 = vshrl.u32 %v23, 7
  %v25 = vsub.s32 %v22, %v24
  %v26 = vrot.slane %v11, %v25
  %v28 = vunpack.c.l.s4 1983009808
  %v29 = vunpack.c.0.s8 %v28
  %v30 = vlaneseq
  %v31 = vshrl.u32 %v30, 7
  %v32 = vsub.s32 %v29, %v31
  %v33 = vrot.slane %v19, %v32
  %v34 = vcombine.high %v26, %v26
  %v35 = vcombine.high %v33, %v33
  %vm40 = vcmask 1041408
  %v41 = vsel %vm40, %v26, -inf
  %v42 = vsel %vm40, %v34, -inf
  %v43 = vsel %vm40, %v33, -inf
  %v44 = vsel %vm40, %v35, -inf
  %v45 = vmax.f32 %v41, %v42
  %v46 = vmax.f32 %v43, %v44
  %v47 = vmax.f32 %v45, %v46
  %48 = vmax.xlane.f32.xlu0 %v47
  %v49 = vpop.xlane.xlu0 %48
  %v52 = vunpack.c.l.s4 269488144
  %v53 = vunpack.c.0.s8 %v52
  %v54 = vlaneseq
  %v55 = vshrl.u32 %v54, 7
  %v56 = vsub.s32 %v53, %v55
  %v57 = vrot.slane %v49, %v56
  %v59 = vsub.f32 %v11, %v57
  %v60 = vmul.f32 %v59, 1.442695
  %v61 = vpow.pop %v60
  %v63 = vcombine.high %v61, %v61
  %v65 = vunpack.c.l.s4 1983009808
  %v66 = vunpack.c.0.s8 %v65
  %v67 = vlaneseq
  %v68 = vshrl.u32 %v67, 7
  %v69 = vsub.s32 %v66, %v68
  %v70 = vrot.slane %v61, %v69
  %v72 = vunpack.c.l.s4 1983009808
  %v73 = vunpack.c.0.s8 %v72
  %v74 = vlaneseq
  %v75 = vshrl.u32 %v74, 7
  %v76 = vsub.s32 %v73, %v75
  %v77 = vrot.slane %v63, %v76
  %v78 = vcombine.high %v70, %v70
  %v79 = vcombine.high %v77, %v77
  %v84 = vsel %vm40, %v70, 0.0
  %v85 = vsel %vm40, %v78, 0.0
  %v86 = vadd.f32 %v84, %v85
  %v87 = vsel %vm40, %v77, 0.0
  %v88 = vadd.f32 %v86, %v87
  %v89 = vsel %vm40, %v79, 0.0
  %v90 = vadd.f32 %v88, %v89
  %91 = vadd.xlane.f32.xlu0 %v90
  %v92 = vpop.xlane.xlu0 %91
  %v93 = vlog2.pop %v92
  %v94 = vmul.f32 %v93, 0.6931472
  %v97 = vunpack.c.l.s4 269488144
  %v98 = vunpack.c.0.s8 %v97
  %v99 = vlaneseq
  %v100 = vshrl.u32 %v99, 7
  %v101 = vsub.s32 %v98, %v100
  %v102 = vrot.slane %v94, %v101
  %v104 = vsub.f32 %v59, %v102
  %v106 = vcombine.high %v14, %v14
  %v108 = vunpack.c.l.s4 1983009808
  %v109 = vunpack.c.0.s8 %v108
  %v110 = vlaneseq
  %v111 = vshrl.u32 %v110, 7
  %v112 = vsub.s32 %v109, %v111
  %v113 = vrot.slane %v14, %v112
  %v115 = vunpack.c.l.s4 1983009808
  %v116 = vunpack.c.0.s8 %v115
  %v117 = vlaneseq
  %v118 = vshrl.u32 %v117, 7
  %v119 = vsub.s32 %v116, %v118
  %v120 = vrot.slane %v106, %v119
  %v121 = vcombine.high %v113, %v113
  %v122 = vcombine.high %v120, %v120
  %v127 = vsel %vm40, %v113, -inf
  %v128 = vsel %vm40, %v121, -inf
  %v129 = vsel %vm40, %v120, -inf
  %v130 = vsel %vm40, %v122, -inf
  %v131 = vmax.f32 %v127, %v128
  %v132 = vmax.f32 %v129, %v130
  %v133 = vmax.f32 %v131, %v132
  %134 = vmax.xlane.f32.xlu0 %v133
  %v135 = vpop.xlane.xlu0 %134
  %v138 = vunpack.c.l.s4 269488144
  %v139 = vunpack.c.0.s8 %v138
  %v140 = vlaneseq
  %v141 = vshrl.u32 %v140, 7
  %v142 = vsub.s32 %v139, %v141
  %v143 = vrot.slane %v135, %v142
  %v145 = vsub.f32 %v14, %v143
  %v146 = vmul.f32 %v145, 1.442695
  %v147 = vpow.pop %v146
  %v149 = vcombine.high %v147, %v147
  %v151 = vunpack.c.l.s4 1983009808
  %v152 = vunpack.c.0.s8 %v151
  %v153 = vlaneseq
  %v154 = vshrl.u32 %v153, 7
  %v155 = vsub.s32 %v152, %v154
  %v156 = vrot.slane %v147, %v155
  %v158 = vunpack.c.l.s4 1983009808
  %v159 = vunpack.c.0.s8 %v158
  %v160 = vlaneseq
  %v161 = vshrl.u32 %v160, 7
  %v162 = vsub.s32 %v159, %v161
  %v163 = vrot.slane %v149, %v162
  %v164 = vcombine.high %v156, %v156
  %v165 = vcombine.high %v163, %v163
  %v170 = vsel %vm40, %v156, 0.0
  %v171 = vsel %vm40, %v164, 0.0
  %v172 = vadd.f32 %v170, %v171
  %v173 = vsel %vm40, %v163, 0.0
  %v174 = vadd.f32 %v172, %v173
  %v175 = vsel %vm40, %v165, 0.0
  %v176 = vadd.f32 %v174, %v175
  %177 = vadd.xlane.f32.xlu0 %v176
  %v178 = vpop.xlane.xlu0 %177
  %v179 = vrcp.pop %v178
  %v182 = vunpack.c.l.s4 269488144
  %v183 = vunpack.c.0.s8 %v182
  %v184 = vlaneseq
  %v185 = vshrl.u32 %v184, 7
  %v186 = vsub.s32 %v183, %v185
  %v187 = vrot.slane %v179, %v186
  %v189 = vmul.f32 %v147, %v187
  %v190 = vmul.f32 %v189, %v104
  %v192 = vcombine.high %v190, %v190
  %v194 = vunpack.c.l.s4 1983009808
  %v195 = vunpack.c.0.s8 %v194
  %v196 = vlaneseq
  %v197 = vshrl.u32 %v196, 7
  %v198 = vsub.s32 %v195, %v197
  %v199 = vrot.slane %v190, %v198
  %v201 = vunpack.c.l.s4 1983009808
  %v202 = vunpack.c.0.s8 %v201
  %v203 = vlaneseq
  %v204 = vshrl.u32 %v203, 7
  %v205 = vsub.s32 %v202, %v204
  %v206 = vrot.slane %v192, %v205
  %v207 = vcombine.high %v199, %v199
  %v208 = vcombine.high %v206, %v206
  %v213 = vsel %vm40, %v199, 0.0
  %v214 = vsel %vm40, %v207, 0.0
  %v215 = vadd.f32 %v213, %v214
  %v216 = vsel %vm40, %v206, 0.0
  %v217 = vadd.f32 %v215, %v216
  %v218 = vsel %vm40, %v208, 0.0
  %v219 = vadd.f32 %v217, %v218
  %220 = vadd.xlane.f32.xlu0 %v219
  %v221 = vpop.xlane.xlu0 %220
  %v222 = vsub.f32 0.0, %v221
  %vm223 = vcmask 1024
  %224 = vst.msk [vmem:[%s1] sm:$0x3] %vm223, %v222
  %v226 = vcombine.high %v17, %v17
  %v228 = vunpack.c.l.s4 1983009808
  %v229 = vunpack.c.0.s8 %v228
  %v230 = vlaneseq
  %v231 = vshrl.u32 %v230, 7
  %v232 = vsub.s32 %v229, %v231
  %v233 = vrot.slane %v17, %v232
  %v235 = vunpack.c.l.s4 1983009808
  %v236 = vunpack.c.0.s8 %v235
  %v237 = vlaneseq
  %v238 = vshrl.u32 %v237, 7
  %v239 = vsub.s32 %v236, %v238
  %v240 = vrot.slane %v226, %v239
  %v241 = vcombine.high %v233, %v233
  %v242 = vcombine.high %v240, %v240
  %v247 = vsel %vm40, %v233, -inf
  %v248 = vsel %vm40, %v241, -inf
  %v249 = vsel %vm40, %v240, -inf
  %v250 = vsel %vm40, %v242, -inf
  %v251 = vmax.f32 %v247, %v248
  %v252 = vmax.f32 %v249, %v250
  %v253 = vmax.f32 %v251, %v252
  %254 = vmax.xlane.f32.xlu0 %v253
  %v255 = vpop.xlane.xlu0 %254
  %v258 = vunpack.c.l.s4 269488144
  %v259 = vunpack.c.0.s8 %v258
  %v260 = vlaneseq
  %v261 = vshrl.u32 %v260, 7
  %v262 = vsub.s32 %v259, %v261
  %v263 = vrot.slane %v255, %v262
  %v265 = vsub.f32 %v17, %v263
  %v266 = vmul.f32 %v265, 1.442695
  %v267 = vpow.pop %v266
  %v269 = vcombine.high %v267, %v267
  %v271 = vunpack.c.l.s4 1983009808
  %v272 = vunpack.c.0.s8 %v271
  %v273 = vlaneseq
  %v274 = vshrl.u32 %v273, 7
  %v275 = vsub.s32 %v272, %v274
  %v276 = vrot.slane %v267, %v275
  %v278 = vunpack.c.l.s4 1983009808
  %v279 = vunpack.c.0.s8 %v278
  %v280 = vlaneseq
  %v281 = vshrl.u32 %v280, 7
  %v282 = vsub.s32 %v279, %v281
  %v283 = vrot.slane %v269, %v282
  %v284 = vcombine.high %v276, %v276
  %v285 = vcombine.high %v283, %v283
  %v290 = vsel %vm40, %v276, 0.0
  %v291 = vsel %vm40, %v284, 0.0
  %v292 = vadd.f32 %v290, %v291
  %v293 = vsel %vm40, %v283, 0.0
  %v294 = vadd.f32 %v292, %v293
  %v295 = vsel %vm40, %v285, 0.0
  %v296 = vadd.f32 %v294, %v295
  %297 = vadd.xlane.f32.xlu0 %v296
  %v298 = vpop.xlane.xlu0 %297
  %v299 = vrcp.pop %v298
  %v302 = vunpack.c.l.s4 269488144
  %v303 = vunpack.c.0.s8 %v302
  %v304 = vlaneseq
  %v305 = vshrl.u32 %v304, 7
  %v306 = vsub.s32 %v303, %v305
  %v307 = vrot.slane %v299, %v306
  %v309 = vmul.f32 %v267, %v307
  %v310 = vmul.f32 %v309, %v104
  %v312 = vcombine.high %v310, %v310
  %v314 = vunpack.c.l.s4 1983009808
  %v315 = vunpack.c.0.s8 %v314
  %v316 = vlaneseq
  %v317 = vshrl.u32 %v316, 7
  %v318 = vsub.s32 %v315, %v317
  %v319 = vrot.slane %v310, %v318
  %v321 = vunpack.c.l.s4 1983009808
  %v322 = vunpack.c.0.s8 %v321
  %v323 = vlaneseq
  %v324 = vshrl.u32 %v323, 7
  %v325 = vsub.s32 %v322, %v324
  %v326 = vrot.slane %v312, %v325
  %v327 = vcombine.high %v319, %v319
  %v328 = vcombine.high %v326, %v326
  %v333 = vsel %vm40, %v319, 0.0
  %v334 = vsel %vm40, %v327, 0.0
  %v335 = vadd.f32 %v333, %v334
  %v336 = vsel %vm40, %v326, 0.0
  %v337 = vadd.f32 %v335, %v336
  %v338 = vsel %vm40, %v328, 0.0
  %v339 = vadd.f32 %v337, %v338
  %340 = vadd.xlane.f32.xlu0 %v339
  %v341 = vpop.xlane.xlu0 %340
  %v342 = vsub.f32 0.0, %v341
  %343 = vst.msk [vmem:[%s2] sm:$0x3] %vm223, %v342
  // Predicated region
  $region6: #{ressl_forward.4} parent=0 // pred_check
    _
  $region7: #{ressl_forward.4} parent=0 // pred_check_branch
    %345 = sbr.rel (0) target = $region9
  $region8: #{ressl_forward.4} parent=0 // pred_region
    _
  $region9: #{ressl_forward.4} parent=0 // pred_fallthru
    _
  // Predicated region
  $region10: #{ressl_forward.4} parent=0 // pred_check
    _
  $region11: #{ressl_forward.4} parent=0 // pred_check_branch
    %347 = sbr.rel (0) target = $region13
  $region12: #{ressl_forward.4} parent=0 // pred_region
    _
  $region13: #{ressl_forward.4} parent=0 // pred_fallthru
    _
  // Predicated region
  $region14: #{ressl_forward.4} parent=0 // pred_check
    _
  $region15: #{ressl_forward.4} parent=0 // pred_check_branch
    %349 = sbr.rel (0) target = $region17
  $region16: #{ressl_forward.4} parent=0 // pred_region
    _
  $region17: #{ressl_forward.4} parent=0 // pred_fallthru
    _
  // Predicated region
  $region18: #{ressl_forward.4} parent=0 // pred_check
    _
  $region19: #{ressl_forward.4} parent=0 // pred_check_branch
    %351 = sbr.rel (0) target = $region21
  $region20: #{ressl_forward.4} parent=0 // pred_region
    _
  $region21: #{ressl_forward.4} parent=0 // pred_fallthru
    _

// kernel: ressl_forward.3
$region0: #{ressl_forward.3}
  #allocation0 [shape = 'u32[]', space=smem, size = 0x4, offset = 0x4, fixed_abs, tag = 'smem constant byte address 0x4 - core index']
  #allocation1 [shape = 'u32[144,128]{1,0:T(1,128)}', space=vmem, size = 0x12000, scoped, tag = 'internal scratch']
  #allocation2 [shape = 'f32[2,128]{1,0:T(2,128)}', space=vmem, size = 0x400, scoped, tag = 'scratch operand']
  %s0 = inlined_call_operand.vmem [shape: bf16[3,512,4], index: 0, kind: input, shape index: {}]
  %s1 = inlined_call_operand.vmem [shape: f32[3,4,128], index: 1, kind: input, shape index: {}]
  %s2 = inlined_call_operand.vmem [shape: f32[3,1,128], index: 2, kind: input, shape index: {}]
  %s3 = inlined_call_operand.vmem [shape: bf16[2,512], index: 3, kind: input, shape index: {}]
  %s4 = inlined_call_operand.vmem [shape: f32[3,128,128], index: 4, kind: input, shape index: {}]
  %s5 = inlined_call_operand.vmem [shape: f32[3,1,128], index: 5, kind: input, shape index: {}]
  %s6 = inlined_call_operand.vmem [shape: f32[3,128,128], index: 6, kind: input, shape index: {}]
  %s7 = inlined_call_operand.vmem [shape: f32[3,1,128], index: 7, kind: input, shape index: {}]
  %s8 = inlined_call_operand.vmem [shape: f32[128,512], index: 8, kind: input, shape index: {}]
  %s9 = inlined_call_operand.vmem [shape: bf16[3,512,128], index: 9, kind: output, shape index: {0}]
  %s10 = inlined_call_operand.vmem [shape: f32[3,2,128], index: 10, kind: output, shape index: {1}]
  %s11 = inlined_call_operand.vmem [shape: f32[3,2,512], index: 11, kind: output, shape index: {2}]
  %12 = xla_tuple %s9, %s10, %s11
  %s13 = sld [smem:[#allocation0]]
  $region93: #{ressl_forward.3} parent=0
    _
  %s15 = ssub.s32 1, %s13
  %s16 = scalar_select 0, %s15, %s13
  loop: start=0, step=1, limit=8
  $region2: #{ressl_forward.3} parent=0 // loop_pre_header
    _
  $region3: #{ressl_forward.3} parent=0 // loop_header
    %s18 = sphi 0, %s22
    %p19 = scmp.ge.s32.totalorder %s18, 8
    %s25 = sphi 0, %s37
    %s26 = sphi 0, %s33
    %s27 = sphi 0, %s25
    %s28 = sphi 0, %s26
    %s29 = sphi 0, %s27
    %s30 = sphi 0, %s28
    %s42 = sphi 0, %s44
    %s45 = sphi 0, %s42
    %s46 = sphi 0, %s45
    %s62 = sphi 0, %s46
    %s68 = sphi 0, %s70
    %s71 = sphi 0, %s68
    %s72 = sphi 0, %s71
    %s88 = sphi 0, %s72
    %s94 = sphi 0, %s96
    %s97 = sphi 0, %s94
    %s98 = sphi 0, %s97
    %s114 = sphi 0, %s98
    %s120 = sphi 0, %s122
    %s123 = sphi 0, %s120
    %s124 = sphi 0, %s123
    %s140 = sphi 0, %s124
    %s146 = sphi 0, %s148
    %s149 = sphi 0, %s146
    %s150 = sphi 0, %s149
    %s166 = sphi 0, %s150
    %s172 = sphi 0, %s174
    %s175 = sphi 0, %s172
    %s176 = sphi 0, %s175
    %s192 = sphi 0, %s176
    %s198 = sphi 0, %s200
    %s201 = sphi 0, %s198
    %s202 = sphi 0, %s201
    %s218 = sphi 0, %s202
    %s224 = sphi 0, %s226
    %s227 = sphi 0, %s224
    %s228 = sphi 0, %s227
    %s244 = sphi 0, %s228
    %s248 = sphi 0, %s248
    %s250 = sphi 0, %s248
    %s251 = sphi 0, %s250
    %s265 = sphi 0, %s251
    %s273 = sphi 0, %s275
    %s276 = sphi 0, %s273
    %s277 = sphi 0, %s276
    %s293 = sphi 0, %s277
    %s299 = sphi 0, %s301
    %s302 = sphi 0, %s299
    %s303 = sphi 0, %s302
    %s319 = sphi 0, %s303
    %s325 = sphi 0, %s327
    %s328 = sphi 0, %s325
    %s329 = sphi 0, %s328
    %s345 = sphi 0, %s329
  $region4: #{ressl_forward.3} parent=0 // loop_header_branch
    %21 = sbr.rel (%p19) target = $region8
  $region5: #{ressl_forward.3} parent=0 // loop_body
    %s23 = ssub.s32 %s18, 1
    %s24 = ssub.s32 %s18, 2
    %s31 = sadd.s32 1, %s26
    %p32 = scmp.ge.s32.totalorder %s31, 2
    %s33 = scalar_select %p32, 0, %s31
    %s34 = sadd.s32 1, %s25
    %s35 = scalar_select %p32, %s34, %s25
    %p36 = scmp.ge.s32.totalorder %s35, 3
    %s37 = scalar_select %p36, 0, %s35
    %s38 = ssub.s32 %s25, %s37
    %s39 = ssub.s32 %s26, %s33
    %s40 = sor.u32 %s38, %s39
    %p41 = scmp.eq.s32.totalorder %s40, 0
    %s43 = sadd.s32 %s42, 1
    %s44 = scalar_select %p41, %s42, %s43
    %p47 = pneg %p41
    %p48 = scmp.eq.s32.totalorder %s18, 5
    %p49 = por %p47, %p48
    %p50 = scmp.ne.s32.totalorder %s42, %s45
    %p51 = scmp.eq.s32.totalorder %s18, 0
    %p52 = por %p50, %p51
    %p53 = scmp.ne.s32.totalorder %s42, %s45
    %p54 = scmp.eq.s32.totalorder %s23, 5
    %p55 = por %p53, %p54
    %p56 = scmp.ne.s32.totalorder %s45, %s46
    %p57 = scmp.eq.s32.totalorder %s23, 0
    %p58 = por %p56, %p57
    %p59 = scmp.ne.s32.totalorder %s45, %s46
    %p60 = scmp.eq.s32.totalorder %s24, 5
    %p61 = por %p59, %p60
    %p63 = scmp.ne.s32.totalorder %s46, %s62
    %p64 = scmp.eq.s32.totalorder %s24, 0
    %p65 = por %p63, %p64
    %s66 = ssub.s32 %s25, %s37
    %p67 = scmp.eq.s32.totalorder %s66, 0
    %s69 = sadd.s32 %s68, 1
    %s70 = scalar_select %p67, %s68, %s69
    %p73 = pneg %p67
    %p74 = scmp.eq.s32.totalorder %s18, 5
    %p75 = por %p73, %p74
    %p76 = scmp.ne.s32.totalorder %s68, %s71
    %p77 = scmp.eq.s32.totalorder %s18, 0
    %p78 = por %p76, %p77
    %p79 = scmp.ne.s32.totalorder %s68, %s71
    %p80 = scmp.eq.s32.totalorder %s23, 5
    %p81 = por %p79, %p80
    %p82 = scmp.ne.s32.totalorder %s71, %s72
    %p83 = scmp.eq.s32.totalorder %s23, 0
    %p84 = por %p82, %p83
    %p85 = scmp.ne.s32.totalorder %s71, %s72
    %p86 = scmp.eq.s32.totalorder %s24, 5
    %p87 = por %p85, %p86
    %p89 = scmp.ne.s32.totalorder %s72, %s88
    %p90 = scmp.eq.s32.totalorder %s24, 0
    %p91 = por %p89, %p90
    %s92 = ssub.s32 %s25, %s37
    %p93 = scmp.eq.s32.totalorder %s92, 0
    %s95 = sadd.s32 %s94, 1
    %s96 = scalar_select %p93, %s94, %s95
    %p99 = pneg %p93
    %p100 = scmp.eq.s32.totalorder %s18, 5
    %p101 = por %p99, %p100
    %p102 = scmp.ne.s32.totalorder %s94, %s97
    %p103 = scmp.eq.s32.totalorder %s18, 0
    %p104 = por %p102, %p103
    %p105 = scmp.ne.s32.totalorder %s94, %s97
    %p106 = scmp.eq.s32.totalorder %s23, 5
    %p107 = por %p105, %p106
    %p108 = scmp.ne.s32.totalorder %s97, %s98
    %p109 = scmp.eq.s32.totalorder %s23, 0
    %p110 = por %p108, %p109
    %p111 = scmp.ne.s32.totalorder %s97, %s98
    %p112 = scmp.eq.s32.totalorder %s24, 5
    %p113 = por %p111, %p112
    %p115 = scmp.ne.s32.totalorder %s98, %s114
    %p116 = scmp.eq.s32.totalorder %s24, 0
    %p117 = por %p115, %p116
    %s118 = ssub.s32 %s26, %s33
    %p119 = scmp.eq.s32.totalorder %s118, 0
    %s121 = sadd.s32 %s120, 1
    %s122 = scalar_select %p119, %s120, %s121
    %p125 = pneg %p119
    %p126 = scmp.eq.s32.totalorder %s18, 5
    %p127 = por %p125, %p126
    %p128 = scmp.ne.s32.totalorder %s120, %s123
    %p129 = scmp.eq.s32.totalorder %s18, 0
    %p130 = por %p128, %p129
    %p131 = scmp.ne.s32.totalorder %s120, %s123
    %p132 = scmp.eq.s32.totalorder %s23, 5
    %p133 = por %p131, %p132
    %p134 = scmp.ne.s32.totalorder %s123, %s124
    %p135 = scmp.eq.s32.totalorder %s23, 0
    %p136 = por %p134, %p135
    %p137 = scmp.ne.s32.totalorder %s123, %s124
    %p138 = scmp.eq.s32.totalorder %s24, 5
    %p139 = por %p137, %p138
    %p141 = scmp.ne.s32.totalorder %s124, %s140
    %p142 = scmp.eq.s32.totalorder %s24, 0
    %p143 = por %p141, %p142
    %s144 = ssub.s32 %s25, %s37
    %p145 = scmp.eq.s32.totalorder %s144, 0
    %s147 = sadd.s32 %s146, 1
    %s148 = scalar_select %p145, %s146, %s147
    %p151 = pneg %p145
    %p152 = scmp.eq.s32.totalorder %s18, 5
    %p153 = por %p151, %p152
    %p154 = scmp.ne.s32.totalorder %s146, %s149
    %p155 = scmp.eq.s32.totalorder %s18, 0
    %p156 = por %p154, %p155
    %p157 = scmp.ne.s32.totalorder %s146, %s149
    %p158 = scmp.eq.s32.totalorder %s23, 5
    %p159 = por %p157, %p158
    %p160 = scmp.ne.s32.totalorder %s149, %s150
    %p161 = scmp.eq.s32.totalorder %s23, 0
    %p162 = por %p160, %p161
    %p163 = scmp.ne.s32.totalorder %s149, %s150
    %p164 = scmp.eq.s32.totalorder %s24, 5
    %p165 = por %p163, %p164
    %p167 = scmp.ne.s32.totalorder %s150, %s166
    %p168 = scmp.eq.s32.totalorder %s24, 0
    %p169 = por %p167, %p168
    %s170 = ssub.s32 %s25, %s37
    %p171 = scmp.eq.s32.totalorder %s170, 0
    %s173 = sadd.s32 %s172, 1
    %s174 = scalar_select %p171, %s172, %s173
    %p177 = pneg %p171
    %p178 = scmp.eq.s32.totalorder %s18, 5
    %p179 = por %p177, %p178
    %p180 = scmp.ne.s32.totalorder %s172, %s175
    %p181 = scmp.eq.s32.totalorder %s18, 0
    %p182 = por %p180, %p181
    %p183 = scmp.ne.s32.totalorder %s172, %s175
    %p184 = scmp.eq.s32.totalorder %s23, 5
    %p185 = por %p183, %p184
    %p186 = scmp.ne.s32.totalorder %s175, %s176
    %p187 = scmp.eq.s32.totalorder %s23, 0
    %p188 = por %p186, %p187
    %p189 = scmp.ne.s32.totalorder %s175, %s176
    %p190 = scmp.eq.s32.totalorder %s24, 5
    %p191 = por %p189, %p190
    %p193 = scmp.ne.s32.totalorder %s176, %s192
    %p194 = scmp.eq.s32.totalorder %s24, 0
    %p195 = por %p193, %p194
    %s196 = ssub.s32 %s25, %s37
    %p197 = scmp.eq.s32.totalorder %s196, 0
    %s199 = sadd.s32 %s198, 1
    %s200 = scalar_select %p197, %s198, %s199
    %p203 = pneg %p197
    %p204 = scmp.eq.s32.totalorder %s18, 5
    %p205 = por %p203, %p204
    %p206 = scmp.ne.s32.totalorder %s198, %s201
    %p207 = scmp.eq.s32.totalorder %s18, 0
    %p208 = por %p206, %p207
    %p209 = scmp.ne.s32.totalorder %s198, %s201
    %p210 = scmp.eq.s32.totalorder %s23, 5
    %p211 = por %p209, %p210
    %p212 = scmp.ne.s32.totalorder %s201, %s202
    %p213 = scmp.eq.s32.totalorder %s23, 0
    %p214 = por %p212, %p213
    %p215 = scmp.ne.s32.totalorder %s201, %s202
    %p216 = scmp.eq.s32.totalorder %s24, 5
    %p217 = por %p215, %p216
    %p219 = scmp.ne.s32.totalorder %s202, %s218
    %p220 = scmp.eq.s32.totalorder %s24, 0
    %p221 = por %p219, %p220
    %s222 = ssub.s32 %s25, %s37
    %p223 = scmp.eq.s32.totalorder %s222, 0
    %s225 = sadd.s32 %s224, 1
    %s226 = scalar_select %p223, %s224, %s225
    %p229 = pneg %p223
    %p230 = scmp.eq.s32.totalorder %s18, 5
    %p231 = por %p229, %p230
    %p232 = scmp.ne.s32.totalorder %s224, %s227
    %p233 = scmp.eq.s32.totalorder %s18, 0
    %p234 = por %p232, %p233
    %p235 = scmp.ne.s32.totalorder %s224, %s227
    %p236 = scmp.eq.s32.totalorder %s23, 5
    %p237 = por %p235, %p236
    %p238 = scmp.ne.s32.totalorder %s227, %s228
    %p239 = scmp.eq.s32.totalorder %s23, 0
    %p240 = por %p238, %p239
    %p241 = scmp.ne.s32.totalorder %s227, %s228
    %p242 = scmp.eq.s32.totalorder %s24, 5
    %p243 = por %p241, %p242
    %p245 = scmp.ne.s32.totalorder %s228, %s244
    %p246 = scmp.eq.s32.totalorder %s24, 0
    %p247 = por %p245, %p246
    %s249 = sadd.s32 %s248, 1
    %p252 = scmp.eq.s32.totalorder %s18, 5
    %p253 = scmp.ne.s32.totalorder %s248, %s250
    %p254 = scmp.eq.s32.totalorder %s18, 0
    %p255 = por %p253, %p254
    %p256 = scmp.ne.s32.totalorder %s248, %s250
    %p257 = scmp.eq.s32.totalorder %s23, 5
    %p258 = por %p256, %p257
    %p259 = scmp.ne.s32.totalorder %s250, %s251
    %p260 = scmp.eq.s32.totalorder %s23, 0
    %p261 = por %p259, %p260
    %p262 = scmp.ne.s32.totalorder %s250, %s251
    %p263 = scmp.eq.s32.totalorder %s24, 5
    %p264 = por %p262, %p263
    %p266 = scmp.ne.s32.totalorder %s251, %s265
    %p267 = scmp.eq.s32.totalorder %s24, 0
    %p268 = por %p266, %p267
    %s269 = ssub.s32 %s25, %s37
    %s270 = ssub.s32 %s26, %s33
    %s271 = sor.u32 %s269, %s270
    %p272 = scmp.eq.s32.totalorder %s271, 0
    %s274 = sadd.s32 %s273, 1
    %s275 = scalar_select %p272, %s273, %s274
    %p278 = pneg %p272
    %p279 = scmp.eq.s32.totalorder %s18, 5
    %p280 = por %p278, %p279
    %p281 = scmp.ne.s32.totalorder %s273, %s276
    %p282 = scmp.eq.s32.totalorder %s18, 0
    %p283 = por %p281, %p282
    %p284 = scmp.ne.s32.totalorder %s273, %s276
    %p285 = scmp.eq.s32.totalorder %s23, 5
    %p286 = por %p284, %p285
    %p287 = scmp.ne.s32.totalorder %s276, %s277
    %p288 = scmp.eq.s32.totalorder %s23, 0
    %p289 = por %p287, %p288
    %p290 = scmp.ne.s32.totalorder %s276, %s277
    %p291 = scmp.eq.s32.totalorder %s24, 5
    %p292 = por %p290, %p291
    %p294 = scmp.ne.s32.totalorder %s277, %s293
    %p295 = scmp.eq.s32.totalorder %s24, 0
    %p296 = por %p294, %p295
    %s297 = ssub.s32 %s25, %s37
    %p298 = scmp.eq.s32.totalorder %s297, 0
    %s300 = sadd.s32 %s299, 1
    %s301 = scalar_select %p298, %s299, %s300
    %p304 = pneg %p298
    %p305 = scmp.eq.s32.totalorder %s18, 5
    %p306 = por %p304, %p305
    %p307 = scmp.ne.s32.totalorder %s299, %s302
    %p308 = scmp.eq.s32.totalorder %s18, 0
    %p309 = por %p307, %p308
    %p310 = scmp.ne.s32.totalorder %s299, %s302
    %p311 = scmp.eq.s32.totalorder %s23, 5
    %p312 = por %p310, %p311
    %p313 = scmp.ne.s32.totalorder %s302, %s303
    %p314 = scmp.eq.s32.totalorder %s23, 0
    %p315 = por %p313, %p314
    %p316 = scmp.ne.s32.totalorder %s302, %s303
    %p317 = scmp.eq.s32.totalorder %s24, 5
    %p318 = por %p316, %p317
    %p320 = scmp.ne.s32.totalorder %s303, %s319
    %p321 = scmp.eq.s32.totalorder %s24, 0
    %p322 = por %p320, %p321
    %s323 = ssub.s32 %s25, %s37
    %p324 = scmp.eq.s32.totalorder %s323, 0
    %s326 = sadd.s32 %s325, 1
    %s327 = scalar_select %p324, %s325, %s326
    %p330 = pneg %p324
    %p331 = scmp.eq.s32.totalorder %s18, 5
    %p332 = por %p330, %p331
    %p333 = scmp.ne.s32.totalorder %s325, %s328
    %p334 = scmp.eq.s32.totalorder %s18, 0
    %p335 = por %p333, %p334
    %p336 = scmp.ne.s32.totalorder %s325, %s328
    %p337 = scmp.eq.s32.totalorder %s23, 5
    %p338 = por %p336, %p337
    %p339 = scmp.ne.s32.totalorder %s328, %s329
    %p340 = scmp.eq.s32.totalorder %s23, 0
    %p341 = por %p339, %p340
    %p342 = scmp.ne.s32.totalorder %s328, %s329
    %p343 = scmp.eq.s32.totalorder %s24, 5
    %p344 = por %p342, %p343
    %p346 = scmp.ne.s32.totalorder %s329, %s345
    %p347 = scmp.eq.s32.totalorder %s24, 0
    %p348 = por %p346, %p347
    %p349 = scmp.le.s32.totalorder 1, %s18
    %p350 = scmp.lt.s32.totalorder %s18, 7
    %p351 = pnand %p349, %p350
    %p352 = pneg %p351
    // Predicated region
    $region9: #{ressl_forward.3} parent=5 // pred_check
      _
    $region10: #{ressl_forward.3} parent=5 // pred_check_branch
      %354 = sbr.rel (%p351) target = $region12
    $region11: #{ressl_forward.3} parent=5 // pred_region
      %s355 = ssub.s32 %s18, 1
      // Predicated region
      $region13: #{ressl_forward.3} parent=11 // pred_check
        %p356 = pneg %p261
      $region14: #{ressl_forward.3} parent=11 // pred_check_branch
        %358 = sbr.rel (%p356) target = $region16
      $region15: #{ressl_forward.3} parent=11 // pred_region
        _
      $region16: #{ressl_forward.3} parent=11 // pred_fallthru
        _
    $region12: #{ressl_forward.3} parent=5 // pred_fallthru
      _
    %p359 = scmp.lt.s32.totalorder %s18, 6
    // Predicated region
    $region17: #{ressl_forward.3} parent=5 // pred_check
      %p360 = pneg %p359
    $region18: #{ressl_forward.3} parent=5 // pred_check_branch
      %362 = sbr.rel (%p360) target = $region20
    $region19: #{ressl_forward.3} parent=5 // pred_region
      // Predicated region
      $region21: #{ressl_forward.3} parent=19 // pred_check
        %p363 = pneg %p52
      $region22: #{ressl_forward.3} parent=19 // pred_check_branch
        %365 = sbr.rel (%p363) target = $region24
      $region23: #{ressl_forward.3} parent=19 // pred_region
        %s366 = smul.u32 32, %s26
        %p367 = scmp.lt.s32.totalorder %s25, 2
        %s368 = scalar_select %p367, %s25, 2
        %p369 = scmp.lt.s32.totalorder %s366, 63
        %s370 = scalar_select %p369, %s366, 63
        %s371 = smul.addr %s368, 64
        %s372 = sadd.s32 %s370, %s371
        %s373 = smul.addr %s372, 4
        %s374 = scalar_lea.vmem %s0, %s373
        %s375 = smul.u32 32, %s26
      $region24: #{ressl_forward.3} parent=19 // pred_fallthru
        _
      // Predicated region
      $region25: #{ressl_forward.3} parent=19 // pred_check
        %p376 = pneg %p78
      $region26: #{ressl_forward.3} parent=19 // pred_check_branch
        %378 = sbr.rel (%p376) target = $region28
      $region27: #{ressl_forward.3} parent=19 // pred_region
        %p379 = scmp.lt.s32.totalorder %s25, 2
        %s380 = scalar_select %p379, %s25, 2
        %s381 = smul.addr %s380, 4
        %s382 = scalar_lea.vmem %s1, %s381
      $region28: #{ressl_forward.3} parent=19 // pred_fallthru
        _
      // Predicated region
      $region29: #{ressl_forward.3} parent=19 // pred_check
        %p383 = pneg %p104
      $region30: #{ressl_forward.3} parent=19 // pred_check_branch
        %385 = sbr.rel (%p383) target = $region32
      $region31: #{ressl_forward.3} parent=19 // pred_region
        %p386 = scmp.lt.s32.totalorder %s25, 2
        %s387 = scalar_select %p386, %s25, 2
        %s388 = scalar_lea.vmem %s2, %s387
      $region32: #{ressl_forward.3} parent=19 // pred_fallthru
        _
      // Predicated region
      $region33: #{ressl_forward.3} parent=19 // pred_check
        %p389 = pneg %p130
      $region34: #{ressl_forward.3} parent=19 // pred_check_branch
        %391 = sbr.rel (%p389) target = $region36
      $region35: #{ressl_forward.3} parent=19 // pred_region
        %s392 = smul.u32 2, %s26
        %p393 = scmp.lt.s32.totalorder %s392, 3
        %s394 = scalar_select %p393, %s392, 3
        %s395 = scalar_lea.vmem %s3, %s394
        %s396 = smul.u32 2, %s26
      $region36: #{ressl_forward.3} parent=19 // pred_fallthru
        _
      // Predicated region
      $region37: #{ressl_forward.3} parent=19 // pred_check
        %p397 = pneg %p156
      $region38: #{ressl_forward.3} parent=19 // pred_check_branch
        %399 = sbr.rel (%p397) target = $region40
      $region39: #{ressl_forward.3} parent=19 // pred_region
        %p400 = scmp.lt.s32.totalorder %s25, 2
        %s401 = scalar_select %p400, %s25, 2
        %s402 = smul.addr %s401, 16
        %s403 = smul.addr %s402, 8
        %s404 = scalar_lea.vmem %s4, %s403
      $region40: #{ressl_forward.3} parent=19 // pred_fallthru
        _
      // Predicated region
      $region41: #{ressl_forward.3} parent=19 // pred_check
        %p405 = pneg %p182
      $region42: #{ressl_forward.3} parent=19 // pred_check_branch
        %407 = sbr.rel (%p405) target = $region44
      $region43: #{ressl_forward.3} parent=19 // pred_region
        %p408 = scmp.lt.s32.totalorder %s25, 2
        %s409 = scalar_select %p408, %s25, 2
        %s410 = scalar_lea.vmem %s5, %s409
      $region44: #{ressl_forward.3} parent=19 // pred_fallthru
        _
      // Predicated region
      $region45: #{ressl_forward.3} parent=19 // pred_check
        %p411 = pneg %p208
      $region46: #{ressl_forward.3} parent=19 // pred_check_branch
        %413 = sbr.rel (%p411) target = $region48
      $region47: #{ressl_forward.3} parent=19 // pred_region
        %p414 = scmp.lt.s32.totalorder %s25, 2
        %s415 = scalar_select %p414, %s25, 2
        %s416 = smul.addr %s415, 16
        %s417 = smul.addr %s416, 8
        %s418 = scalar_lea.vmem %s6, %s417
      $region48: #{ressl_forward.3} parent=19 // pred_fallthru
        _
      // Predicated region
      $region49: #{ressl_forward.3} parent=19 // pred_check
        %p419 = pneg %p234
      $region50: #{ressl_forward.3} parent=19 // pred_check_branch
        %421 = sbr.rel (%p419) target = $region52
      $region51: #{ressl_forward.3} parent=19 // pred_region
        %p422 = scmp.lt.s32.totalorder %s25, 2
        %s423 = scalar_select %p422, %s25, 2
        %s424 = scalar_lea.vmem %s7, %s423
      $region52: #{ressl_forward.3} parent=19 // pred_fallthru
        _
    $region20: #{ressl_forward.3} parent=5 // pred_fallthru
      _
    %p425 = scmp.le.s32.totalorder 1, %s18
    %p426 = scmp.lt.s32.totalorder %s18, 7
    %p427 = pnand %p425, %p426
    %p428 = pneg %p427
    // Predicated region
    $region53: #{ressl_forward.3} parent=5 // pred_check
      _
    $region54: #{ressl_forward.3} parent=5 // pred_check_branch
      %430 = sbr.rel (%p427) target = $region56
    $region55: #{ressl_forward.3} parent=5 // pred_region
      %s431 = ssub.s32 %s18, 1
      %s432 = smul.u32 32, %s28
      %p433 = scmp.lt.s32.totalorder %s27, 2
      %s434 = scalar_select %p433, %s27, 2
      %p435 = scmp.lt.s32.totalorder %s432, 63
      %s436 = scalar_select %p435, %s432, 63
      %s437 = smul.addr %s434, 64
      %s438 = sadd.s32 %s436, %s437
      %s439 = smul.addr %s438, 4
      %s440 = scalar_lea.vmem %s0, %s439
      %p441 = pneg %p58
      %p442 = pneg %p55
      %p443 = scmp.lt.s32.totalorder %s27, 2
      %s444 = scalar_select %p443, %s27, 2
      %s445 = smul.addr %s444, 4
      %s446 = scalar_lea.vmem %s1, %s445
      %p447 = pneg %p84
      %p448 = pneg %p81
      %p449 = scmp.lt.s32.totalorder %s27, 2
      %s450 = scalar_select %p449, %s27, 2
      %s451 = scalar_lea.vmem %s2, %s450
      %p452 = pneg %p110
      %p453 = pneg %p107
      %s454 = smul.u32 2, %s28
      %p455 = scmp.lt.s32.totalorder %s454, 3
      %s456 = scalar_select %p455, %s454, 3
      %s457 = scalar_lea.vmem %s3, %s456
      %p458 = pneg %p136
      %p459 = pneg %p133
      %p460 = scmp.lt.s32.totalorder %s27, 2
      %s461 = scalar_select %p460, %s27, 2
      %s462 = smul.addr %s461, 16
      %s463 = smul.addr %s462, 8
      %s464 = scalar_lea.vmem %s4, %s463
      %p465 = pneg %p162
      %p466 = pneg %p159
      %p467 = scmp.lt.s32.totalorder %s27, 2
      %s468 = scalar_select %p467, %s27, 2
      %s469 = scalar_lea.vmem %s5, %s468
      %p470 = pneg %p188
      %p471 = pneg %p185
      %p472 = scmp.lt.s32.totalorder %s27, 2
      %s473 = scalar_select %p472, %s27, 2
      %s474 = smul.addr %s473, 16
      %s475 = smul.addr %s474, 8
      %s476 = scalar_lea.vmem %s6, %s475
      %p477 = pneg %p214
      %p478 = pneg %p211
      %p479 = scmp.lt.s32.totalorder %s27, 2
      %s480 = scalar_select %p479, %s27, 2
      %s481 = scalar_lea.vmem %s7, %s480
      %p482 = pneg %p240
      %p483 = pneg %p237
      %p484 = pneg %p261
      %p485 = pneg %p258
      %p486 = pneg %p289
      %p487 = pneg %p286
      %s488 = smul.u32 32, %s28
      %p489 = scmp.lt.s32.totalorder %s27, 2
      %s490 = scalar_select %p489, %s27, 2
      %p491 = scmp.lt.s32.totalorder %s488, 63
      %s492 = scalar_select %p491, %s488, 63
      %s493 = smul.addr %s490, 64
      %s494 = sadd.s32 %s492, %s493
      %s495 = smul.addr %s494, 4
      %s496 = scalar_lea.vmem %s9, %s495
      %p497 = pneg %p315
      %p498 = pneg %p312
      %p499 = scmp.lt.s32.totalorder %s27, 2
      %s500 = scalar_select %p499, %s27, 2
      %s501 = smul.addr %s500, 2
      %s502 = scalar_lea.vmem %s10, %s501
      %p503 = pneg %p341
      %p504 = pneg %p338
      %p505 = scmp.lt.s32.totalorder %s27, 2
      %s506 = scalar_select %p505, %s27, 2
      %s507 = smul.addr %s506, 4
      %s508 = smul.addr %s507, 2
      %s509 = scalar_lea.vmem %s11, %s508
      %s510 = smul.u32 32, %s28
      %p511 = scmp.lt.s32.totalorder %s27, 2
      %s512 = scalar_select %p511, %s27, 2
      %p513 = scmp.lt.s32.totalorder %s510, 63
      %s514 = scalar_select %p513, %s510, 63
      %s515 = smul.addr %s512, 64
      %s516 = sadd.s32 %s514, %s515
      %s517 = smul.addr %s516, 4
      %s518 = scalar_lea.vmem %s0, %s517
      %s519 = smul.u32 32, %s28
      %p520 = scmp.lt.s32.totalorder %s27, 2
      %s521 = scalar_select %p520, %s27, 2
      %s522 = smul.addr %s521, 4
      %s523 = scalar_lea.vmem %s1, %s522
      %p524 = scmp.lt.s32.totalorder %s27, 2
      %s525 = scalar_select %p524, %s27, 2
      %s526 = scalar_lea.vmem %s2, %s525
      %s527 = smul.u32 2, %s28
      %p528 = scmp.lt.s32.totalorder %s527, 3
      %s529 = scalar_select %p528, %s527, 3
      %s530 = scalar_lea.vmem %s3, %s529
      %s531 = smul.u32 2, %s28
      %p532 = scmp.lt.s32.totalorder %s27, 2
      %s533 = scalar_select %p532, %s27, 2
      %s534 = smul.addr %s533, 16
      %s535 = smul.addr %s534, 8
      %s536 = scalar_lea.vmem %s4, %s535
      %p537 = scmp.lt.s32.totalorder %s27, 2
      %s538 = scalar_select %p537, %s27, 2
      %s539 = scalar_lea.vmem %s5, %s538
      %p540 = scmp.lt.s32.totalorder %s27, 2
      %s541 = scalar_select %p540, %s27, 2
      %s542 = smul.addr %s541, 16
      %s543 = smul.addr %s542, 8
      %s544 = scalar_lea.vmem %s6, %s543
      %p545 = scmp.lt.s32.totalorder %s27, 2
      %s546 = scalar_select %p545, %s27, 2
      %s547 = scalar_lea.vmem %s7, %s546
      %s548 = smul.u32 32, %s28
      %p549 = scmp.lt.s32.totalorder %s27, 2
      %s550 = scalar_select %p549, %s27, 2
      %p551 = scmp.lt.s32.totalorder %s548, 63
      %s552 = scalar_select %p551, %s548, 63
      %s553 = smul.addr %s550, 64
      %s554 = sadd.s32 %s552, %s553
      %s555 = smul.addr %s554, 4
      %s556 = scalar_lea.vmem %s9, %s555
      %s557 = smul.u32 32, %s28
      %p558 = scmp.lt.s32.totalorder %s27, 2
      %s559 = scalar_select %p558, %s27, 2
      %s560 = smul.addr %s559, 2
      %s561 = scalar_lea.vmem %s10, %s560
      %p562 = scmp.lt.s32.totalorder %s27, 2
      %s563 = scalar_select %p562, %s27, 2
      %s564 = smul.addr %s563, 4
      %s565 = smul.addr %s564, 2
      %s566 = scalar_lea.vmem %s11, %s565
      %p568 = scmp.eq.s32.totalorder %s28, 0
      // Predicated region
      $region57: #{ressl_forward.3} parent=55 // pred_check
        %p569 = pneg %p568
      $region58: #{ressl_forward.3} parent=55 // pred_check_branch
        %571 = sbr.rel (%p569) target = $region60
      $region59: #{ressl_forward.3} parent=55 // pred_region
        %572 = vst [vmem:[#allocation2] sm:$0x3] 0.0
      $region60: #{ressl_forward.3} parent=55 // pred_fallthru
        _
      %v573 = vld [vmem:[%s518] sm:$0xf]
      %v574 = vld [vmem:[%s518 + $0x4] sm:$0xf]
      %v575 = vld [vmem:[%s518 + $0x8] sm:$0xf]
      %v576 = vld [vmem:[%s518 + $0xc] sm:$0xf]
      %v577 = vld [vmem:[%s518 + $0x10] sm:$0xf]
      %v578 = vld [vmem:[%s518 + $0x14] sm:$0xf]
      %v579 = vld [vmem:[%s518 + $0x18] sm:$0xf]
      %v580 = vld [vmem:[%s518 + $0x1c] sm:$0xf]
      %v581 = vld [vmem:[%s518 + $0x20] sm:$0xf]
      %v582 = vld [vmem:[%s518 + $0x24] sm:$0xf]
      %v583 = vld [vmem:[%s518 + $0x28] sm:$0xf]
      %v584 = vld [vmem:[%s518 + $0x2c] sm:$0xf]
      %v585 = vld [vmem:[%s518 + $0x30] sm:$0xf]
      %v586 = vld [vmem:[%s518 + $0x34] sm:$0xf]
      %v587 = vld [vmem:[%s518 + $0x38] sm:$0xf]
      %v588 = vld [vmem:[%s518 + $0x3c] sm:$0xf]
      %v589 = vld [vmem:[%s518 + $0x40] sm:$0xf]
      %v590 = vld [vmem:[%s518 + $0x44] sm:$0xf]
      %v591 = vld [vmem:[%s518 + $0x48] sm:$0xf]
      %v592 = vld [vmem:[%s518 + $0x4c] sm:$0xf]
      %v593 = vld [vmem:[%s518 + $0x50] sm:$0xf]
      %v594 = vld [vmem:[%s518 + $0x54] sm:$0xf]
      %v595 = vld [vmem:[%s518 + $0x58] sm:$0xf]
      %v596 = vld [vmem:[%s518 + $0x5c] sm:$0xf]
      %v597 = vld [vmem:[%s518 + $0x60] sm:$0xf]
      %v598 = vld [vmem:[%s518 + $0x64] sm:$0xf]
      %v599 = vld [vmem:[%s518 + $0x68] sm:$0xf]
      %v600 = vld [vmem:[%s518 + $0x6c] sm:$0xf]
      %v601 = vld [vmem:[%s518 + $0x70] sm:$0xf]
      %v602 = vld [vmem:[%s518 + $0x74] sm:$0xf]
      %v603 = vld [vmem:[%s518 + $0x78] sm:$0xf]
      %v604 = vld [vmem:[%s518 + $0x7c] sm:$0xf]
      %v605 = vld [vmem:[%s523] sm:$0xf]
      %v606 = vpack.c.bf16 %v605, %v605
      %v607 = vld [vmem:[%s526] sm:$0x1]
      %v609 = vlaneseq
      %v610 = vshrl.u32 %v609, 7
      %v611 = vsub.s32 0, %v610
      %v612 = vrot.slane %v607, %v611
      %v646 = vunpack.c.l.b16 %v573
      %v647 = vunpack.c.l.b16 %v574
      %v648 = vunpack.c.l.b16 %v575
      %v649 = vunpack.c.l.b16 %v576
      %v650 = vunpack.c.l.b16 %v577
      %v651 = vunpack.c.l.b16 %v578
      %v652 = vunpack.c.l.b16 %v579
      %v653 = vunpack.c.l.b16 %v580
      %v654 = vunpack.c.l.b16 %v581
      %v655 = vunpack.c.l.b16 %v582
      %v656 = vunpack.c.l.b16 %v583
      %v657 = vunpack.c.l.b16 %v584
      %v658 = vunpack.c.l.b16 %v585
      %v659 = vunpack.c.l.b16 %v586
      %v660 = vunpack.c.l.b16 %v587
      %v661 = vunpack.c.l.b16 %v588
      %v662 = vunpack.c.l.b16 %v589
      %v663 = vunpack.c.l.b16 %v590
      %v664 = vunpack.c.l.b16 %v591
      %v665 = vunpack.c.l.b16 %v592
      %v666 = vunpack.c.l.b16 %v593
      %v667 = vunpack.c.l.b16 %v594
      %v668 = vunpack.c.l.b16 %v595
      %v669 = vunpack.c.l.b16 %v596
      %v670 = vunpack.c.l.b16 %v597
      %v671 = vunpack.c.l.b16 %v598
      %v672 = vunpack.c.l.b16 %v599
      %v673 = vunpack.c.l.b16 %v600
      %v674 = vunpack.c.l.b16 %v601
      %v675 = vunpack.c.l.b16 %v602
      %v676 = vunpack.c.l.b16 %v603
      %v677 = vunpack.c.l.b16 %v604
      %v678 = vpack.c.b16 %v647, %v646
      %v679 = vpack.c.b16 %v649, %v648
      %v680 = vpack.c.b16 %v651, %v650
      %v681 = vpack.c.b16 %v653, %v652
      %v682 = vpack.c.b16 %v655, %v654
      %v683 = vpack.c.b16 %v657, %v656
      %v684 = vpack.c.b16 %v659, %v658
      %v685 = vpack.c.b16 %v661, %v660
      %v686 = vpack.c.b16 %v663, %v662
      %v687 = vpack.c.b16 %v665, %v664
      %v688 = vpack.c.b16 %v667, %v666
      %v689 = vpack.c.b16 %v669, %v668
      %v690 = vpack.c.b16 %v671, %v670
      %v691 = vpack.c.b16 %v673, %v672
      %v692 = vpack.c.b16 %v675, %v674
      %v693 = vpack.c.b16 %v677, %v676
      %vm694 = vcmask 31744
      %v696 = vsel %vm694, %v678, 0
      %v699 = vsel %vm694, %v679, 0
      %v702 = vsel %vm694, %v680, 0
      %v705 = vsel %vm694, %v681, 0
      %v708 = vsel %vm694, %v682, 0
      %v711 = vsel %vm694, %v683, 0
      %v714 = vsel %vm694, %v684, 0
      %v717 = vsel %vm694, %v685, 0
      %v720 = vsel %vm694, %v686, 0
      %v723 = vsel %vm694, %v687, 0
      %v726 = vsel %vm694, %v688, 0
      %v729 = vsel %vm694, %v689, 0
      %v732 = vsel %vm694, %v690, 0
      %v735 = vsel %vm694, %v691, 0
      %v738 = vsel %vm694, %v692, 0
      %v741 = vsel %vm694, %v693, 0
      %vm743 = vcmask 1041408
      %v745 = vsel %vm743, %v606, 0
      %747 = vmatprep.subr.bf16.mxu0 0
      %748 = vmatpush1.bf16.msra.mxu0 %v745
      %749 = vmatprep.subr.bf16.mxu0 0
      %750 = vmatpush1.bf16.msra.mxu0 0
      %751 = vmatprep.subr.bf16.mxu0 0
      %752 = vmatpush1.bf16.msra.mxu0 0
      %753 = vmatprep.subr.bf16.mxu0 0
      %754 = vmatpush1.bf16.msra.mxu0 0
      %755 = vmatprep.subr.bf16.mxu0 0
      %756 = vmatpush1.bf16.msra.mxu0 0
      %757 = vmatprep.subr.bf16.mxu0 0
      %758 = vmatpush1.bf16.msra.mxu0 0
      %759 = vmatprep.subr.bf16.mxu0 0
      %760 = vmatpush1.bf16.msra.mxu0 0
      %761 = vmatprep.subr.bf16.mxu0 0
      %762 = vmatpush1.bf16.msra.mxu0 0
      %763 = vmatprep.subr.bf16.mxu0 0
      %764 = vmatpush1.bf16.msra.mxu0 0
      %765 = vmatprep.subr.bf16.mxu0 0
      %766 = vmatpush1.bf16.msra.mxu0 0
      %767 = vmatprep.subr.bf16.mxu0 0
      %768 = vmatpush1.bf16.msra.mxu0 0
      %769 = vmatprep.subr.bf16.mxu0 0
      %770 = vmatpush1.bf16.msra.mxu0 0
      %771 = vmatprep.subr.bf16.mxu0 0
      %772 = vmatpush1.bf16.msra.mxu0 0
      %773 = vmatprep.subr.bf16.mxu0 0
      %774 = vmatpush1.bf16.msra.mxu0 0
      %775 = vmatprep.subr.bf16.mxu0 0
      %776 = vmatpush1.bf16.msra.mxu0 0
      %777 = vmatprep.subr.bf16.mxu0 0
      %778 = vmatpush1.bf16.msra.mxu0 0
      %779 = vmatprep.mubr.bf16.mxu0 0
      %780 = vmatmul.mubr.bf16.gmra.mrb[0].mxu0 %v696
      %v781 = vpop.f32.mrb[0].mxu0
      %v782 = vadd.f32 %v612, %v781
      %v783 = vpop.f32.mrb[0].mxu0
      %v784 = vpop.f32.mrb[0].mxu0
      %v785 = vadd.f32 %v612, %v784
      %v786 = vpop.f32.mrb[0].mxu0
      %787 = vmatprep.mubr.bf16.mxu0 0
      %788 = vmatmul.mubr.bf16.gmra.mrb[0].mxu0 %v699
      %v789 = vpop.f32.mrb[0].mxu0
      %v790 = vadd.f32 %v612, %v789
      %v791 = vpop.f32.mrb[0].mxu0
      %v792 = vpop.f32.mrb[0].mxu0
      %v793 = vadd.f32 %v612, %v792
      %v794 = vpop.f32.mrb[0].mxu0
      %795 = vmatprep.mubr.bf16.mxu0 0
      %796 = vmatmul.mubr.bf16.gmra.mrb[0].mxu0 %v702
      %v797 = vpop.f32.mrb[0].mxu0
      %v798 = vadd.f32 %v612, %v797
      %v799 = vpop.f32.mrb[0].mxu0
      %v800 = vpop.f32.mrb[0].mxu0
      %v801 = vadd.f32 %v612, %v800
      %v802 = vpop.f32.mrb[0].mxu0
      %803 = vmatprep.mubr.bf16.mxu0 0
      %804 = vmatmul.mubr.bf16.gmra.mrb[0].mxu0 %v705
      %v805 = vpop.f32.mrb[0].mxu0
      %v806 = vadd.f32 %v612, %v805
      %v807 = vpop.f32.mrb[0].mxu0
      %v808 = vpop.f32.mrb[0].mxu0
      %v809 = vadd.f32 %v612, %v808
      %v810 = vpop.f32.mrb[0].mxu0
      %811 = vmatprep.mubr.bf16.mxu0 0
      %812 = vmatmul.mubr.bf16.gmra.mrb[0].mxu0 %v708
      %v813 = vpop.f32.mrb[0].mxu0
      %v814 = vadd.f32 %v612, %v813
      %v815 = vpop.f32.mrb[0].mxu0
      %v816 = vpop.f32.mrb[0].mxu0
      %v817 = vadd.f32 %v612, %v816
      %v818 = vpop.f32.mrb[0].mxu0
      %819 = vmatprep.mubr.bf16.mxu0 0
      %820 = vmatmul.mubr.bf16.gmra.mrb[0].mxu0 %v711
      %v821 = vpop.f32.mrb[0].mxu0
      %v822 = vadd.f32 %v612, %v821
      %v823 = vpop.f32.mrb[0].mxu0
      %v824 = vpop.f32.mrb[0].mxu0
      %v825 = vadd.f32 %v612, %v824
      %v826 = vpop.f32.mrb[0].mxu0
      %827 = vmatprep.mubr.bf16.mxu0 0
      %828 = vmatmul.mubr.bf16.gmra.mrb[0].mxu0 %v714
      %v829 = vpop.f32.mrb[0].mxu0
      %v830 = vadd.f32 %v612, %v829
      %v831 = vpop.f32.mrb[0].mxu0
      %v832 = vpop.f32.mrb[0].mxu0
      %v833 = vadd.f32 %v612, %v832
      %v834 = vpop.f32.mrb[0].mxu0
      %835 = vmatprep.mubr.bf16.mxu0 0
      %836 = vmatmul.mubr.bf16.gmra.mrb[0].mxu0 %v717
      %v837 = vpop.f32.mrb[0].mxu0
      %v838 = vadd.f32 %v612, %v837
      %v839 = vpop.f32.mrb[0].mxu0
      %v840 = vpop.f32.mrb[0].mxu0
      %v841 = vadd.f32 %v612, %v840
      %v842 = vpop.f32.mrb[0].mxu0
      %843 = vmatprep.mubr.bf16.mxu0 0
      %844 = vmatmul.mubr.bf16.gmra.mrb[0].mxu0 %v720
      %v845 = vpop.f32.mrb[0].mxu0
      %v846 = vadd.f32 %v612, %v845
      %v847 = vpop.f32.mrb[0].mxu0
      %v848 = vpop.f32.mrb[0].mxu0
      %v849 = vadd.f32 %v612, %v848
      %v850 = vpop.f32.mrb[0].mxu0
      %851 = vmatprep.mubr.bf16.mxu0 0
      %852 = vmatmul.mubr.bf16.gmra.mrb[0].mxu0 %v723
      %v853 = vpop.f32.mrb[0].mxu0
      %v854 = vadd.f32 %v612, %v853
      %v855 = vpop.f32.mrb[0].mxu0
      %v856 = vpop.f32.mrb[0].mxu0
      %v857 = vadd.f32 %v612, %v856
      %v858 = vpop.f32.mrb[0].mxu0
      %859 = vmatprep.mubr.bf16.mxu0 0
      %860 = vmatmul.mubr.bf16.gmra.mrb[0].mxu0 %v726
      %v861 = vpop.f32.mrb[0].mxu0
      %v862 = vadd.f32 %v612, %v861
      %v863 = vpop.f32.mrb[0].mxu0
      %v864 = vpop.f32.mrb[0].mxu0
      %v865 = vadd.f32 %v612, %v864
      %v866 = vpop.f32.mrb[0].mxu0
      %867 = vmatprep.mubr.bf16.mxu0 0
      %868 = vmatmul.mubr.bf16.gmra.mrb[0].mxu0 %v729
      %v869 = vpop.f32.mrb[0].mxu0
      %v870 = vadd.f32 %v612, %v869
      %v871 = vpop.f32.mrb[0].mxu0
      %v872 = vpop.f32.mrb[0].mxu0
      %v873 = vadd.f32 %v612, %v872
      %v874 = vpop.f32.mrb[0].mxu0
      %875 = vmatprep.mubr.bf16.mxu0 0
      %876 = vmatmul.mubr.bf16.gmra.mrb[0].mxu0 %v732
      %v877 = vpop.f32.mrb[0].mxu0
      %v878 = vadd.f32 %v612, %v877
      %v879 = vpop.f32.mrb[0].mxu0
      %v880 = vpop.f32.mrb[0].mxu0
      %v881 = vadd.f32 %v612, %v880
      %v882 = vpop.f32.mrb[0].mxu0
      %883 = vmatprep.mubr.bf16.mxu0 0
      %884 = vmatmul.mubr.bf16.gmra.mrb[0].mxu0 %v735
      %v885 = vpop.f32.mrb[0].mxu0
      %v886 = vadd.f32 %v612, %v885
      %v887 = vpop.f32.mrb[0].mxu0
      %v888 = vpop.f32.mrb[0].mxu0
      %v889 = vadd.f32 %v612, %v888
      %v890 = vpop.f32.mrb[0].mxu0
      %891 = vmatprep.mubr.bf16.mxu0 0
      %892 = vmatmul.mubr.bf16.gmra.mrb[0].mxu0 %v738
      %v893 = vpop.f32.mrb[0].mxu0
      %v894 = vadd.f32 %v612, %v893
      %v895 = vpop.f32.mrb[0].mxu0
      %v896 = vpop.f32.mrb[0].mxu0
      %v897 = vadd.f32 %v612, %v896
      %v898 = vpop.f32.mrb[0].mxu0
      %899 = vmatprep.mubr.bf16.mxu0 0
      %900 = vmatmul.mubr.bf16.gmra.mrb[0].mxu0 %v741
      %v901 = vpop.f32.mrb[0].mxu0
      %v902 = vadd.f32 %v612, %v901
      %v903 = vpop.f32.mrb[0].mxu0
      %v904 = vpop.f32.mrb[0].mxu0
      %v905 = vadd.f32 %v612, %v904
      %v906 = vpop.f32.mrb[0].mxu0
      %907 = vdwg.mxu0
      %v908 = vmax.f32 %v782, 0.0
      %v909 = vmax.f32 %v785, 0.0
      %v910 = vmax.f32 %v790, 0.0
      %v911 = vmax.f32 %v793, 0.0
      %v912 = vmax.f32 %v798, 0.0
      %v913 = vmax.f32 %v801, 0.0
      %v914 = vmax.f32 %v806, 0.0
      %v915 = vmax.f32 %v809, 0.0
      %v916 = vmax.f32 %v814, 0.0
      %v917 = vmax.f32 %v817, 0.0
      %v918 = vmax.f32 %v822, 0.0
      %v919 = vmax.f32 %v825, 0.0
      %v920 = vmax.f32 %v830, 0.0
      %v921 = vmax.f32 %v833, 0.0
      %v922 = vmax.f32 %v838, 0.0
      %v923 = vmax.f32 %v841, 0.0
      %v924 = vmax.f32 %v846, 0.0
      %v925 = vmax.f32 %v849, 0.0
      %v926 = vmax.f32 %v854, 0.0
      %v927 = vmax.f32 %v857, 0.0
      %v928 = vmax.f32 %v862, 0.0
      %v929 = vmax.f32 %v865, 0.0
      %v930 = vmax.f32 %v870, 0.0
      %v931 = vmax.f32 %v873, 0.0
      %v932 = vmax.f32 %v878, 0.0
      %v933 = vmax.f32 %v881, 0.0
      %v934 = vmax.f32 %v886, 0.0
      %v935 = vmax.f32 %v889, 0.0
      %v936 = vmax.f32 %v894, 0.0
      %v937 = vmax.f32 %v897, 0.0
      %v938 = vmax.f32 %v902, 0.0
      %v939 = vmax.f32 %v905, 0.0
      %v940 = vpack.c.bf16 %v909, %v908
      %v941 = vpack.c.bf16 %v911, %v910
      %v942 = vpack.c.bf16 %v913, %v912
      %v943 = vpack.c.bf16 %v915, %v914
      %v944 = vpack.c.bf16 %v917, %v916
      %v945 = vpack.c.bf16 %v919, %v918
      %v946 = vpack.c.bf16 %v921, %v920
      %v947 = vpack.c.bf16 %v923, %v922
      %v948 = vpack.c.bf16 %v925, %v924
      %v949 = vpack.c.bf16 %v927, %v926
      %v950 = vpack.c.bf16 %v929, %v928
      %v951 = vpack.c.bf16 %v931, %v930
      %v952 = vpack.c.bf16 %v933, %v932
      %v953 = vpack.c.bf16 %v935, %v934
      %v954 = vpack.c.bf16 %v937, %v936
      %v955 = vpack.c.bf16 %v939, %v938
      %v972 = vunpack.c.l.b16 %v940
      %v973 = vunpack.c.h.b16 %v940
      %v974 = vunpack.c.l.b16 %v941
      %v975 = vunpack.c.h.b16 %v941
      %v976 = vunpack.c.l.b16 %v942
      %v977 = vunpack.c.h.b16 %v942
      %v978 = vunpack.c.l.b16 %v943
      %v979 = vunpack.c.h.b16 %v943
      %v980 = vunpack.c.l.b16 %v944
      %v981 = vunpack.c.h.b16 %v944
      %v982 = vunpack.c.l.b16 %v945
      %v983 = vunpack.c.h.b16 %v945
      %v984 = vunpack.c.l.b16 %v946
      %v985 = vunpack.c.h.b16 %v946
      %v986 = vunpack.c.l.b16 %v947
      %v987 = vunpack.c.h.b16 %v947
      %v988 = vunpack.c.l.b16 %v948
      %v989 = vunpack.c.h.b16 %v948
      %v990 = vunpack.c.l.b16 %v949
      %v991 = vunpack.c.h.b16 %v949
      %v992 = vunpack.c.l.b16 %v950
      %v993 = vunpack.c.h.b16 %v950
      %v994 = vunpack.c.l.b16 %v951
      %v995 = vunpack.c.h.b16 %v951
      %v996 = vunpack.c.l.b16 %v952
      %v997 = vunpack.c.h.b16 %v952
      %v998 = vunpack.c.l.b16 %v953
      %v999 = vunpack.c.h.b16 %v953
      %v1000 = vunpack.c.l.b16 %v954
      %v1001 = vunpack.c.h.b16 %v954
      %v1002 = vunpack.c.l.b16 %v955
      %v1003 = vunpack.c.h.b16 %v955
      %v1004 = vpack.c.b16 %v972, %v972
      %v1005 = vpack.c.b16 %v973, %v973
      %v1006 = vpack.c.b16 %v974, %v974
      %v1007 = vpack.c.b16 %v975, %v975
      %v1008 = vpack.c.b16 %v976, %v976
      %v1009 = vpack.c.b16 %v977, %v977
      %v1010 = vpack.c.b16 %v978, %v978
      %v1011 = vpack.c.b16 %v979, %v979
      %v1012 = vpack.c.b16 %v980, %v980
      %v1013 = vpack.c.b16 %v981, %v981
      %v1014 = vpack.c.b16 %v982, %v982
      %v1015 = vpack.c.b16 %v983, %v983
      %v1016 = vpack.c.b16 %v984, %v984
      %v1017 = vpack.c.b16 %v985, %v985
      %v1018 = vpack.c.b16 %v986, %v986
      %v1019 = vpack.c.b16 %v987, %v987
      %v1020 = vpack.c.b16 %v988, %v988
      %v1021 = vpack.c.b16 %v989, %v989
      %v1022 = vpack.c.b16 %v990, %v990
      %v1023 = vpack.c.b16 %v991, %v991
      %v1024 = vpack.c.b16 %v992, %v992
      %v1025 = vpack.c.b16 %v993, %v993
      %v1026 = vpack.c.b16 %v994, %v994
      %v1027 = vpack.c.b16 %v995, %v995
      %v1028 = vpack.c.b16 %v996, %v996
      %v1029 = vpack.c.b16 %v997, %v997
      %v1030 = vpack.c.b16 %v998, %v998
      %v1031 = vpack.c.b16 %v999, %v999
      %v1032 = vpack.c.b16 %v1000, %v1000
      %v1033 = vpack.c.b16 %v1001, %v1001
      %v1034 = vpack.c.b16 %v1002, %v1002
      %v1035 = vpack.c.b16 %v1003, %v1003
      %1068 = vst [vmem:[%s556] sm:$0xf] %v1004
      %1069 = vst [vmem:[%s556 + $0x4] sm:$0xf] %v1005
      %1070 = vst [vmem:[%s556 + $0x8] sm:$0xf] %v1006
      %1071 = vst [vmem:[%s556 + $0xc] sm:$0xf] %v1007
      %1072 = vst [vmem:[%s556 + $0x10] sm:$0xf] %v1008
      %1073 = vst [vmem:[%s556 + $0x14] sm:$0xf] %v1009
      %1074 = vst [vmem:[%s556 + $0x18] sm:$0xf] %v1010
      %1075 = vst [vmem:[%s556 + $0x1c] sm:$0xf] %v1011
      %1076 = vst [vmem:[%s556 + $0x20] sm:$0xf] %v1012
      %1077 = vst [vmem:[%s556 + $0x24] sm:$0xf] %v1013
      %1078 = vst [vmem:[%s556 + $0x28] sm:$0xf] %v1014
      %1079 = vst [vmem:[%s556 + $0x2c] sm:$0xf] %v1015
      %1080 = vst [vmem:[%s556 + $0x30] sm:$0xf] %v1016
      %1081 = vst [vmem:[%s556 + $0x34] sm:$0xf] %v1017
      %1082 = vst [vmem:[%s556 + $0x38] sm:$0xf] %v1018
      %1083 = vst [vmem:[%s556 + $0x3c] sm:$0xf] %v1019
      %1084 = vst [vmem:[%s556 + $0x40] sm:$0xf] %v1020
      %1085 = vst [vmem:[%s556 + $0x44] sm:$0xf] %v1021
      %1086 = vst [vmem:[%s556 + $0x48] sm:$0xf] %v1022
      %1087 = vst [vmem:[%s556 + $0x4c] sm:$0xf] %v1023
      %1088 = vst [vmem:[%s556 + $0x50] sm:$0xf] %v1024
      %1089 = vst [vmem:[%s556 + $0x54] sm:$0xf] %v1025
      %1090 = vst [vmem:[%s556 + $0x58] sm:$0xf] %v1026
      %1091 = vst [vmem:[%s556 + $0x5c] sm:$0xf] %v1027
      %1092 = vst [vmem:[%s556 + $0x60] sm:$0xf] %v1028
      %1093 = vst [vmem:[%s556 + $0x64] sm:$0xf] %v1029
      %1094 = vst [vmem:[%s556 + $0x68] sm:$0xf] %v1030
      %1095 = vst [vmem:[%s556 + $0x6c] sm:$0xf] %v1031
      %1096 = vst [vmem:[%s556 + $0x70] sm:$0xf] %v1032
      %1097 = vst [vmem:[%s556 + $0x74] sm:$0xf] %v1033
      %1098 = vst [vmem:[%s556 + $0x78] sm:$0xf] %v1034
      %1099 = vst [vmem:[%s556 + $0x7c] sm:$0xf] %v1035
      %v1100 = vld [vmem:[#allocation2] sm:$0x3]
      %v1101 = vld [vmem:[%s530] sm:$0x3]
      %v1104 = vunpack.c.l.s4 1966171168
      %v1105 = vunpack.c.0.s8 %v1104
      %v1106 = vlaneseq
      %v1107 = vshrl.u32 %v1106, 7
      %v1108 = vsub.s32 %v1105, %v1107
      %v1109 = vrot.slane %v1101, %v1108
      %v1110 = vcombine.high %v1109, %v1109
      %v1112 = vunpack.c.l.s4 1966171168
      %v1113 = vunpack.c.0.s8 %v1112
      %v1114 = vlaneseq
      %v1115 = vshrl.u32 %v1114, 7
      %v1116 = vsub.s32 %v1113, %v1115
      %v1117 = vrot.slane %v1109, %v1116
      %v1119 = vunpack.c.l.s4 1966171168
      %v1120 = vunpack.c.0.s8 %v1119
      %v1121 = vlaneseq
      %v1122 = vshrl.u32 %v1121, 7
      %v1123 = vsub.s32 %v1120, %v1122
      %v1124 = vrot.slane %v1110, %v1123
      %1127 = vmatprep.subr.bf16.mxu0 0
      %1128 = vmatpush1.bf16.msra.mxu0 %v940
      %1129 = vmatprep.subr.bf16.mxu0 0
      %1130 = vmatpush1.bf16.msra.mxu0 %v941
      %1131 = vmatprep.subr.bf16.mxu0 0
      %1132 = vmatpush1.bf16.msra.mxu0 %v942
      %1133 = vmatprep.subr.bf16.mxu0 0
      %1134 = vmatpush1.bf16.msra.mxu0 %v943
      %1135 = vmatprep.subr.bf16.mxu0 0
      %1136 = vmatpush1.bf16.msra.mxu0 %v944
      %1137 = vmatprep.subr.bf16.mxu0 0
      %1138 = vmatpush1.bf16.msra.mxu0 %v945
      %1139 = vmatprep.subr.bf16.mxu0 0
      %1140 = vmatpush1.bf16.msra.mxu0 %v946
      %1141 = vmatprep.subr.bf16.mxu0 0
      %1142 = vmatpush1.bf16.msra.mxu0 %v947
      %1143 = vmatprep.subr.bf16.mxu0 0
      %1144 = vmatpush1.bf16.msra.mxu0 %v948
      %1145 = vmatprep.subr.bf16.mxu0 0
      %1146 = vmatpush1.bf16.msra.mxu0 %v949
      %1147 = vmatprep.subr.bf16.mxu0 0
      %1148 = vmatpush1.bf16.msra.mxu0 %v950
      %1149 = vmatprep.subr.bf16.mxu0 0
      %1150 = vmatpush1.bf16.msra.mxu0 %v951
      %1151 = vmatprep.subr.bf16.mxu0 0
      %1152 = vmatpush1.bf16.msra.mxu0 %v952
      %1153 = vmatprep.subr.bf16.mxu0 0
      %1154 = vmatpush1.bf16.msra.mxu0 %v953
      %1155 = vmatprep.subr.bf16.mxu0 0
      %1156 = vmatpush1.bf16.msra.mxu0 %v954
      %1157 = vmatprep.subr.bf16.mxu0 0
      %1158 = vmatpush1.bf16.msra.mxu0 %v955
      %1159 = vmatprep.mubr.bf16.mxu0 %v1124
      %1160 = vmatmul.mubr.bf16.gmra.mrb[0].mxu0 %v1117
      %v1161 = vpop.f32.mrb[0].mxu0
      %v1162 = vadd.f32 0.0, %v1161
      %v1163 = vpop.f32.mrb[0].mxu0
      %v1164 = vpop.f32.mrb[0].mxu0
      %v1165 = vpop.f32.mrb[0].mxu0
      %1166 = vdwg.mxu0
      %v1167 = vadd.f32 %v1100, %v1162
      %1168 = vst [vmem:[#allocation2] sm:$0x3] %v1167
      %p1169 = scmp.eq.s32.totalorder %s28, 1
      // Predicated region
      $region61: #{ressl_forward.3} parent=55 // pred_check
        %p1170 = pneg %p1169
      $region62: #{ressl_forward.3} parent=55 // pred_check_branch
        %1172 = sbr.rel (%p1170) target = $region64
      $region63: #{ressl_forward.3} parent=55 // pred_region
        %v1173 = vld [vmem:[#allocation2] sm:$0x3]
        %v1174 = vpack.c.bf16 %v1173, %v1173
        %v1175 = vld [vmem:[%s536] sm:$0xff]
        %v1176 = vld [vmem:[%s536 + $0x8] sm:$0xff]
        %v1177 = vld [vmem:[%s536 + $0x10] sm:$0xff]
        %v1178 = vld [vmem:[%s536 + $0x18] sm:$0xff]
        %v1179 = vld [vmem:[%s536 + $0x20] sm:$0xff]
        %v1180 = vld [vmem:[%s536 + $0x28] sm:$0xff]
        %v1181 = vld [vmem:[%s536 + $0x30] sm:$0xff]
        %v1182 = vld [vmem:[%s536 + $0x38] sm:$0xff]
        %v1183 = vld [vmem:[%s536 + $0x40] sm:$0xff]
        %v1184 = vld [vmem:[%s536 + $0x48] sm:$0xff]
        %v1185 = vld [vmem:[%s536 + $0x50] sm:$0xff]
        %v1186 = vld [vmem:[%s536 + $0x58] sm:$0xff]
        %v1187 = vld [vmem:[%s536 + $0x60] sm:$0xff]
        %v1188 = vld [vmem:[%s536 + $0x68] sm:$0xff]
        %v1189 = vld [vmem:[%s536 + $0x70] sm:$0xff]
        %v1190 = vld [vmem:[%s536 + $0x78] sm:$0xff]
        %v1191 = vpack.c.bf16 %v1176, %v1175
        %v1192 = vpack.c.bf16 %v1178, %v1177
        %v1193 = vpack.c.bf16 %v1180, %v1179
        %v1194 = vpack.c.bf16 %v1182, %v1181
        %v1195 = vpack.c.bf16 %v1184, %v1183
        %v1196 = vpack.c.bf16 %v1186, %v1185
        %v1197 = vpack.c.bf16 %v1188, %v1187
        %v1198 = vpack.c.bf16 %v1190, %v1189
        %v1199 = vld [vmem:[%s539] sm:$0x1]
        %v1201 = vlaneseq
        %v1202 = vshrl.u32 %v1201, 7
        %v1203 = vsub.s32 0, %v1202
        %v1204 = vrot.slane %v1199, %v1203
        %1206 = vmatprep.subr.bf16.mxu0 0
        %1207 = vmatpush1.bf16.msra.mxu0 %v1191
        %1208 = vmatprep.subr.bf16.mxu0 0
        %1209 = vmatpush1.bf16.msra.mxu0 %v1192
        %1210 = vmatprep.subr.bf16.mxu0 0
        %1211 = vmatpush1.bf16.msra.mxu0 %v1193
        %1212 = vmatprep.subr.bf16.mxu0 0
        %1213 = vmatpush1.bf16.msra.mxu0 %v1194
        %1214 = vmatprep.subr.bf16.mxu0 0
        %1215 = vmatpush1.bf16.msra.mxu0 %v1195
        %1216 = vmatprep.subr.bf16.mxu0 0
        %1217 = vmatpush1.bf16.msra.mxu0 %v1196
        %1218 = vmatprep.subr.bf16.mxu0 0
        %1219 = vmatpush1.bf16.msra.mxu0 %v1197
        %1220 = vmatprep.subr.bf16.mxu0 0
        %1221 = vmatpush1.bf16.msra.mxu0 %v1198
        %1222 = vmatprep.subr.bf16.mxu0 0
        %1223 = vmatpush1.bf16.msra.mxu0 0
        %1224 = vmatprep.subr.bf16.mxu0 0
        %1225 = vmatpush1.bf16.msra.mxu0 0
        %1226 = vmatprep.subr.bf16.mxu0 0
        %1227 = vmatpush1.bf16.msra.mxu0 0
        %1228 = vmatprep.subr.bf16.mxu0 0
        %1229 = vmatpush1.bf16.msra.mxu0 0
        %1230 = vmatprep.subr.bf16.mxu0 0
        %1231 = vmatpush1.bf16.msra.mxu0 0
        %1232 = vmatprep.subr.bf16.mxu0 0
        %1233 = vmatpush1.bf16.msra.mxu0 0
        %1234 = vmatprep.subr.bf16.mxu0 0
        %1235 = vmatpush1.bf16.msra.mxu0 0
        %1236 = vmatprep.subr.bf16.mxu0 0
        %1237 = vmatpush1.bf16.msra.mxu0 0
        %1238 = vmatprep.mubr.bf16.mxu0 0
        %1239 = vmatmul.mubr.bf16.gmra.mrb[0].mxu0 %v1174
        %v1240 = vpop.f32.mrb[0].mxu0
        %v1241 = vadd.f32 %v1204, %v1240
        %v1242 = vpop.f32.mrb[0].mxu0
        %v1243 = vpop.f32.mrb[0].mxu0
        %v1244 = vpop.f32.mrb[0].mxu0
        %1245 = vdwg.mxu0
        %v1246 = vmax.f32 %v1241, 0.0
        %v1247 = vpack.c.bf16 %v1246, %v1246
        %v1248 = vld [vmem:[%s544] sm:$0xff]
        %v1249 = vld [vmem:[%s544 + $0x8] sm:$0xff]
        %v1250 = vld [vmem:[%s544 + $0x10] sm:$0xff]
        %v1251 = vld [vmem:[%s544 + $0x18] sm:$0xff]
        %v1252 = vld [vmem:[%s544 + $0x20] sm:$0xff]
        %v1253 = vld [vmem:[%s544 + $0x28] sm:$0xff]
        %v1254 = vld [vmem:[%s544 + $0x30] sm:$0xff]
        %v1255 = vld [vmem:[%s544 + $0x38] sm:$0xff]
        %v1256 = vld [vmem:[%s544 + $0x40] sm:$0xff]
        %v1257 = vld [vmem:[%s544 + $0x48] sm:$0xff]
        %v1258 = vld [vmem:[%s544 + $0x50] sm:$0xff]
        %v1259 = vld [vmem:[%s544 + $0x58] sm:$0xff]
        %v1260 = vld [vmem:[%s544 + $0x60] sm:$0xff]
        %v1261 = vld [vmem:[%s544 + $0x68] sm:$0xff]
        %v1262 = vld [vmem:[%s544 + $0x70] sm:$0xff]
        %v1263 = vld [vmem:[%s544 + $0x78] sm:$0xff]
        %v1264 = vpack.c.bf16 %v1249, %v1248
        %v1265 = vpack.c.bf16 %v1251, %v1250
        %v1266 = vpack.c.bf16 %v1253, %v1252
        %v1267 = vpack.c.bf16 %v1255, %v1254
        %v1268 = vpack.c.bf16 %v1257, %v1256
        %v1269 = vpack.c.bf16 %v1259, %v1258
        %v1270 = vpack.c.bf16 %v1261, %v1260
        %v1271 = vpack.c.bf16 %v1263, %v1262
        %v1272 = vld [vmem:[%s547] sm:$0x1]
        %v1274 = vlaneseq
        %v1275 = vshrl.u32 %v1274, 7
        %v1276 = vsub.s32 0, %v1275
        %v1277 = vrot.slane %v1272, %v1276
        %1279 = vmatprep.subr.bf16.mxu0 0
        %1280 = vmatpush1.bf16.msra.mxu0 %v1264
        %1281 = vmatprep.subr.bf16.mxu0 0
        %1282 = vmatpush1.bf16.msra.mxu0 %v1265
        %1283 = vmatprep.subr.bf16.mxu0 0
        %1284 = vmatpush1.bf16.msra.mxu0 %v1266
        %1285 = vmatprep.subr.bf16.mxu0 0
        %1286 = vmatpush1.bf16.msra.mxu0 %v1267
        %1287 = vmatprep.subr.bf16.mxu0 0
        %1288 = vmatpush1.bf16.msra.mxu0 %v1268
        %1289 = vmatprep.subr.bf16.mxu0 0
        %1290 = vmatpush1.bf16.msra.mxu0 %v1269
        %1291 = vmatprep.subr.bf16.mxu0 0
        %1292 = vmatpush1.bf16.msra.mxu0 %v1270
        %1293 = vmatprep.subr.bf16.mxu0 0
        %1294 = vmatpush1.bf16.msra.mxu0 %v1271
        %1295 = vmatprep.subr.bf16.mxu0 0
        %1296 = vmatpush1.bf16.msra.mxu0 0
        %1297 = vmatprep.subr.bf16.mxu0 0
        %1298 = vmatpush1.bf16.msra.mxu0 0
        %1299 = vmatprep.subr.bf16.mxu0 0
        %1300 = vmatpush1.bf16.msra.mxu0 0
        %1301 = vmatprep.subr.bf16.mxu0 0
        %1302 = vmatpush1.bf16.msra.mxu0 0
        %1303 = vmatprep.subr.bf16.mxu0 0
        %1304 = vmatpush1.bf16.msra.mxu0 0
        %1305 = vmatprep.subr.bf16.mxu0 0
        %1306 = vmatpush1.bf16.msra.mxu0 0
        %1307 = vmatprep.subr.bf16.mxu0 0
        %1308 = vmatpush1.bf16.msra.mxu0 0
        %1309 = vmatprep.subr.bf16.mxu0 0
        %1310 = vmatpush1.bf16.msra.mxu0 0
        %1311 = vmatprep.mubr.bf16.mxu0 0
        %1312 = vmatmul.mubr.bf16.gmra.mrb[0].mxu0 %v1247
        %v1313 = vpop.f32.mrb[0].mxu0
        %v1314 = vadd.f32 %v1277, %v1313
        %v1315 = vpop.f32.mrb[0].mxu0
        %v1316 = vpop.f32.mrb[0].mxu0
        %v1317 = vpop.f32.mrb[0].mxu0
        %1318 = vdwg.mxu0
        %v1319 = vmul.f32 %v1314, %v1314
        %v1320 = vsel %vm743, %v1319, 0.0
        %1321 = vadd.xlane.f32.xlu0 %v1320
        %v1322 = vpop.xlane.xlu0 %1321
        %v1323 = vmax.f32 %v1322, 1e-24
        %v1324 = vrsqrt.pop %v1323
        %v1325 = vmul.f32 %v1314, %v1324
        %1326 = vst [vmem:[%s561] sm:$0x3] %v1325
        %v1327 = vpack.c.bf16 %v1325, %v1325
        %v1328 = vld [vmem:[%s8] sm:$0xff]
        %v1329 = vld [vmem:[%s8 + $0x8] sm:$0xff]
        %v1330 = vld [vmem:[%s8 + $0x10] sm:$0xff]
        %v1331 = vld [vmem:[%s8 + $0x18] sm:$0xff]
        %v1332 = vld [vmem:[%s8 + $0x20] sm:$0xff]
        %v1333 = vld [vmem:[%s8 + $0x28] sm:$0xff]
        %v1334 = vld [vmem:[%s8 + $0x30] sm:$0xff]
        %v1335 = vld [vmem:[%s8 + $0x38] sm:$0xff]
        %v1336 = vld [vmem:[%s8 + $0x40] sm:$0xff]
        %v1337 = vld [vmem:[%s8 + $0x48] sm:$0xff]
        %v1338 = vld [vmem:[%s8 + $0x50] sm:$0xff]
        %v1339 = vld [vmem:[%s8 + $0x58] sm:$0xff]
        %v1340 = vld [vmem:[%s8 + $0x60] sm:$0xff]
        %v1341 = vld [vmem:[%s8 + $0x68] sm:$0xff]
        %v1342 = vld [vmem:[%s8 + $0x70] sm:$0xff]
        %v1343 = vld [vmem:[%s8 + $0x78] sm:$0xff]
        %v1344 = vld [vmem:[%s8 + $0x80] sm:$0xff]
        %v1345 = vld [vmem:[%s8 + $0x88] sm:$0xff]
        %v1346 = vld [vmem:[%s8 + $0x90] sm:$0xff]
        %v1347 = vld [vmem:[%s8 + $0x98] sm:$0xff]
        %v1348 = vld [vmem:[%s8 + $0xa0] sm:$0xff]
        %v1349 = vld [vmem:[%s8 + $0xa8] sm:$0xff]
        %v1350 = vld [vmem:[%s8 + $0xb0] sm:$0xff]
        %v1351 = vld [vmem:[%s8 + $0xb8] sm:$0xff]
        %v1352 = vld [vmem:[%s8 + $0xc0] sm:$0xff]
        %v1353 = vld [vmem:[%s8 + $0xc8] sm:$0xff]
        %v1354 = vld [vmem:[%s8 + $0xd0] sm:$0xff]
        %v1355 = vld [vmem:[%s8 + $0xd8] sm:$0xff]
        %v1356 = vld [vmem:[%s8 + $0xe0] sm:$0xff]
        %v1357 = vld [vmem:[%s8 + $0xe8] sm:$0xff]
        %v1358 = vld [vmem:[%s8 + $0xf0] sm:$0xff]
        %v1359 = vld [vmem:[%s8 + $0xf8] sm:$0xff]
        %v1360 = vld [vmem:[%s8 + $0x100] sm:$0xff]
        %v1361 = vld [vmem:[%s8 + $0x108] sm:$0xff]
        %v1362 = vld [vmem:[%s8 + $0x110] sm:$0xff]
        %v1363 = vld [vmem:[%s8 + $0x118] sm:$0xff]
        %v1364 = vld [vmem:[%s8 + $0x120] sm:$0xff]
        %v1365 = vld [vmem:[%s8 + $0x128] sm:$0xff]
        %v1366 = vld [vmem:[%s8 + $0x130] sm:$0xff]
        %v1367 = vld [vmem:[%s8 + $0x138] sm:$0xff]
        %v1368 = vld [vmem:[%s8 + $0x140] sm:$0xff]
        %v1369 = vld [vmem:[%s8 + $0x148] sm:$0xff]
        %v1370 = vld [vmem:[%s8 + $0x150] sm:$0xff]
        %v1371 = vld [vmem:[%s8 + $0x158] sm:$0xff]
        %v1372 = vld [vmem:[%s8 + $0x160] sm:$0xff]
        %v1373 = vld [vmem:[%s8 + $0x168] sm:$0xff]
        %v1374 = vld [vmem:[%s8 + $0x170] sm:$0xff]
        %v1375 = vld [vmem:[%s8 + $0x178] sm:$0xff]
        %v1376 = vld [vmem:[%s8 + $0x180] sm:$0xff]
        %v1377 = vld [vmem:[%s8 + $0x188] sm:$0xff]
        %v1378 = vld [vmem:[%s8 + $0x190] sm:$0xff]
        %v1379 = vld [vmem:[%s8 + $0x198] sm:$0xff]
        %v1380 = vld [vmem:[%s8 + $0x1a0] sm:$0xff]
        %v1381 = vld [vmem:[%s8 + $0x1a8] sm:$0xff]
        %v1382 = vld [vmem:[%s8 + $0x1b0] sm:$0xff]
        %v1383 = vld [vmem:[%s8 + $0x1b8] sm:$0xff]
        %v1384 = vld [vmem:[%s8 + $0x1c0] sm:$0xff]
        %v1385 = vld [vmem:[%s8 + $0x1c8] sm:$0xff]
        %v1386 = vld [vmem:[%s8 + $0x1d0] sm:$0xff]
        %v1387 = vld [vmem:[%s8 + $0x1d8] sm:$0xff]
        %v1388 = vld [vmem:[%s8 + $0x1e0] sm:$0xff]
        %v1389 = vld [vmem:[%s8 + $0x1e8] sm:$0xff]
        %v1390 = vld [vmem:[%s8 + $0x1f0] sm:$0xff]
        %v1391 = vld [vmem:[%s8 + $0x1f8] sm:$0xff]
        %v1392 = vpack.c.bf16 %v1332, %v1328
        %v1393 = vpack.c.bf16 %v1333, %v1329
        %v1394 = vpack.c.bf16 %v1334, %v1330
        %v1395 = vpack.c.bf16 %v1335, %v1331
        %v1396 = vpack.c.bf16 %v1340, %v1336
        %v1397 = vpack.c.bf16 %v1341, %v1337
        %v1398 = vpack.c.bf16 %v1342, %v1338
        %v1399 = vpack.c.bf16 %v1343, %v1339
        %v1400 = vpack.c.bf16 %v1348, %v1344
        %v1401 = vpack.c.bf16 %v1349, %v1345
        %v1402 = vpack.c.bf16 %v1350, %v1346
        %v1403 = vpack.c.bf16 %v1351, %v1347
        %v1404 = vpack.c.bf16 %v1356, %v1352
        %v1405 = vpack.c.bf16 %v1357, %v1353
        %v1406 = vpack.c.bf16 %v1358, %v1354
        %v1407 = vpack.c.bf16 %v1359, %v1355
        %v1408 = vpack.c.bf16 %v1364, %v1360
        %v1409 = vpack.c.bf16 %v1365, %v1361
        %v1410 = vpack.c.bf16 %v1366, %v1362
        %v1411 = vpack.c.bf16 %v1367, %v1363
        %v1412 = vpack.c.bf16 %v1372, %v1368
        %v1413 = vpack.c.bf16 %v1373, %v1369
        %v1414 = vpack.c.bf16 %v1374, %v1370
        %v1415 = vpack.c.bf16 %v1375, %v1371
        %v1416 = vpack.c.bf16 %v1380, %v1376
        %v1417 = vpack.c.bf16 %v1381, %v1377
        %v1418 = vpack.c.bf16 %v1382, %v1378
        %v1419 = vpack.c.bf16 %v1383, %v1379
        %v1420 = vpack.c.bf16 %v1388, %v1384
        %v1421 = vpack.c.bf16 %v1389, %v1385
        %v1422 = vpack.c.bf16 %v1390, %v1386
        %v1423 = vpack.c.bf16 %v1391, %v1387
        %1424 = vmatprep.subr.bf16.mxu0 %v1393
        %1425 = vmatpush1.bf16.msra.mxu0 %v1392
        %1426 = vmatprep.subr.bf16.mxu0 %v1397
        %1427 = vmatpush1.bf16.msra.mxu0 %v1396
        %1428 = vmatprep.subr.bf16.mxu0 %v1401
        %1429 = vmatpush1.bf16.msra.mxu0 %v1400
        %1430 = vmatprep.subr.bf16.mxu0 %v1405
        %1431 = vmatpush1.bf16.msra.mxu0 %v1404
        %1432 = vmatprep.subr.bf16.mxu0 %v1409
        %1433 = vmatpush1.bf16.msra.mxu0 %v1408
        %1434 = vmatprep.subr.bf16.mxu0 %v1413
        %1435 = vmatpush1.bf16.msra.mxu0 %v1412
        %1436 = vmatprep.subr.bf16.mxu0 %v1417
        %1437 = vmatpush1.bf16.msra.mxu0 %v1416
        %1438 = vmatprep.subr.bf16.mxu0 %v1421
        %1439 = vmatpush1.bf16.msra.mxu0 %v1420
        %1440 = vmatprep.subr.bf16.mxu0 0
        %1441 = vmatpush1.bf16.msra.mxu0 0
        %1442 = vmatprep.subr.bf16.mxu0 0
        %1443 = vmatpush1.bf16.msra.mxu0 0
        %1444 = vmatprep.subr.bf16.mxu0 0
        %1445 = vmatpush1.bf16.msra.mxu0 0
        %1446 = vmatprep.subr.bf16.mxu0 0
        %1447 = vmatpush1.bf16.msra.mxu0 0
        %1448 = vmatprep.subr.bf16.mxu0 0
        %1449 = vmatpush1.bf16.msra.mxu0 0
        %1450 = vmatprep.subr.bf16.mxu0 0
        %1451 = vmatpush1.bf16.msra.mxu0 0
        %1452 = vmatprep.subr.bf16.mxu0 0
        %1453 = vmatpush1.bf16.msra.mxu0 0
        %1454 = vmatprep.subr.bf16.mxu0 0
        %1455 = vmatpush1.bf16.msra.mxu0 0
        %1456 = vmatprep.mubr.bf16.mxu0 0
        %1457 = vmatmul.mubr.bf16.gmra.mrb[0].mxu0 %v1327
        %v1458 = vpop.f32.mrb[0].mxu0
        %v1459 = vadd.f32 0.0, %v1458
        %v1460 = vpop.f32.mrb[0].mxu0
        %v1461 = vadd.f32 0.0, %v1460
        %v1462 = vpop.f32.mrb[0].mxu0
        %v1463 = vpop.f32.mrb[0].mxu0
        %1464 = vdwg.mxu0
        %1465 = vmatprep.subr.bf16.mxu0 %v1395
        %1466 = vmatpush1.bf16.msra.mxu0 %v1394
        %1467 = vmatprep.subr.bf16.mxu0 %v1399
        %1468 = vmatpush1.bf16.msra.mxu0 %v1398
        %1469 = vmatprep.subr.bf16.mxu0 %v1403
        %1470 = vmatpush1.bf16.msra.mxu0 %v1402
        %1471 = vmatprep.subr.bf16.mxu0 %v1407
        %1472 = vmatpush1.bf16.msra.mxu0 %v1406
        %1473 = vmatprep.subr.bf16.mxu0 %v1411
        %1474 = vmatpush1.bf16.msra.mxu0 %v1410
        %1475 = vmatprep.subr.bf16.mxu0 %v1415
        %1476 = vmatpush1.bf16.msra.mxu0 %v1414
        %1477 = vmatprep.subr.bf16.mxu0 %v1419
        %1478 = vmatpush1.bf16.msra.mxu0 %v1418
        %1479 = vmatprep.subr.bf16.mxu0 %v1423
        %1480 = vmatpush1.bf16.msra.mxu0 %v1422
        %1481 = vmatprep.subr.bf16.mxu0 0
        %1482 = vmatpush1.bf16.msra.mxu0 0
        %1483 = vmatprep.subr.bf16.mxu0 0
        %1484 = vmatpush1.bf16.msra.mxu0 0
        %1485 = vmatprep.subr.bf16.mxu0 0
        %1486 = vmatpush1.bf16.msra.mxu0 0
        %1487 = vmatprep.subr.bf16.mxu0 0
        %1488 = vmatpush1.bf16.msra.mxu0 0
        %1489 = vmatprep.subr.bf16.mxu0 0
        %1490 = vmatpush1.bf16.msra.mxu0 0
        %1491 = vmatprep.subr.bf16.mxu0 0
        %1492 = vmatpush1.bf16.msra.mxu0 0
        %1493 = vmatprep.subr.bf16.mxu0 0
        %1494 = vmatpush1.bf16.msra.mxu0 0
        %1495 = vmatprep.subr.bf16.mxu0 0
        %1496 = vmatpush1.bf16.msra.mxu0 0
        %1497 = vmatprep.mubr.bf16.mxu0 0
        %1498 = vmatmul.mubr.bf16.gmra.mrb[0].mxu0 %v1327
        %v1499 = vpop.f32.mrb[0].mxu0
        %v1500 = vadd.f32 0.0, %v1499
        %v1501 = vpop.f32.mrb[0].mxu0
        %v1502 = vadd.f32 0.0, %v1501
        %v1503 = vpop.f32.mrb[0].mxu0
        %v1504 = vpop.f32.mrb[0].mxu0
        %1505 = vdwg.mxu0
        %v1510 = vcombine.low %v1459, %v1461
        %v1511 = vcombine.low %v1500, %v1502
        %v1513 = vunpack.c.l.s4 1983009808
        %v1514 = vunpack.c.0.s8 %v1513
        %v1515 = vlaneseq
        %v1516 = vshrl.u32 %v1515, 7
        %v1517 = vsub.s32 %v1514, %v1516
        %v1518 = vrot.slane %v1510, %v1517
        %v1520 = vunpack.c.l.s4 1983009808
        %v1521 = vunpack.c.0.s8 %v1520
        %v1522 = vlaneseq
        %v1523 = vshrl.u32 %v1522, 7
        %v1524 = vsub.s32 %v1521, %v1523
        %v1525 = vrot.slane %v1511, %v1524
        %v1526 = vcombine.low %v1518, %v1525
        %1528 = vst [vmem:[%s566] sm:$0xff] %v1526
      $region64: #{ressl_forward.3} parent=55 // pred_fallthru
        _
      %s1529 = smul.u32 32, %s28
      %p1530 = scmp.lt.s32.totalorder %s27, 2
      %s1531 = scalar_select %p1530, %s27, 2
      %p1532 = scmp.lt.s32.totalorder %s1529, 63
      %s1533 = scalar_select %p1532, %s1529, 63
      %s1534 = smul.addr %s1531, 64
      %s1535 = sadd.s32 %s1533, %s1534
      %s1536 = smul.addr %s1535, 4
      %s1537 = scalar_lea.vmem %s9, %s1536
      %p1538 = scmp.lt.s32.totalorder %s27, 2
      %s1539 = scalar_select %p1538, %s27, 2
      %s1540 = smul.addr %s1539, 2
      %s1541 = scalar_lea.vmem %s10, %s1540
      %p1542 = scmp.lt.s32.totalorder %s27, 2
      %s1543 = scalar_select %p1542, %s27, 2
      %s1544 = smul.addr %s1543, 4
      %s1545 = smul.addr %s1544, 2
      %s1546 = scalar_lea.vmem %s11, %s1545
      // Predicated region
      $region65: #{ressl_forward.3} parent=55 // pred_check
        %p1547 = pneg %p286
      $region66: #{ressl_forward.3} parent=55 // pred_check_branch
        %1549 = sbr.rel (%p1547) target = $region68
      $region67: #{ressl_forward.3} parent=55 // pred_region
        %s1550 = smul.u32 32, %s28
      $region68: #{ressl_forward.3} parent=55 // pred_fallthru
        _
      // Predicated region
      $region69: #{ressl_forward.3} parent=55 // pred_check
        %p1551 = pneg %p312
      $region70: #{ressl_forward.3} parent=55 // pred_check_branch
        %1553 = sbr.rel (%p1551) target = $region72
      $region71: #{ressl_forward.3} parent=55 // pred_region
        _
      $region72: #{ressl_forward.3} parent=55 // pred_fallthru
        _
      // Predicated region
      $region73: #{ressl_forward.3} parent=55 // pred_check
        %p1554 = pneg %p338
      $region74: #{ressl_forward.3} parent=55 // pred_check_branch
        %1556 = sbr.rel (%p1554) target = $region76
      $region75: #{ressl_forward.3} parent=55 // pred_region
        _
      $region76: #{ressl_forward.3} parent=55 // pred_fallthru
        _
    $region56: #{ressl_forward.3} parent=5 // pred_fallthru
      _
    %p1557 = scmp.le.s32.totalorder 2, %s18
    // Predicated region
    $region77: #{ressl_forward.3} parent=5 // pred_check
      %p1558 = pneg %p1557
    $region78: #{ressl_forward.3} parent=5 // pred_check_branch
      %1560 = sbr.rel (%p1558) target = $region80
    $region79: #{ressl_forward.3} parent=5 // pred_region
      %s1561 = ssub.s32 %s18, 2
      // Predicated region
      $region81: #{ressl_forward.3} parent=79 // pred_check
        %p1562 = pneg %p292
      $region82: #{ressl_forward.3} parent=79 // pred_check_branch
        %1564 = sbr.rel (%p1562) target = $region84
      $region83: #{ressl_forward.3} parent=79 // pred_region
        %s1565 = smul.u32 32, %s30
        %p1566 = scmp.lt.s32.totalorder %s29, 2
        %s1567 = scalar_select %p1566, %s29, 2
        %p1568 = scmp.lt.s32.totalorder %s1565, 63
        %s1569 = scalar_select %p1568, %s1565, 63
        %s1570 = smul.addr %s1567, 64
        %s1571 = sadd.s32 %s1569, %s1570
        %s1572 = smul.addr %s1571, 4
        %s1573 = scalar_lea.vmem %s9, %s1572
      $region84: #{ressl_forward.3} parent=79 // pred_fallthru
        _
      // Predicated region
      $region85: #{ressl_forward.3} parent=79 // pred_check
        %p1574 = pneg %p318
      $region86: #{ressl_forward.3} parent=79 // pred_check_branch
        %1576 = sbr.rel (%p1574) target = $region88
      $region87: #{ressl_forward.3} parent=79 // pred_region
        %p1577 = scmp.lt.s32.totalorder %s29, 2
        %s1578 = scalar_select %p1577, %s29, 2
        %s1579 = smul.addr %s1578, 2
        %s1580 = scalar_lea.vmem %s10, %s1579
      $region88: #{ressl_forward.3} parent=79 // pred_fallthru
        _
      // Predicated region
      $region89: #{ressl_forward.3} parent=79 // pred_check
        %p1581 = pneg %p344
      $region90: #{ressl_forward.3} parent=79 // pred_check_branch
        %1583 = sbr.rel (%p1581) target = $region92
      $region91: #{ressl_forward.3} parent=79 // pred_region
        %p1584 = scmp.lt.s32.totalorder %s29, 2
        %s1585 = scalar_select %p1584, %s29, 2
        %s1586 = smul.addr %s1585, 4
        %s1587 = smul.addr %s1586, 2
        %s1588 = scalar_lea.vmem %s11, %s1587
      $region92: #{ressl_forward.3} parent=79 // pred_fallthru
        _
    $region80: #{ressl_forward.3} parent=5 // pred_fallthru
      _
  $region6: #{ressl_forward.3} parent=0 // loop_footer
    %s22 = sadd.s32 1, %s18
  $region7: #{ressl_forward.3} parent=0 // loop_footer_branch
    %17 = sbr.rel target = $region3
  $region8: #{ressl_forward.3} parent=0 // loop_exit
    _

// kernel: ressl_forward.5
$region0: #{ressl_forward.5}
  #allocation0 [shape = 'u32[]', space=smem, size = 0x4, offset = 0x4, fixed_abs, tag = 'smem constant byte address 0x4 - core index']
  #allocation1 [shape = 'u32[144,128]{1,0:T(1,128)}', space=vmem, size = 0x12000, scoped, tag = 'internal scratch']
  %s0 = inlined_call_operand.vmem [shape: bf16[3,512,128], index: 0, kind: input, shape index: {}, may-alias: {0,1,2}]
  %s1 = inlined_call_operand.vmem [shape: bf16[3,512,128], index: 1, kind: input, shape index: {}, may-alias: {0,1,2}]
  %s2 = inlined_call_operand.vmem [shape: bf16[3,512,128], index: 2, kind: input, shape index: {}, may-alias: {0,1,2}]
  %s3 = inlined_call_operand.vmem [shape: f32[2,1,9], index: 3, kind: output, shape index: {}]
  %s4 = sld [smem:[#allocation0]]
  $region45: #{ressl_forward.5} parent=0
    _
  %s6 = ssub.s32 1, %s4
  %s7 = scalar_select 0, %s6, %s4
  loop: start=0, step=1, limit=4
  $region2: #{ressl_forward.5} parent=0 // loop_pre_header
    _
  $region3: #{ressl_forward.5} parent=0 // loop_header
    %s9 = sphi 0, %s13
    %p10 = scmp.ge.s32.totalorder %s9, 4
    %s19 = sphi 0, %s21
    %s22 = sphi 0, %s19
    %s23 = sphi 0, %s22
    %s39 = sphi 0, %s23
    %s45 = sphi 0, %s47
    %s48 = sphi 0, %s45
    %s49 = sphi 0, %s48
    %s65 = sphi 0, %s49
    %s71 = sphi 0, %s73
    %s74 = sphi 0, %s71
    %s75 = sphi 0, %s74
    %s91 = sphi 0, %s75
    %s97 = sphi 0, %s99
    %s100 = sphi 0, %s97
    %s101 = sphi 0, %s100
    %s117 = sphi 0, %s101
  $region4: #{ressl_forward.5} parent=0 // loop_header_branch
    %12 = sbr.rel (%p10) target = $region8
  $region5: #{ressl_forward.5} parent=0 // loop_body
    %s14 = ssub.s32 %s9, 1
    %s15 = ssub.s32 %s9, 2
    %s16 = sadd.s32 %s9, 1
    %s17 = ssub.s32 %s9, %s16
    %p18 = scmp.eq.s32.totalorder %s17, 0
    %s20 = sadd.s32 %s19, 1
    %s21 = scalar_select %p18, %s19, %s20
    %p24 = pneg %p18
    %p25 = scmp.eq.s32.totalorder %s9, 1
    %p26 = por %p24, %p25
    %p27 = scmp.ne.s32.totalorder %s19, %s22
    %p28 = scmp.eq.s32.totalorder %s9, 0
    %p29 = por %p27, %p28
    %p30 = scmp.ne.s32.totalorder %s19, %s22
    %p31 = scmp.eq.s32.totalorder %s14, 1
    %p32 = por %p30, %p31
    %p33 = scmp.ne.s32.totalorder %s22, %s23
    %p34 = scmp.eq.s32.totalorder %s14, 0
    %p35 = por %p33, %p34
    %p36 = scmp.ne.s32.totalorder %s22, %s23
    %p37 = scmp.eq.s32.totalorder %s15, 1
    %p38 = por %p36, %p37
    %p40 = scmp.ne.s32.totalorder %s23, %s39
    %p41 = scmp.eq.s32.totalorder %s15, 0
    %p42 = por %p40, %p41
    %s43 = ssub.s32 %s9, %s16
    %p44 = scmp.eq.s32.totalorder %s43, 0
    %s46 = sadd.s32 %s45, 1
    %s47 = scalar_select %p44, %s45, %s46
    %p50 = pneg %p44
    %p51 = scmp.eq.s32.totalorder %s9, 1
    %p52 = por %p50, %p51
    %p53 = scmp.ne.s32.totalorder %s45, %s48
    %p54 = scmp.eq.s32.totalorder %s9, 0
    %p55 = por %p53, %p54
    %p56 = scmp.ne.s32.totalorder %s45, %s48
    %p57 = scmp.eq.s32.totalorder %s14, 1
    %p58 = por %p56, %p57
    %p59 = scmp.ne.s32.totalorder %s48, %s49
    %p60 = scmp.eq.s32.totalorder %s14, 0
    %p61 = por %p59, %p60
    %p62 = scmp.ne.s32.totalorder %s48, %s49
    %p63 = scmp.eq.s32.totalorder %s15, 1
    %p64 = por %p62, %p63
    %p66 = scmp.ne.s32.totalorder %s49, %s65
    %p67 = scmp.eq.s32.totalorder %s15, 0
    %p68 = por %p66, %p67
    %s69 = ssub.s32 %s9, %s16
    %p70 = scmp.eq.s32.totalorder %s69, 0
    %s72 = sadd.s32 %s71, 1
    %s73 = scalar_select %p70, %s71, %s72
    %p76 = pneg %p70
    %p77 = scmp.eq.s32.totalorder %s9, 1
    %p78 = por %p76, %p77
    %p79 = scmp.ne.s32.totalorder %s71, %s74
    %p80 = scmp.eq.s32.totalorder %s9, 0
    %p81 = por %p79, %p80
    %p82 = scmp.ne.s32.totalorder %s71, %s74
    %p83 = scmp.eq.s32.totalorder %s14, 1
    %p84 = por %p82, %p83
    %p85 = scmp.ne.s32.totalorder %s74, %s75
    %p86 = scmp.eq.s32.totalorder %s14, 0
    %p87 = por %p85, %p86
    %p88 = scmp.ne.s32.totalorder %s74, %s75
    %p89 = scmp.eq.s32.totalorder %s15, 1
    %p90 = por %p88, %p89
    %p92 = scmp.ne.s32.totalorder %s75, %s91
    %p93 = scmp.eq.s32.totalorder %s15, 0
    %p94 = por %p92, %p93
    %s95 = ssub.s32 %s9, %s16
    %p96 = scmp.eq.s32.totalorder %s95, 0
    %s98 = sadd.s32 %s97, 1
    %s99 = scalar_select %p96, %s97, %s98
    %p102 = pneg %p96
    %p103 = scmp.eq.s32.totalorder %s9, 1
    %p104 = por %p102, %p103
    %p105 = scmp.ne.s32.totalorder %s97, %s100
    %p106 = scmp.eq.s32.totalorder %s9, 0
    %p107 = por %p105, %p106
    %p108 = scmp.ne.s32.totalorder %s97, %s100
    %p109 = scmp.eq.s32.totalorder %s14, 1
    %p110 = por %p108, %p109
    %p111 = scmp.ne.s32.totalorder %s100, %s101
    %p112 = scmp.eq.s32.totalorder %s14, 0
    %p113 = por %p111, %p112
    %p114 = scmp.ne.s32.totalorder %s100, %s101
    %p115 = scmp.eq.s32.totalorder %s15, 1
    %p116 = por %p114, %p115
    %p118 = scmp.ne.s32.totalorder %s101, %s117
    %p119 = scmp.eq.s32.totalorder %s15, 0
    %p120 = por %p118, %p119
    %p121 = scmp.le.s32.totalorder 1, %s9
    %p122 = scmp.lt.s32.totalorder %s9, 3
    %p123 = pnand %p121, %p122
    %p124 = pneg %p123
    // Predicated region
    $region9: #{ressl_forward.5} parent=5 // pred_check
      _
    $region10: #{ressl_forward.5} parent=5 // pred_check_branch
      %126 = sbr.rel (%p123) target = $region12
    $region11: #{ressl_forward.5} parent=5 // pred_region
      %s127 = ssub.s32 %s9, 1
    $region12: #{ressl_forward.5} parent=5 // pred_fallthru
      _
    %p128 = scmp.lt.s32.totalorder %s9, 2
    // Predicated region
    $region13: #{ressl_forward.5} parent=5 // pred_check
      %p129 = pneg %p128
    $region14: #{ressl_forward.5} parent=5 // pred_check_branch
      %131 = sbr.rel (%p129) target = $region16
    $region15: #{ressl_forward.5} parent=5 // pred_region
      // Predicated region
      $region17: #{ressl_forward.5} parent=15 // pred_check
        %p132 = pneg %p29
      $region18: #{ressl_forward.5} parent=15 // pred_check_branch
        %134 = sbr.rel (%p132) target = $region20
      $region19: #{ressl_forward.5} parent=15 // pred_region
        %s135 = smul.u32 32, %s9
        %p136 = scmp.lt.s32.totalorder %s135, 63
        %s137 = scalar_select %p136, %s135, 63
        %s138 = smul.addr %s137, 4
        %s139 = scalar_lea.vmem %s0, %s138
        %s140 = smul.u32 32, %s9
      $region20: #{ressl_forward.5} parent=15 // pred_fallthru
        _
      // Predicated region
      $region21: #{ressl_forward.5} parent=15 // pred_check
        %p141 = pneg %p55
      $region22: #{ressl_forward.5} parent=15 // pred_check_branch
        %143 = sbr.rel (%p141) target = $region24
      $region23: #{ressl_forward.5} parent=15 // pred_region
        %s144 = smul.u32 32, %s9
        %p145 = scmp.lt.s32.totalorder %s144, 63
        %s146 = scalar_select %p145, %s144, 63
        %s147 = sadd.s32 %s146, 64
        %s148 = smul.addr %s147, 4
        %s149 = scalar_lea.vmem %s1, %s148
        %s150 = smul.u32 32, %s9
      $region24: #{ressl_forward.5} parent=15 // pred_fallthru
        _
      // Predicated region
      $region25: #{ressl_forward.5} parent=15 // pred_check
        %p151 = pneg %p81
      $region26: #{ressl_forward.5} parent=15 // pred_check_branch
        %153 = sbr.rel (%p151) target = $region28
      $region27: #{ressl_forward.5} parent=15 // pred_region
        %s154 = smul.u32 32, %s9
        %p155 = scmp.lt.s32.totalorder %s154, 63
        %s156 = scalar_select %p155, %s154, 63
        %s157 = sadd.s32 %s156, 128
        %s158 = smul.addr %s157, 4
        %s159 = scalar_lea.vmem %s2, %s158
        %s160 = smul.u32 32, %s9
      $region28: #{ressl_forward.5} parent=15 // pred_fallthru
        _
    $region16: #{ressl_forward.5} parent=5 // pred_fallthru
      _
    %p161 = scmp.le.s32.totalorder 1, %s9
    %p162 = scmp.lt.s32.totalorder %s9, 3
    %p163 = pnand %p161, %p162
    %p164 = pneg %p163
    // Predicated region
    $region29: #{ressl_forward.5} parent=5 // pred_check
      _
    $region30: #{ressl_forward.5} parent=5 // pred_check_branch
      %166 = sbr.rel (%p163) target = $region32
    $region31: #{ressl_forward.5} parent=5 // pred_region
      %s167 = ssub.s32 %s9, 1
      %s168 = smul.u32 32, %s14
      %p169 = scmp.lt.s32.totalorder %s168, 63
      %s170 = scalar_select %p169, %s168, 63
      %s171 = smul.addr %s170, 4
      %s172 = scalar_lea.vmem %s0, %s171
      %p173 = pneg %p35
      %p174 = pneg %p32
      %s175 = smul.u32 32, %s14
      %p176 = scmp.lt.s32.totalorder %s175, 63
      %s177 = scalar_select %p176, %s175, 63
      %s178 = sadd.s32 %s177, 64
      %s179 = smul.addr %s178, 4
      %s180 = scalar_lea.vmem %s1, %s179
      %p181 = pneg %p61
      %p182 = pneg %p58
      %s183 = smul.u32 32, %s14
      %p184 = scmp.lt.s32.totalorder %s183, 63
      %s185 = scalar_select %p184, %s183, 63
      %s186 = sadd.s32 %s185, 128
      %s187 = smul.addr %s186, 4
      %s188 = scalar_lea.vmem %s2, %s187
      %p189 = pneg %p87
      %p190 = pneg %p84
      %p191 = pneg %p113
      %p192 = pneg %p110
      %p193 = scmp.lt.s32.totalorder %s14, 1
      %s194 = scalar_select %p193, %s14, 1
      %s195 = scalar_lea.vmem %s3, %s194
      %s196 = smul.u32 32, %s14
      %p197 = scmp.lt.s32.totalorder %s196, 63
      %s198 = scalar_select %p197, %s196, 63
      %s199 = smul.addr %s198, 4
      %s200 = scalar_lea.vmem %s0, %s199
      %s201 = smul.u32 32, %s14
      %s202 = smul.u32 32, %s14
      %p203 = scmp.lt.s32.totalorder %s202, 63
      %s204 = scalar_select %p203, %s202, 63
      %s205 = sadd.s32 %s204, 64
      %s206 = smul.addr %s205, 4
      %s207 = scalar_lea.vmem %s1, %s206
      %s208 = smul.u32 32, %s14
      %s209 = smul.u32 32, %s14
      %p210 = scmp.lt.s32.totalorder %s209, 63
      %s211 = scalar_select %p210, %s209, 63
      %s212 = sadd.s32 %s211, 128
      %s213 = smul.addr %s212, 4
      %s214 = scalar_lea.vmem %s2, %s213
      %s215 = smul.u32 32, %s14
      %p216 = scmp.lt.s32.totalorder %s14, 1
      %s217 = scalar_select %p216, %s14, 1
      %s218 = scalar_lea.vmem %s3, %s217
      %v220 = vld [vmem:[%s200] sm:$0xf]
      %v221 = vld [vmem:[%s200 + $0x4] sm:$0xf]
      %v222 = vld [vmem:[%s200 + $0x8] sm:$0xf]
      %v223 = vld [vmem:[%s200 + $0xc] sm:$0xf]
      %v224 = vld [vmem:[%s200 + $0x10] sm:$0xf]
      %v225 = vld [vmem:[%s200 + $0x14] sm:$0xf]
      %v226 = vld [vmem:[%s200 + $0x18] sm:$0xf]
      %v227 = vld [vmem:[%s200 + $0x1c] sm:$0xf]
      %v228 = vld [vmem:[%s200 + $0x20] sm:$0xf]
      %v229 = vld [vmem:[%s200 + $0x24] sm:$0xf]
      %v230 = vld [vmem:[%s200 + $0x28] sm:$0xf]
      %v231 = vld [vmem:[%s200 + $0x2c] sm:$0xf]
      %v232 = vld [vmem:[%s200 + $0x30] sm:$0xf]
      %v233 = vld [vmem:[%s200 + $0x34] sm:$0xf]
      %v234 = vld [vmem:[%s200 + $0x38] sm:$0xf]
      %v235 = vld [vmem:[%s200 + $0x3c] sm:$0xf]
      %v236 = vld [vmem:[%s200 + $0x40] sm:$0xf]
      %v237 = vld [vmem:[%s200 + $0x44] sm:$0xf]
      %v238 = vld [vmem:[%s200 + $0x48] sm:$0xf]
      %v239 = vld [vmem:[%s200 + $0x4c] sm:$0xf]
      %v240 = vld [vmem:[%s200 + $0x50] sm:$0xf]
      %v241 = vld [vmem:[%s200 + $0x54] sm:$0xf]
      %v242 = vld [vmem:[%s200 + $0x58] sm:$0xf]
      %v243 = vld [vmem:[%s200 + $0x5c] sm:$0xf]
      %v244 = vld [vmem:[%s200 + $0x60] sm:$0xf]
      %v245 = vld [vmem:[%s200 + $0x64] sm:$0xf]
      %v246 = vld [vmem:[%s200 + $0x68] sm:$0xf]
      %v247 = vld [vmem:[%s200 + $0x6c] sm:$0xf]
      %v248 = vld [vmem:[%s200 + $0x70] sm:$0xf]
      %v249 = vld [vmem:[%s200 + $0x74] sm:$0xf]
      %v250 = vld [vmem:[%s200 + $0x78] sm:$0xf]
      %v251 = vld [vmem:[%s200 + $0x7c] sm:$0xf]
      %v252 = vld [vmem:[%s207] sm:$0xf]
      %v253 = vld [vmem:[%s207 + $0x4] sm:$0xf]
      %v254 = vld [vmem:[%s207 + $0x8] sm:$0xf]
      %v255 = vld [vmem:[%s207 + $0xc] sm:$0xf]
      %v256 = vld [vmem:[%s207 + $0x10] sm:$0xf]
      %v257 = vld [vmem:[%s207 + $0x14] sm:$0xf]
      %v258 = vld [vmem:[%s207 + $0x18] sm:$0xf]
      %v259 = vld [vmem:[%s207 + $0x1c] sm:$0xf]
      %v260 = vld [vmem:[%s207 + $0x20] sm:$0xf]
      %v261 = vld [vmem:[%s207 + $0x24] sm:$0xf]
      %v262 = vld [vmem:[%s207 + $0x28] sm:$0xf]
      %v263 = vld [vmem:[%s207 + $0x2c] sm:$0xf]
      %v264 = vld [vmem:[%s207 + $0x30] sm:$0xf]
      %v265 = vld [vmem:[%s207 + $0x34] sm:$0xf]
      %v266 = vld [vmem:[%s207 + $0x38] sm:$0xf]
      %v267 = vld [vmem:[%s207 + $0x3c] sm:$0xf]
      %v268 = vld [vmem:[%s207 + $0x40] sm:$0xf]
      %v269 = vld [vmem:[%s207 + $0x44] sm:$0xf]
      %v270 = vld [vmem:[%s207 + $0x48] sm:$0xf]
      %v271 = vld [vmem:[%s207 + $0x4c] sm:$0xf]
      %v272 = vld [vmem:[%s207 + $0x50] sm:$0xf]
      %v273 = vld [vmem:[%s207 + $0x54] sm:$0xf]
      %v274 = vld [vmem:[%s207 + $0x58] sm:$0xf]
      %v275 = vld [vmem:[%s207 + $0x5c] sm:$0xf]
      %v276 = vld [vmem:[%s207 + $0x60] sm:$0xf]
      %v277 = vld [vmem:[%s207 + $0x64] sm:$0xf]
      %v278 = vld [vmem:[%s207 + $0x68] sm:$0xf]
      %v279 = vld [vmem:[%s207 + $0x6c] sm:$0xf]
      %v280 = vld [vmem:[%s207 + $0x70] sm:$0xf]
      %v281 = vld [vmem:[%s207 + $0x74] sm:$0xf]
      %v282 = vld [vmem:[%s207 + $0x78] sm:$0xf]
      %v283 = vld [vmem:[%s207 + $0x7c] sm:$0xf]
      %v284 = vld [vmem:[%s214] sm:$0xf]
      %v285 = vld [vmem:[%s214 + $0x4] sm:$0xf]
      %v286 = vld [vmem:[%s214 + $0x8] sm:$0xf]
      %v287 = vld [vmem:[%s214 + $0xc] sm:$0xf]
      %v288 = vld [vmem:[%s214 + $0x10] sm:$0xf]
      %v289 = vld [vmem:[%s214 + $0x14] sm:$0xf]
      %v290 = vld [vmem:[%s214 + $0x18] sm:$0xf]
      %v291 = vld [vmem:[%s214 + $0x1c] sm:$0xf]
      %v292 = vld [vmem:[%s214 + $0x20] sm:$0xf]
      %v293 = vld [vmem:[%s214 + $0x24] sm:$0xf]
      %v294 = vld [vmem:[%s214 + $0x28] sm:$0xf]
      %v295 = vld [vmem:[%s214 + $0x2c] sm:$0xf]
      %v296 = vld [vmem:[%s214 + $0x30] sm:$0xf]
      %v297 = vld [vmem:[%s214 + $0x34] sm:$0xf]
      %v298 = vld [vmem:[%s214 + $0x38] sm:$0xf]
      %v299 = vld [vmem:[%s214 + $0x3c] sm:$0xf]
      %v300 = vld [vmem:[%s214 + $0x40] sm:$0xf]
      %v301 = vld [vmem:[%s214 + $0x44] sm:$0xf]
      %v302 = vld [vmem:[%s214 + $0x48] sm:$0xf]
      %v303 = vld [vmem:[%s214 + $0x4c] sm:$0xf]
      %v304 = vld [vmem:[%s214 + $0x50] sm:$0xf]
      %v305 = vld [vmem:[%s214 + $0x54] sm:$0xf]
      %v306 = vld [vmem:[%s214 + $0x58] sm:$0xf]
      %v307 = vld [vmem:[%s214 + $0x5c] sm:$0xf]
      %v308 = vld [vmem:[%s214 + $0x60] sm:$0xf]
      %v309 = vld [vmem:[%s214 + $0x64] sm:$0xf]
      %v310 = vld [vmem:[%s214 + $0x68] sm:$0xf]
      %v311 = vld [vmem:[%s214 + $0x6c] sm:$0xf]
      %v312 = vld [vmem:[%s214 + $0x70] sm:$0xf]
      %v313 = vld [vmem:[%s214 + $0x74] sm:$0xf]
      %v314 = vld [vmem:[%s214 + $0x78] sm:$0xf]
      %v315 = vld [vmem:[%s214 + $0x7c] sm:$0xf]
      %v348 = vunpack.c.l.b16 %v220
      %v349 = vunpack.c.l.b16 %v221
      %v350 = vunpack.c.l.b16 %v222
      %v351 = vunpack.c.l.b16 %v223
      %v352 = vunpack.c.l.b16 %v224
      %v353 = vunpack.c.l.b16 %v225
      %v354 = vunpack.c.l.b16 %v226
      %v355 = vunpack.c.l.b16 %v227
      %v356 = vunpack.c.l.b16 %v228
      %v357 = vunpack.c.l.b16 %v229
      %v358 = vunpack.c.l.b16 %v230
      %v359 = vunpack.c.l.b16 %v231
      %v360 = vunpack.c.l.b16 %v232
      %v361 = vunpack.c.l.b16 %v233
      %v362 = vunpack.c.l.b16 %v234
      %v363 = vunpack.c.l.b16 %v235
      %v364 = vunpack.c.l.b16 %v236
      %v365 = vunpack.c.l.b16 %v237
      %v366 = vunpack.c.l.b16 %v238
      %v367 = vunpack.c.l.b16 %v239
      %v368 = vunpack.c.l.b16 %v240
      %v369 = vunpack.c.l.b16 %v241
      %v370 = vunpack.c.l.b16 %v242
      %v371 = vunpack.c.l.b16 %v243
      %v372 = vunpack.c.l.b16 %v244
      %v373 = vunpack.c.l.b16 %v245
      %v374 = vunpack.c.l.b16 %v246
      %v375 = vunpack.c.l.b16 %v247
      %v376 = vunpack.c.l.b16 %v248
      %v377 = vunpack.c.l.b16 %v249
      %v378 = vunpack.c.l.b16 %v250
      %v379 = vunpack.c.l.b16 %v251
      %v380 = vpack.c.b16 %v349, %v348
      %v381 = vpack.c.b16 %v351, %v350
      %v382 = vpack.c.b16 %v353, %v352
      %v383 = vpack.c.b16 %v355, %v354
      %v384 = vpack.c.b16 %v357, %v356
      %v385 = vpack.c.b16 %v359, %v358
      %v386 = vpack.c.b16 %v361, %v360
      %v387 = vpack.c.b16 %v363, %v362
      %v388 = vpack.c.b16 %v365, %v364
      %v389 = vpack.c.b16 %v367, %v366
      %v390 = vpack.c.b16 %v369, %v368
      %v391 = vpack.c.b16 %v371, %v370
      %v392 = vpack.c.b16 %v373, %v372
      %v393 = vpack.c.b16 %v375, %v374
      %v394 = vpack.c.b16 %v377, %v376
      %v395 = vpack.c.b16 %v379, %v378
      %412 = vxpose.xlu0.c.b16.start [1/8] %v380, 128
      %413 = vxpose.xlu0.c.b16.cont [2/8] %v381, 128
      %414 = vxpose.xlu0.c.b16.cont [3/8] %v382, 128
      %415 = vxpose.xlu0.c.b16.cont [4/8] %v383, 128
      %416 = vxpose.xlu0.c.b16.cont [5/8] %v384, 128
      %417 = vxpose.xlu0.c.b16.cont [6/8] %v385, 128
      %418 = vxpose.xlu0.c.b16.cont [7/8] %v386, 128
      %419 = vxpose.xlu0.c.b16.end [8/8] %v387, 128
      %v420 = vpop.trf.xlu0
      %v421 = vpop.trf.xlu0
      %v422 = vpop.trf.xlu0
      %v423 = vpop.trf.xlu0
      %v424 = vpop.trf.xlu0
      %v425 = vpop.trf.xlu0
      %v426 = vpop.trf.xlu0
      %v427 = vpop.trf.xlu0
      %428 = vxpose.xlu0.c.b16.start [1/8] %v388, 128
      %429 = vxpose.xlu0.c.b16.cont [2/8] %v389, 128
      %430 = vxpose.xlu0.c.b16.cont [3/8] %v390, 128
      %431 = vxpose.xlu0.c.b16.cont [4/8] %v391, 128
      %432 = vxpose.xlu0.c.b16.cont [5/8] %v392, 128
      %433 = vxpose.xlu0.c.b16.cont [6/8] %v393, 128
      %434 = vxpose.xlu0.c.b16.cont [7/8] %v394, 128
      %435 = vxpose.xlu0.c.b16.end [8/8] %v395, 128
      %v436 = vpop.trf.xlu0
      %v437 = vpop.trf.xlu0
      %v438 = vpop.trf.xlu0
      %v439 = vpop.trf.xlu0
      %v440 = vpop.trf.xlu0
      %v441 = vpop.trf.xlu0
      %v442 = vpop.trf.xlu0
      %v443 = vpop.trf.xlu0
      %444 = vmatprep.subr.bf16.mxu0 0
      %445 = vmatpush1.bf16.msra.mxu0 %v380
      %446 = vmatprep.subr.bf16.mxu0 0
      %447 = vmatpush1.bf16.msra.mxu0 %v381
      %448 = vmatprep.subr.bf16.mxu0 0
      %449 = vmatpush1.bf16.msra.mxu0 %v382
      %450 = vmatprep.subr.bf16.mxu0 0
      %451 = vmatpush1.bf16.msra.mxu0 %v383
      %452 = vmatprep.subr.bf16.mxu0 0
      %453 = vmatpush1.bf16.msra.mxu0 %v384
      %454 = vmatprep.subr.bf16.mxu0 0
      %455 = vmatpush1.bf16.msra.mxu0 %v385
      %456 = vmatprep.subr.bf16.mxu0 0
      %457 = vmatpush1.bf16.msra.mxu0 %v386
      %458 = vmatprep.subr.bf16.mxu0 0
      %459 = vmatpush1.bf16.msra.mxu0 %v387
      %460 = vmatprep.subr.bf16.mxu0 0
      %461 = vmatpush1.bf16.msra.mxu0 %v388
      %462 = vmatprep.subr.bf16.mxu0 0
      %463 = vmatpush1.bf16.msra.mxu0 %v389
      %464 = vmatprep.subr.bf16.mxu0 0
      %465 = vmatpush1.bf16.msra.mxu0 %v390
      %466 = vmatprep.subr.bf16.mxu0 0
      %467 = vmatpush1.bf16.msra.mxu0 %v391
      %468 = vmatprep.subr.bf16.mxu0 0
      %469 = vmatpush1.bf16.msra.mxu0 %v392
      %470 = vmatprep.subr.bf16.mxu0 0
      %471 = vmatpush1.bf16.msra.mxu0 %v393
      %472 = vmatprep.subr.bf16.mxu0 0
      %473 = vmatpush1.bf16.msra.mxu0 %v394
      %474 = vmatprep.subr.bf16.mxu0 0
      %475 = vmatpush1.bf16.msra.mxu0 %v395
      %476 = vmatprep.mubr.bf16.mxu0 %v436
      %477 = vmatmul.mubr.bf16.gmra.mrb[0].mxu0 %v420
      %v478 = vpop.f32.mrb[0].mxu0
      %v479 = vadd.f32 0.0, %v478
      %v480 = vpop.f32.mrb[0].mxu0
      %v481 = vpop.f32.mrb[0].mxu0
      %v482 = vadd.f32 0.0, %v481
      %v483 = vpop.f32.mrb[0].mxu0
      %484 = vmatprep.mubr.bf16.mxu0 %v437
      %485 = vmatmul.mubr.bf16.gmra.mrb[0].mxu0 %v421
      %v486 = vpop.f32.mrb[0].mxu0
      %v487 = vadd.f32 0.0, %v486
      %v488 = vpop.f32.mrb[0].mxu0
      %v489 = vpop.f32.mrb[0].mxu0
      %v490 = vadd.f32 0.0, %v489
      %v491 = vpop.f32.mrb[0].mxu0
      %492 = vmatprep.mubr.bf16.mxu0 %v438
      %493 = vmatmul.mubr.bf16.gmra.mrb[0].mxu0 %v422
      %v494 = vpop.f32.mrb[0].mxu0
      %v495 = vadd.f32 0.0, %v494
      %v496 = vpop.f32.mrb[0].mxu0
      %v497 = vpop.f32.mrb[0].mxu0
      %v498 = vadd.f32 0.0, %v497
      %v499 = vpop.f32.mrb[0].mxu0
      %500 = vmatprep.mubr.bf16.mxu0 %v439
      %501 = vmatmul.mubr.bf16.gmra.mrb[0].mxu0 %v423
      %v502 = vpop.f32.mrb[0].mxu0
      %v503 = vadd.f32 0.0, %v502
      %v504 = vpop.f32.mrb[0].mxu0
      %v505 = vpop.f32.mrb[0].mxu0
      %v506 = vadd.f32 0.0, %v505
      %v507 = vpop.f32.mrb[0].mxu0
      %508 = vmatprep.mubr.bf16.mxu0 %v440
      %509 = vmatmul.mubr.bf16.gmra.mrb[0].mxu0 %v424
      %v510 = vpop.f32.mrb[0].mxu0
      %v511 = vadd.f32 0.0, %v510
      %v512 = vpop.f32.mrb[0].mxu0
      %v513 = vpop.f32.mrb[0].mxu0
      %v514 = vadd.f32 0.0, %v513
      %v515 = vpop.f32.mrb[0].mxu0
      %516 = vmatprep.mubr.bf16.mxu0 %v441
      %517 = vmatmul.mubr.bf16.gmra.mrb[0].mxu0 %v425
      %v518 = vpop.f32.mrb[0].mxu0
      %v519 = vadd.f32 0.0, %v518
      %v520 = vpop.f32.mrb[0].mxu0
      %v521 = vpop.f32.mrb[0].mxu0
      %v522 = vadd.f32 0.0, %v521
      %v523 = vpop.f32.mrb[0].mxu0
      %524 = vmatprep.mubr.bf16.mxu0 %v442
      %525 = vmatmul.mubr.bf16.gmra.mrb[0].mxu0 %v426
      %v526 = vpop.f32.mrb[0].mxu0
      %v527 = vadd.f32 0.0, %v526
      %v528 = vpop.f32.mrb[0].mxu0
      %v529 = vpop.f32.mrb[0].mxu0
      %v530 = vadd.f32 0.0, %v529
      %v531 = vpop.f32.mrb[0].mxu0
      %532 = vmatprep.mubr.bf16.mxu0 %v443
      %533 = vmatmul.mubr.bf16.gmra.mrb[0].mxu0 %v427
      %v534 = vpop.f32.mrb[0].mxu0
      %v535 = vadd.f32 0.0, %v534
      %v536 = vpop.f32.mrb[0].mxu0
      %v537 = vpop.f32.mrb[0].mxu0
      %v538 = vadd.f32 0.0, %v537
      %v539 = vpop.f32.mrb[0].mxu0
      %540 = vdwg.mxu0
      %v573 = vunpack.c.l.b16 %v252
      %v574 = vunpack.c.l.b16 %v253
      %v575 = vunpack.c.l.b16 %v254
      %v576 = vunpack.c.l.b16 %v255
      %v577 = vunpack.c.l.b16 %v256
      %v578 = vunpack.c.l.b16 %v257
      %v579 = vunpack.c.l.b16 %v258
      %v580 = vunpack.c.l.b16 %v259
      %v581 = vunpack.c.l.b16 %v260
      %v582 = vunpack.c.l.b16 %v261
      %v583 = vunpack.c.l.b16 %v262
      %v584 = vunpack.c.l.b16 %v263
      %v585 = vunpack.c.l.b16 %v264
      %v586 = vunpack.c.l.b16 %v265
      %v587 = vunpack.c.l.b16 %v266
      %v588 = vunpack.c.l.b16 %v267
      %v589 = vunpack.c.l.b16 %v268
      %v590 = vunpack.c.l.b16 %v269
      %v591 = vunpack.c.l.b16 %v270
      %v592 = vunpack.c.l.b16 %v271
      %v593 = vunpack.c.l.b16 %v272
      %v594 = vunpack.c.l.b16 %v273
      %v595 = vunpack.c.l.b16 %v274
      %v596 = vunpack.c.l.b16 %v275
      %v597 = vunpack.c.l.b16 %v276
      %v598 = vunpack.c.l.b16 %v277
      %v599 = vunpack.c.l.b16 %v278
      %v600 = vunpack.c.l.b16 %v279
      %v601 = vunpack.c.l.b16 %v280
      %v602 = vunpack.c.l.b16 %v281
      %v603 = vunpack.c.l.b16 %v282
      %v604 = vunpack.c.l.b16 %v283
      %v605 = vpack.c.b16 %v574, %v573
      %v606 = vpack.c.b16 %v576, %v575
      %v607 = vpack.c.b16 %v578, %v577
      %v608 = vpack.c.b16 %v580, %v579
      %v609 = vpack.c.b16 %v582, %v581
      %v610 = vpack.c.b16 %v584, %v583
      %v611 = vpack.c.b16 %v586, %v585
      %v612 = vpack.c.b16 %v588, %v587
      %v613 = vpack.c.b16 %v590, %v589
      %v614 = vpack.c.b16 %v592, %v591
      %v615 = vpack.c.b16 %v594, %v593
      %v616 = vpack.c.b16 %v596, %v595
      %v617 = vpack.c.b16 %v598, %v597
      %v618 = vpack.c.b16 %v600, %v599
      %v619 = vpack.c.b16 %v602, %v601
      %v620 = vpack.c.b16 %v604, %v603
      %637 = vxpose.xlu0.c.b16.start [1/8] %v605, 128
      %638 = vxpose.xlu0.c.b16.cont [2/8] %v606, 128
      %639 = vxpose.xlu0.c.b16.cont [3/8] %v607, 128
      %640 = vxpose.xlu0.c.b16.cont [4/8] %v608, 128
      %641 = vxpose.xlu0.c.b16.cont [5/8] %v609, 128
      %642 = vxpose.xlu0.c.b16.cont [6/8] %v610, 128
      %643 = vxpose.xlu0.c.b16.cont [7/8] %v611, 128
      %644 = vxpose.xlu0.c.b16.end [8/8] %v612, 128
      %v645 = vpop.trf.xlu0
      %v646 = vpop.trf.xlu0
      %v647 = vpop.trf.xlu0
      %v648 = vpop.trf.xlu0
      %v649 = vpop.trf.xlu0
      %v650 = vpop.trf.xlu0
      %v651 = vpop.trf.xlu0
      %v652 = vpop.trf.xlu0
      %653 = vxpose.xlu0.c.b16.start [1/8] %v613, 128
      %654 = vxpose.xlu0.c.b16.cont [2/8] %v614, 128
      %655 = vxpose.xlu0.c.b16.cont [3/8] %v615, 128
      %656 = vxpose.xlu0.c.b16.cont [4/8] %v616, 128
      %657 = vxpose.xlu0.c.b16.cont [5/8] %v617, 128
      %658 = vxpose.xlu0.c.b16.cont [6/8] %v618, 128
      %659 = vxpose.xlu0.c.b16.cont [7/8] %v619, 128
      %660 = vxpose.xlu0.c.b16.end [8/8] %v620, 128
      %v661 = vpop.trf.xlu0
      %v662 = vpop.trf.xlu0
      %v663 = vpop.trf.xlu0
      %v664 = vpop.trf.xlu0
      %v665 = vpop.trf.xlu0
      %v666 = vpop.trf.xlu0
      %v667 = vpop.trf.xlu0
      %v668 = vpop.trf.xlu0
      %669 = vmatprep.subr.bf16.mxu0 0
      %670 = vmatpush1.bf16.msra.mxu0 %v605
      %671 = vmatprep.subr.bf16.mxu0 0
      %672 = vmatpush1.bf16.msra.mxu0 %v606
      %673 = vmatprep.subr.bf16.mxu0 0
      %674 = vmatpush1.bf16.msra.mxu0 %v607
      %675 = vmatprep.subr.bf16.mxu0 0
      %676 = vmatpush1.bf16.msra.mxu0 %v608
      %677 = vmatprep.subr.bf16.mxu0 0
      %678 = vmatpush1.bf16.msra.mxu0 %v609
      %679 = vmatprep.subr.bf16.mxu0 0
      %680 = vmatpush1.bf16.msra.mxu0 %v610
      %681 = vmatprep.subr.bf16.mxu0 0
      %682 = vmatpush1.bf16.msra.mxu0 %v611
      %683 = vmatprep.subr.bf16.mxu0 0
      %684 = vmatpush1.bf16.msra.mxu0 %v612
      %685 = vmatprep.subr.bf16.mxu0 0
      %686 = vmatpush1.bf16.msra.mxu0 %v613
      %687 = vmatprep.subr.bf16.mxu0 0
      %688 = vmatpush1.bf16.msra.mxu0 %v614
      %689 = vmatprep.subr.bf16.mxu0 0
      %690 = vmatpush1.bf16.msra.mxu0 %v615
      %691 = vmatprep.subr.bf16.mxu0 0
      %692 = vmatpush1.bf16.msra.mxu0 %v616
      %693 = vmatprep.subr.bf16.mxu0 0
      %694 = vmatpush1.bf16.msra.mxu0 %v617
      %695 = vmatprep.subr.bf16.mxu0 0
      %696 = vmatpush1.bf16.msra.mxu0 %v618
      %697 = vmatprep.subr.bf16.mxu0 0
      %698 = vmatpush1.bf16.msra.mxu0 %v619
      %699 = vmatprep.subr.bf16.mxu0 0
      %700 = vmatpush1.bf16.msra.mxu0 %v620
      %701 = vmatprep.mubr.bf16.mxu0 %v661
      %702 = vmatmul.mubr.bf16.gmra.mrb[0].mxu0 %v645
      %v703 = vpop.f32.mrb[0].mxu0
      %v704 = vadd.f32 0.0, %v703
      %v705 = vpop.f32.mrb[0].mxu0
      %v706 = vpop.f32.mrb[0].mxu0
      %v707 = vadd.f32 0.0, %v706
      %v708 = vpop.f32.mrb[0].mxu0
      %709 = vmatprep.mubr.bf16.mxu0 %v662
      %710 = vmatmul.mubr.bf16.gmra.mrb[0].mxu0 %v646
      %v711 = vpop.f32.mrb[0].mxu0
      %v712 = vadd.f32 0.0, %v711
      %v713 = vpop.f32.mrb[0].mxu0
      %v714 = vpop.f32.mrb[0].mxu0
      %v715 = vadd.f32 0.0, %v714
      %v716 = vpop.f32.mrb[0].mxu0
      %717 = vmatprep.mubr.bf16.mxu0 %v663
      %718 = vmatmul.mubr.bf16.gmra.mrb[0].mxu0 %v647
      %v719 = vpop.f32.mrb[0].mxu0
      %v720 = vadd.f32 0.0, %v719
      %v721 = vpop.f32.mrb[0].mxu0
      %v722 = vpop.f32.mrb[0].mxu0
      %v723 = vadd.f32 0.0, %v722
      %v724 = vpop.f32.mrb[0].mxu0
      %725 = vmatprep.mubr.bf16.mxu0 %v664
      %726 = vmatmul.mubr.bf16.gmra.mrb[0].mxu0 %v648
      %v727 = vpop.f32.mrb[0].mxu0
      %v728 = vadd.f32 0.0, %v727
      %v729 = vpop.f32.mrb[0].mxu0
      %v730 = vpop.f32.mrb[0].mxu0
      %v731 = vadd.f32 0.0, %v730
      %v732 = vpop.f32.mrb[0].mxu0
      %733 = vmatprep.mubr.bf16.mxu0 %v665
      %734 = vmatmul.mubr.bf16.gmra.mrb[0].mxu0 %v649
      %v735 = vpop.f32.mrb[0].mxu0
      %v736 = vadd.f32 0.0, %v735
      %v737 = vpop.f32.mrb[0].mxu0
      %v738 = vpop.f32.mrb[0].mxu0
      %v739 = vadd.f32 0.0, %v738
      %v740 = vpop.f32.mrb[0].mxu0
      %741 = vmatprep.mubr.bf16.mxu0 %v666
      %742 = vmatmul.mubr.bf16.gmra.mrb[0].mxu0 %v650
      %v743 = vpop.f32.mrb[0].mxu0
      %v744 = vadd.f32 0.0, %v743
      %v745 = vpop.f32.mrb[0].mxu0
      %v746 = vpop.f32.mrb[0].mxu0
      %v747 = vadd.f32 0.0, %v746
      %v748 = vpop.f32.mrb[0].mxu0
      %749 = vmatprep.mubr.bf16.mxu0 %v667
      %750 = vmatmul.mubr.bf16.gmra.mrb[0].mxu0 %v651
      %v751 = vpop.f32.mrb[0].mxu0
      %v752 = vadd.f32 0.0, %v751
      %v753 = vpop.f32.mrb[0].mxu0
      %v754 = vpop.f32.mrb[0].mxu0
      %v755 = vadd.f32 0.0, %v754
      %v756 = vpop.f32.mrb[0].mxu0
      %757 = vmatprep.mubr.bf16.mxu0 %v668
      %758 = vmatmul.mubr.bf16.gmra.mrb[0].mxu0 %v652
      %v759 = vpop.f32.mrb[0].mxu0
      %v760 = vadd.f32 0.0, %v759
      %v761 = vpop.f32.mrb[0].mxu0
      %v762 = vpop.f32.mrb[0].mxu0
      %v763 = vadd.f32 0.0, %v762
      %v764 = vpop.f32.mrb[0].mxu0
      %765 = vdwg.mxu0
      %v798 = vunpack.c.l.b16 %v284
      %v799 = vunpack.c.l.b16 %v285
      %v800 = vunpack.c.l.b16 %v286
      %v801 = vunpack.c.l.b16 %v287
      %v802 = vunpack.c.l.b16 %v288
      %v803 = vunpack.c.l.b16 %v289
      %v804 = vunpack.c.l.b16 %v290
      %v805 = vunpack.c.l.b16 %v291
      %v806 = vunpack.c.l.b16 %v292
      %v807 = vunpack.c.l.b16 %v293
      %v808 = vunpack.c.l.b16 %v294
      %v809 = vunpack.c.l.b16 %v295
      %v810 = vunpack.c.l.b16 %v296
      %v811 = vunpack.c.l.b16 %v297
      %v812 = vunpack.c.l.b16 %v298
      %v813 = vunpack.c.l.b16 %v299
      %v814 = vunpack.c.l.b16 %v300
      %v815 = vunpack.c.l.b16 %v301
      %v816 = vunpack.c.l.b16 %v302
      %v817 = vunpack.c.l.b16 %v303
      %v818 = vunpack.c.l.b16 %v304
      %v819 = vunpack.c.l.b16 %v305
      %v820 = vunpack.c.l.b16 %v306
      %v821 = vunpack.c.l.b16 %v307
      %v822 = vunpack.c.l.b16 %v308
      %v823 = vunpack.c.l.b16 %v309
      %v824 = vunpack.c.l.b16 %v310
      %v825 = vunpack.c.l.b16 %v311
      %v826 = vunpack.c.l.b16 %v312
      %v827 = vunpack.c.l.b16 %v313
      %v828 = vunpack.c.l.b16 %v314
      %v829 = vunpack.c.l.b16 %v315
      %v830 = vpack.c.b16 %v799, %v798
      %v831 = vpack.c.b16 %v801, %v800
      %v832 = vpack.c.b16 %v803, %v802
      %v833 = vpack.c.b16 %v805, %v804
      %v834 = vpack.c.b16 %v807, %v806
      %v835 = vpack.c.b16 %v809, %v808
      %v836 = vpack.c.b16 %v811, %v810
      %v837 = vpack.c.b16 %v813, %v812
      %v838 = vpack.c.b16 %v815, %v814
      %v839 = vpack.c.b16 %v817, %v816
      %v840 = vpack.c.b16 %v819, %v818
      %v841 = vpack.c.b16 %v821, %v820
      %v842 = vpack.c.b16 %v823, %v822
      %v843 = vpack.c.b16 %v825, %v824
      %v844 = vpack.c.b16 %v827, %v826
      %v845 = vpack.c.b16 %v829, %v828
      %862 = vxpose.xlu0.c.b16.start [1/8] %v830, 128
      %863 = vxpose.xlu0.c.b16.cont [2/8] %v831, 128
      %864 = vxpose.xlu0.c.b16.cont [3/8] %v832, 128
      %865 = vxpose.xlu0.c.b16.cont [4/8] %v833, 128
      %866 = vxpose.xlu0.c.b16.cont [5/8] %v834, 128
      %867 = vxpose.xlu0.c.b16.cont [6/8] %v835, 128
      %868 = vxpose.xlu0.c.b16.cont [7/8] %v836, 128
      %869 = vxpose.xlu0.c.b16.end [8/8] %v837, 128
      %v870 = vpop.trf.xlu0
      %v871 = vpop.trf.xlu0
      %v872 = vpop.trf.xlu0
      %v873 = vpop.trf.xlu0
      %v874 = vpop.trf.xlu0
      %v875 = vpop.trf.xlu0
      %v876 = vpop.trf.xlu0
      %v877 = vpop.trf.xlu0
      %878 = vxpose.xlu0.c.b16.start [1/8] %v838, 128
      %879 = vxpose.xlu0.c.b16.cont [2/8] %v839, 128
      %880 = vxpose.xlu0.c.b16.cont [3/8] %v840, 128
      %881 = vxpose.xlu0.c.b16.cont [4/8] %v841, 128
      %882 = vxpose.xlu0.c.b16.cont [5/8] %v842, 128
      %883 = vxpose.xlu0.c.b16.cont [6/8] %v843, 128
      %884 = vxpose.xlu0.c.b16.cont [7/8] %v844, 128
      %885 = vxpose.xlu0.c.b16.end [8/8] %v845, 128
      %v886 = vpop.trf.xlu0
      %v887 = vpop.trf.xlu0
      %v888 = vpop.trf.xlu0
      %v889 = vpop.trf.xlu0
      %v890 = vpop.trf.xlu0
      %v891 = vpop.trf.xlu0
      %v892 = vpop.trf.xlu0
      %v893 = vpop.trf.xlu0
      %894 = vmatprep.subr.bf16.mxu0 0
      %895 = vmatpush1.bf16.msra.mxu0 %v830
      %896 = vmatprep.subr.bf16.mxu0 0
      %897 = vmatpush1.bf16.msra.mxu0 %v831
      %898 = vmatprep.subr.bf16.mxu0 0
      %899 = vmatpush1.bf16.msra.mxu0 %v832
      %900 = vmatprep.subr.bf16.mxu0 0
      %901 = vmatpush1.bf16.msra.mxu0 %v833
      %902 = vmatprep.subr.bf16.mxu0 0
      %903 = vmatpush1.bf16.msra.mxu0 %v834
      %904 = vmatprep.subr.bf16.mxu0 0
      %905 = vmatpush1.bf16.msra.mxu0 %v835
      %906 = vmatprep.subr.bf16.mxu0 0
      %907 = vmatpush1.bf16.msra.mxu0 %v836
      %908 = vmatprep.subr.bf16.mxu0 0
      %909 = vmatpush1.bf16.msra.mxu0 %v837
      %910 = vmatprep.subr.bf16.mxu0 0
      %911 = vmatpush1.bf16.msra.mxu0 %v838
      %912 = vmatprep.subr.bf16.mxu0 0
      %913 = vmatpush1.bf16.msra.mxu0 %v839
      %914 = vmatprep.subr.bf16.mxu0 0
      %915 = vmatpush1.bf16.msra.mxu0 %v840
      %916 = vmatprep.subr.bf16.mxu0 0
      %917 = vmatpush1.bf16.msra.mxu0 %v841
      %918 = vmatprep.subr.bf16.mxu0 0
      %919 = vmatpush1.bf16.msra.mxu0 %v842
      %920 = vmatprep.subr.bf16.mxu0 0
      %921 = vmatpush1.bf16.msra.mxu0 %v843
      %922 = vmatprep.subr.bf16.mxu0 0
      %923 = vmatpush1.bf16.msra.mxu0 %v844
      %924 = vmatprep.subr.bf16.mxu0 0
      %925 = vmatpush1.bf16.msra.mxu0 %v845
      %926 = vmatprep.mubr.bf16.mxu0 %v886
      %927 = vmatmul.mubr.bf16.gmra.mrb[0].mxu0 %v870
      %v928 = vpop.f32.mrb[0].mxu0
      %v929 = vadd.f32 0.0, %v928
      %v930 = vpop.f32.mrb[0].mxu0
      %v931 = vpop.f32.mrb[0].mxu0
      %v932 = vadd.f32 0.0, %v931
      %v933 = vpop.f32.mrb[0].mxu0
      %934 = vmatprep.mubr.bf16.mxu0 %v887
      %935 = vmatmul.mubr.bf16.gmra.mrb[0].mxu0 %v871
      %v936 = vpop.f32.mrb[0].mxu0
      %v937 = vadd.f32 0.0, %v936
      %v938 = vpop.f32.mrb[0].mxu0
      %v939 = vpop.f32.mrb[0].mxu0
      %v940 = vadd.f32 0.0, %v939
      %v941 = vpop.f32.mrb[0].mxu0
      %942 = vmatprep.mubr.bf16.mxu0 %v888
      %943 = vmatmul.mubr.bf16.gmra.mrb[0].mxu0 %v872
      %v944 = vpop.f32.mrb[0].mxu0
      %v945 = vadd.f32 0.0, %v944
      %v946 = vpop.f32.mrb[0].mxu0
      %v947 = vpop.f32.mrb[0].mxu0
      %v948 = vadd.f32 0.0, %v947
      %v949 = vpop.f32.mrb[0].mxu0
      %950 = vmatprep.mubr.bf16.mxu0 %v889
      %951 = vmatmul.mubr.bf16.gmra.mrb[0].mxu0 %v873
      %v952 = vpop.f32.mrb[0].mxu0
      %v953 = vadd.f32 0.0, %v952
      %v954 = vpop.f32.mrb[0].mxu0
      %v955 = vpop.f32.mrb[0].mxu0
      %v956 = vadd.f32 0.0, %v955
      %v957 = vpop.f32.mrb[0].mxu0
      %958 = vmatprep.mubr.bf16.mxu0 %v890
      %959 = vmatmul.mubr.bf16.gmra.mrb[0].mxu0 %v874
      %v960 = vpop.f32.mrb[0].mxu0
      %v961 = vadd.f32 0.0, %v960
      %v962 = vpop.f32.mrb[0].mxu0
      %v963 = vpop.f32.mrb[0].mxu0
      %v964 = vadd.f32 0.0, %v963
      %v965 = vpop.f32.mrb[0].mxu0
      %966 = vmatprep.mubr.bf16.mxu0 %v891
      %967 = vmatmul.mubr.bf16.gmra.mrb[0].mxu0 %v875
      %v968 = vpop.f32.mrb[0].mxu0
      %v969 = vadd.f32 0.0, %v968
      %v970 = vpop.f32.mrb[0].mxu0
      %v971 = vpop.f32.mrb[0].mxu0
      %v972 = vadd.f32 0.0, %v971
      %v973 = vpop.f32.mrb[0].mxu0
      %974 = vmatprep.mubr.bf16.mxu0 %v892
      %975 = vmatmul.mubr.bf16.gmra.mrb[0].mxu0 %v876
      %v976 = vpop.f32.mrb[0].mxu0
      %v977 = vadd.f32 0.0, %v976
      %v978 = vpop.f32.mrb[0].mxu0
      %v979 = vpop.f32.mrb[0].mxu0
      %v980 = vadd.f32 0.0, %v979
      %v981 = vpop.f32.mrb[0].mxu0
      %982 = vmatprep.mubr.bf16.mxu0 %v893
      %983 = vmatmul.mubr.bf16.gmra.mrb[0].mxu0 %v877
      %v984 = vpop.f32.mrb[0].mxu0
      %v985 = vadd.f32 0.0, %v984
      %v986 = vpop.f32.mrb[0].mxu0
      %v987 = vpop.f32.mrb[0].mxu0
      %v988 = vadd.f32 0.0, %v987
      %v989 = vpop.f32.mrb[0].mxu0
      %990 = vdwg.mxu0
      %v991 = vunpack.c.l.bf16 %v220
      %v992 = vunpack.c.l.bf16 %v221
      %v993 = vunpack.c.l.bf16 %v222
      %v994 = vunpack.c.l.bf16 %v223
      %v995 = vunpack.c.l.bf16 %v224
      %v996 = vunpack.c.l.bf16 %v225
      %v997 = vunpack.c.l.bf16 %v226
      %v998 = vunpack.c.l.bf16 %v227
      %v999 = vunpack.c.l.bf16 %v228
      %v1000 = vunpack.c.l.bf16 %v229
      %v1001 = vunpack.c.l.bf16 %v230
      %v1002 = vunpack.c.l.bf16 %v231
      %v1003 = vunpack.c.l.bf16 %v232
      %v1004 = vunpack.c.l.bf16 %v233
      %v1005 = vunpack.c.l.bf16 %v234
      %v1006 = vunpack.c.l.bf16 %v235
      %v1007 = vunpack.c.l.bf16 %v236
      %v1008 = vunpack.c.l.bf16 %v237
      %v1009 = vunpack.c.l.bf16 %v238
      %v1010 = vunpack.c.l.bf16 %v239
      %v1011 = vunpack.c.l.bf16 %v240
      %v1012 = vunpack.c.l.bf16 %v241
      %v1013 = vunpack.c.l.bf16 %v242
      %v1014 = vunpack.c.l.bf16 %v243
      %v1015 = vunpack.c.l.bf16 %v244
      %v1016 = vunpack.c.l.bf16 %v245
      %v1017 = vunpack.c.l.bf16 %v246
      %v1018 = vunpack.c.l.bf16 %v247
      %v1019 = vunpack.c.l.bf16 %v248
      %v1020 = vunpack.c.l.bf16 %v249
      %v1021 = vunpack.c.l.bf16 %v250
      %v1022 = vunpack.c.l.bf16 %v251
      %v1023 = vunpack.c.l.bf16 %v252
      %v1024 = vunpack.c.l.bf16 %v253
      %v1025 = vunpack.c.l.bf16 %v254
      %v1026 = vunpack.c.l.bf16 %v255
      %v1027 = vunpack.c.l.bf16 %v256
      %v1028 = vunpack.c.l.bf16 %v257
      %v1029 = vunpack.c.l.bf16 %v258
      %v1030 = vunpack.c.l.bf16 %v259
      %v1031 = vunpack.c.l.bf16 %v260
      %v1032 = vunpack.c.l.bf16 %v261
      %v1033 = vunpack.c.l.bf16 %v262
      %v1034 = vunpack.c.l.bf16 %v263
      %v1035 = vunpack.c.l.bf16 %v264
      %v1036 = vunpack.c.l.bf16 %v265
      %v1037 = vunpack.c.l.bf16 %v266
      %v1038 = vunpack.c.l.bf16 %v267
      %v1039 = vunpack.c.l.bf16 %v268
      %v1040 = vunpack.c.l.bf16 %v269
      %v1041 = vunpack.c.l.bf16 %v270
      %v1042 = vunpack.c.l.bf16 %v271
      %v1043 = vunpack.c.l.bf16 %v272
      %v1044 = vunpack.c.l.bf16 %v273
      %v1045 = vunpack.c.l.bf16 %v274
      %v1046 = vunpack.c.l.bf16 %v275
      %v1047 = vunpack.c.l.bf16 %v276
      %v1048 = vunpack.c.l.bf16 %v277
      %v1049 = vunpack.c.l.bf16 %v278
      %v1050 = vunpack.c.l.bf16 %v279
      %v1051 = vunpack.c.l.bf16 %v280
      %v1052 = vunpack.c.l.bf16 %v281
      %v1053 = vunpack.c.l.bf16 %v282
      %v1054 = vunpack.c.l.bf16 %v283
      %v1055 = vadd.f32 %v991, %v1023
      %v1056 = vadd.f32 %v992, %v1024
      %v1057 = vadd.f32 %v993, %v1025
      %v1058 = vadd.f32 %v994, %v1026
      %v1059 = vadd.f32 %v995, %v1027
      %v1060 = vadd.f32 %v996, %v1028
      %v1061 = vadd.f32 %v997, %v1029
      %v1062 = vadd.f32 %v998, %v1030
      %v1063 = vadd.f32 %v999, %v1031
      %v1064 = vadd.f32 %v1000, %v1032
      %v1065 = vadd.f32 %v1001, %v1033
      %v1066 = vadd.f32 %v1002, %v1034
      %v1067 = vadd.f32 %v1003, %v1035
      %v1068 = vadd.f32 %v1004, %v1036
      %v1069 = vadd.f32 %v1005, %v1037
      %v1070 = vadd.f32 %v1006, %v1038
      %v1071 = vadd.f32 %v1007, %v1039
      %v1072 = vadd.f32 %v1008, %v1040
      %v1073 = vadd.f32 %v1009, %v1041
      %v1074 = vadd.f32 %v1010, %v1042
      %v1075 = vadd.f32 %v1011, %v1043
      %v1076 = vadd.f32 %v1012, %v1044
      %v1077 = vadd.f32 %v1013, %v1045
      %v1078 = vadd.f32 %v1014, %v1046
      %v1079 = vadd.f32 %v1015, %v1047
      %v1080 = vadd.f32 %v1016, %v1048
      %v1081 = vadd.f32 %v1017, %v1049
      %v1082 = vadd.f32 %v1018, %v1050
      %v1083 = vadd.f32 %v1019, %v1051
      %v1084 = vadd.f32 %v1020, %v1052
      %v1085 = vadd.f32 %v1021, %v1053
      %v1086 = vadd.f32 %v1022, %v1054
      %v1087 = vmul.f32 %v1055, 0.5
      %v1088 = vmul.f32 %v1056, 0.5
      %v1089 = vmul.f32 %v1057, 0.5
      %v1090 = vmul.f32 %v1058, 0.5
      %v1091 = vmul.f32 %v1059, 0.5
      %v1092 = vmul.f32 %v1060, 0.5
      %v1093 = vmul.f32 %v1061, 0.5
      %v1094 = vmul.f32 %v1062, 0.5
      %v1095 = vmul.f32 %v1063, 0.5
      %v1096 = vmul.f32 %v1064, 0.5
      %v1097 = vmul.f32 %v1065, 0.5
      %v1098 = vmul.f32 %v1066, 0.5
      %v1099 = vmul.f32 %v1067, 0.5
      %v1100 = vmul.f32 %v1068, 0.5
      %v1101 = vmul.f32 %v1069, 0.5
      %v1102 = vmul.f32 %v1070, 0.5
      %v1103 = vmul.f32 %v1071, 0.5
      %v1104 = vmul.f32 %v1072, 0.5
      %v1105 = vmul.f32 %v1073, 0.5
      %v1106 = vmul.f32 %v1074, 0.5
      %v1107 = vmul.f32 %v1075, 0.5
      %v1108 = vmul.f32 %v1076, 0.5
      %v1109 = vmul.f32 %v1077, 0.5
      %v1110 = vmul.f32 %v1078, 0.5
      %v1111 = vmul.f32 %v1079, 0.5
      %v1112 = vmul.f32 %v1080, 0.5
      %v1113 = vmul.f32 %v1081, 0.5
      %v1114 = vmul.f32 %v1082, 0.5
      %v1115 = vmul.f32 %v1083, 0.5
      %v1116 = vmul.f32 %v1084, 0.5
      %v1117 = vmul.f32 %v1085, 0.5
      %v1118 = vmul.f32 %v1086, 0.5
      %v1119 = vpack.c.bf16 %v1088, %v1087
      %v1120 = vpack.c.bf16 %v1090, %v1089
      %v1121 = vpack.c.bf16 %v1092, %v1091
      %v1122 = vpack.c.bf16 %v1094, %v1093
      %v1123 = vpack.c.bf16 %v1096, %v1095
      %v1124 = vpack.c.bf16 %v1098, %v1097
      %v1125 = vpack.c.bf16 %v1100, %v1099
      %v1126 = vpack.c.bf16 %v1102, %v1101
      %v1127 = vpack.c.bf16 %v1104, %v1103
      %v1128 = vpack.c.bf16 %v1106, %v1105
      %v1129 = vpack.c.bf16 %v1108, %v1107
      %v1130 = vpack.c.bf16 %v1110, %v1109
      %v1131 = vpack.c.bf16 %v1112, %v1111
      %v1132 = vpack.c.bf16 %v1114, %v1113
      %v1133 = vpack.c.bf16 %v1116, %v1115
      %v1134 = vpack.c.bf16 %v1118, %v1117
      %v1135 = vunpack.c.l.bf16 %v284
      %v1136 = vunpack.c.l.bf16 %v285
      %v1137 = vunpack.c.l.bf16 %v286
      %v1138 = vunpack.c.l.bf16 %v287
      %v1139 = vunpack.c.l.bf16 %v288
      %v1140 = vunpack.c.l.bf16 %v289
      %v1141 = vunpack.c.l.bf16 %v290
      %v1142 = vunpack.c.l.bf16 %v291
      %v1143 = vunpack.c.l.bf16 %v292
      %v1144 = vunpack.c.l.bf16 %v293
      %v1145 = vunpack.c.l.bf16 %v294
      %v1146 = vunpack.c.l.bf16 %v295
      %v1147 = vunpack.c.l.bf16 %v296
      %v1148 = vunpack.c.l.bf16 %v297
      %v1149 = vunpack.c.l.bf16 %v298
      %v1150 = vunpack.c.l.bf16 %v299
      %v1151 = vunpack.c.l.bf16 %v300
      %v1152 = vunpack.c.l.bf16 %v301
      %v1153 = vunpack.c.l.bf16 %v302
      %v1154 = vunpack.c.l.bf16 %v303
      %v1155 = vunpack.c.l.bf16 %v304
      %v1156 = vunpack.c.l.bf16 %v305
      %v1157 = vunpack.c.l.bf16 %v306
      %v1158 = vunpack.c.l.bf16 %v307
      %v1159 = vunpack.c.l.bf16 %v308
      %v1160 = vunpack.c.l.bf16 %v309
      %v1161 = vunpack.c.l.bf16 %v310
      %v1162 = vunpack.c.l.bf16 %v311
      %v1163 = vunpack.c.l.bf16 %v312
      %v1164 = vunpack.c.l.bf16 %v313
      %v1165 = vunpack.c.l.bf16 %v314
      %v1166 = vunpack.c.l.bf16 %v315
      %v1167 = vadd.f32 %v991, %v1135
      %v1168 = vadd.f32 %v992, %v1136
      %v1169 = vadd.f32 %v993, %v1137
      %v1170 = vadd.f32 %v994, %v1138
      %v1171 = vadd.f32 %v995, %v1139
      %v1172 = vadd.f32 %v996, %v1140
      %v1173 = vadd.f32 %v997, %v1141
      %v1174 = vadd.f32 %v998, %v1142
      %v1175 = vadd.f32 %v999, %v1143
      %v1176 = vadd.f32 %v1000, %v1144
      %v1177 = vadd.f32 %v1001, %v1145
      %v1178 = vadd.f32 %v1002, %v1146
      %v1179 = vadd.f32 %v1003, %v1147
      %v1180 = vadd.f32 %v1004, %v1148
      %v1181 = vadd.f32 %v1005, %v1149
      %v1182 = vadd.f32 %v1006, %v1150
      %v1183 = vadd.f32 %v1007, %v1151
      %v1184 = vadd.f32 %v1008, %v1152
      %v1185 = vadd.f32 %v1009, %v1153
      %v1186 = vadd.f32 %v1010, %v1154
      %v1187 = vadd.f32 %v1011, %v1155
      %v1188 = vadd.f32 %v1012, %v1156
      %v1189 = vadd.f32 %v1013, %v1157
      %v1190 = vadd.f32 %v1014, %v1158
      %v1191 = vadd.f32 %v1015, %v1159
      %v1192 = vadd.f32 %v1016, %v1160
      %v1193 = vadd.f32 %v1017, %v1161
      %v1194 = vadd.f32 %v1018, %v1162
      %v1195 = vadd.f32 %v1019, %v1163
      %v1196 = vadd.f32 %v1020, %v1164
      %v1197 = vadd.f32 %v1021, %v1165
      %v1198 = vadd.f32 %v1022, %v1166
      %v1199 = vmul.f32 %v1167, 0.5
      %v1200 = vmul.f32 %v1168, 0.5
      %v1201 = vmul.f32 %v1169, 0.5
      %v1202 = vmul.f32 %v1170, 0.5
      %v1203 = vmul.f32 %v1171, 0.5
      %v1204 = vmul.f32 %v1172, 0.5
      %v1205 = vmul.f32 %v1173, 0.5
      %v1206 = vmul.f32 %v1174, 0.5
      %v1207 = vmul.f32 %v1175, 0.5
      %v1208 = vmul.f32 %v1176, 0.5
      %v1209 = vmul.f32 %v1177, 0.5
      %v1210 = vmul.f32 %v1178, 0.5
      %v1211 = vmul.f32 %v1179, 0.5
      %v1212 = vmul.f32 %v1180, 0.5
      %v1213 = vmul.f32 %v1181, 0.5
      %v1214 = vmul.f32 %v1182, 0.5
      %v1215 = vmul.f32 %v1183, 0.5
      %v1216 = vmul.f32 %v1184, 0.5
      %v1217 = vmul.f32 %v1185, 0.5
      %v1218 = vmul.f32 %v1186, 0.5
      %v1219 = vmul.f32 %v1187, 0.5
      %v1220 = vmul.f32 %v1188, 0.5
      %v1221 = vmul.f32 %v1189, 0.5
      %v1222 = vmul.f32 %v1190, 0.5
      %v1223 = vmul.f32 %v1191, 0.5
      %v1224 = vmul.f32 %v1192, 0.5
      %v1225 = vmul.f32 %v1193, 0.5
      %v1226 = vmul.f32 %v1194, 0.5
      %v1227 = vmul.f32 %v1195, 0.5
      %v1228 = vmul.f32 %v1196, 0.5
      %v1229 = vmul.f32 %v1197, 0.5
      %v1230 = vmul.f32 %v1198, 0.5
      %v1231 = vpack.c.bf16 %v1200, %v1199
      %v1232 = vpack.c.bf16 %v1202, %v1201
      %v1233 = vpack.c.bf16 %v1204, %v1203
      %v1234 = vpack.c.bf16 %v1206, %v1205
      %v1235 = vpack.c.bf16 %v1208, %v1207
      %v1236 = vpack.c.bf16 %v1210, %v1209
      %v1237 = vpack.c.bf16 %v1212, %v1211
      %v1238 = vpack.c.bf16 %v1214, %v1213
      %v1239 = vpack.c.bf16 %v1216, %v1215
      %v1240 = vpack.c.bf16 %v1218, %v1217
      %v1241 = vpack.c.bf16 %v1220, %v1219
      %v1242 = vpack.c.bf16 %v1222, %v1221
      %v1243 = vpack.c.bf16 %v1224, %v1223
      %v1244 = vpack.c.bf16 %v1226, %v1225
      %v1245 = vpack.c.bf16 %v1228, %v1227
      %v1246 = vpack.c.bf16 %v1230, %v1229
      %1247 = vxpose.xlu0.c.b16.start [1/8] %v1119, 128
      %1248 = vxpose.xlu0.c.b16.cont [2/8] %v1120, 128
      %1249 = vxpose.xlu0.c.b16.cont [3/8] %v1121, 128
      %1250 = vxpose.xlu0.c.b16.cont [4/8] %v1122, 128
      %1251 = vxpose.xlu0.c.b16.cont [5/8] %v1123, 128
      %1252 = vxpose.xlu0.c.b16.cont [6/8] %v1124, 128
      %1253 = vxpose.xlu0.c.b16.cont [7/8] %v1125, 128
      %1254 = vxpose.xlu0.c.b16.end [8/8] %v1126, 128
      %v1255 = vpop.trf.xlu0
      %v1256 = vpop.trf.xlu0
      %v1257 = vpop.trf.xlu0
      %v1258 = vpop.trf.xlu0
      %v1259 = vpop.trf.xlu0
      %v1260 = vpop.trf.xlu0
      %v1261 = vpop.trf.xlu0
      %v1262 = vpop.trf.xlu0
      %1263 = vxpose.xlu0.c.b16.start [1/8] %v1127, 128
      %1264 = vxpose.xlu0.c.b16.cont [2/8] %v1128, 128
      %1265 = vxpose.xlu0.c.b16.cont [3/8] %v1129, 128
      %1266 = vxpose.xlu0.c.b16.cont [4/8] %v1130, 128
      %1267 = vxpose.xlu0.c.b16.cont [5/8] %v1131, 128
      %1268 = vxpose.xlu0.c.b16.cont [6/8] %v1132, 128
      %1269 = vxpose.xlu0.c.b16.cont [7/8] %v1133, 128
      %1270 = vxpose.xlu0.c.b16.end [8/8] %v1134, 128
      %v1271 = vpop.trf.xlu0
      %v1272 = vpop.trf.xlu0
      %v1273 = vpop.trf.xlu0
      %v1274 = vpop.trf.xlu0
      %v1275 = vpop.trf.xlu0
      %v1276 = vpop.trf.xlu0
      %v1277 = vpop.trf.xlu0
      %v1278 = vpop.trf.xlu0
      %1279 = vmatprep.subr.bf16.mxu0 0
      %1280 = vmatpush1.bf16.msra.mxu0 %v1119
      %1281 = vmatprep.subr.bf16.mxu0 0
      %1282 = vmatpush1.bf16.msra.mxu0 %v1120
      %1283 = vmatprep.subr.bf16.mxu0 0
      %1284 = vmatpush1.bf16.msra.mxu0 %v1121
      %1285 = vmatprep.subr.bf16.mxu0 0
      %1286 = vmatpush1.bf16.msra.mxu0 %v1122
      %1287 = vmatprep.subr.bf16.mxu0 0
      %1288 = vmatpush1.bf16.msra.mxu0 %v1123
      %1289 = vmatprep.subr.bf16.mxu0 0
      %1290 = vmatpush1.bf16.msra.mxu0 %v1124
      %1291 = vmatprep.subr.bf16.mxu0 0
      %1292 = vmatpush1.bf16.msra.mxu0 %v1125
      %1293 = vmatprep.subr.bf16.mxu0 0
      %1294 = vmatpush1.bf16.msra.mxu0 %v1126
      %1295 = vmatprep.subr.bf16.mxu0 0
      %1296 = vmatpush1.bf16.msra.mxu0 %v1127
      %1297 = vmatprep.subr.bf16.mxu0 0
      %1298 = vmatpush1.bf16.msra.mxu0 %v1128
      %1299 = vmatprep.subr.bf16.mxu0 0
      %1300 = vmatpush1.bf16.msra.mxu0 %v1129
      %1301 = vmatprep.subr.bf16.mxu0 0
      %1302 = vmatpush1.bf16.msra.mxu0 %v1130
      %1303 = vmatprep.subr.bf16.mxu0 0
      %1304 = vmatpush1.bf16.msra.mxu0 %v1131
      %1305 = vmatprep.subr.bf16.mxu0 0
      %1306 = vmatpush1.bf16.msra.mxu0 %v1132
      %1307 = vmatprep.subr.bf16.mxu0 0
      %1308 = vmatpush1.bf16.msra.mxu0 %v1133
      %1309 = vmatprep.subr.bf16.mxu0 0
      %1310 = vmatpush1.bf16.msra.mxu0 %v1134
      %1311 = vmatprep.mubr.bf16.mxu0 %v1271
      %1312 = vmatmul.mubr.bf16.gmra.mrb[0].mxu0 %v1255
      %v1313 = vpop.f32.mrb[0].mxu0
      %v1314 = vadd.f32 0.0, %v1313
      %v1315 = vpop.f32.mrb[0].mxu0
      %v1316 = vpop.f32.mrb[0].mxu0
      %v1317 = vadd.f32 0.0, %v1316
      %v1318 = vpop.f32.mrb[0].mxu0
      %1319 = vmatprep.mubr.bf16.mxu0 %v1272
      %1320 = vmatmul.mubr.bf16.gmra.mrb[0].mxu0 %v1256
      %v1321 = vpop.f32.mrb[0].mxu0
      %v1322 = vadd.f32 0.0, %v1321
      %v1323 = vpop.f32.mrb[0].mxu0
      %v1324 = vpop.f32.mrb[0].mxu0
      %v1325 = vadd.f32 0.0, %v1324
      %v1326 = vpop.f32.mrb[0].mxu0
      %1327 = vmatprep.mubr.bf16.mxu0 %v1273
      %1328 = vmatmul.mubr.bf16.gmra.mrb[0].mxu0 %v1257
      %v1329 = vpop.f32.mrb[0].mxu0
      %v1330 = vadd.f32 0.0, %v1329
      %v1331 = vpop.f32.mrb[0].mxu0
      %v1332 = vpop.f32.mrb[0].mxu0
      %v1333 = vadd.f32 0.0, %v1332
      %v1334 = vpop.f32.mrb[0].mxu0
      %1335 = vmatprep.mubr.bf16.mxu0 %v1274
      %1336 = vmatmul.mubr.bf16.gmra.mrb[0].mxu0 %v1258
      %v1337 = vpop.f32.mrb[0].mxu0
      %v1338 = vadd.f32 0.0, %v1337
      %v1339 = vpop.f32.mrb[0].mxu0
      %v1340 = vpop.f32.mrb[0].mxu0
      %v1341 = vadd.f32 0.0, %v1340
      %v1342 = vpop.f32.mrb[0].mxu0
      %1343 = vmatprep.mubr.bf16.mxu0 %v1275
      %1344 = vmatmul.mubr.bf16.gmra.mrb[0].mxu0 %v1259
      %v1345 = vpop.f32.mrb[0].mxu0
      %v1346 = vadd.f32 0.0, %v1345
      %v1347 = vpop.f32.mrb[0].mxu0
      %v1348 = vpop.f32.mrb[0].mxu0
      %v1349 = vadd.f32 0.0, %v1348
      %v1350 = vpop.f32.mrb[0].mxu0
      %1351 = vmatprep.mubr.bf16.mxu0 %v1276
      %1352 = vmatmul.mubr.bf16.gmra.mrb[0].mxu0 %v1260
      %v1353 = vpop.f32.mrb[0].mxu0
      %v1354 = vadd.f32 0.0, %v1353
      %v1355 = vpop.f32.mrb[0].mxu0
      %v1356 = vpop.f32.mrb[0].mxu0
      %v1357 = vadd.f32 0.0, %v1356
      %v1358 = vpop.f32.mrb[0].mxu0
      %1359 = vmatprep.mubr.bf16.mxu0 %v1277
      %1360 = vmatmul.mubr.bf16.gmra.mrb[0].mxu0 %v1261
      %v1361 = vpop.f32.mrb[0].mxu0
      %v1362 = vadd.f32 0.0, %v1361
      %v1363 = vpop.f32.mrb[0].mxu0
      %v1364 = vpop.f32.mrb[0].mxu0
      %v1365 = vadd.f32 0.0, %v1364
      %v1366 = vpop.f32.mrb[0].mxu0
      %1367 = vmatprep.mubr.bf16.mxu0 %v1278
      %1368 = vmatmul.mubr.bf16.gmra.mrb[0].mxu0 %v1262
      %v1369 = vpop.f32.mrb[0].mxu0
      %v1370 = vadd.f32 0.0, %v1369
      %v1371 = vpop.f32.mrb[0].mxu0
      %v1372 = vpop.f32.mrb[0].mxu0
      %v1373 = vadd.f32 0.0, %v1372
      %v1374 = vpop.f32.mrb[0].mxu0
      %1375 = vdwg.mxu0
      %1376 = vxpose.xlu0.c.b16.start [1/8] %v1231, 128
      %1377 = vxpose.xlu0.c.b16.cont [2/8] %v1232, 128
      %1378 = vxpose.xlu0.c.b16.cont [3/8] %v1233, 128
      %1379 = vxpose.xlu0.c.b16.cont [4/8] %v1234, 128
      %1380 = vxpose.xlu0.c.b16.cont [5/8] %v1235, 128
      %1381 = vxpose.xlu0.c.b16.cont [6/8] %v1236, 128
      %1382 = vxpose.xlu0.c.b16.cont [7/8] %v1237, 128
      %1383 = vxpose.xlu0.c.b16.end [8/8] %v1238, 128
      %v1384 = vpop.trf.xlu0
      %v1385 = vpop.trf.xlu0
      %v1386 = vpop.trf.xlu0
      %v1387 = vpop.trf.xlu0
      %v1388 = vpop.trf.xlu0
      %v1389 = vpop.trf.xlu0
      %v1390 = vpop.trf.xlu0
      %v1391 = vpop.trf.xlu0
      %1392 = vxpose.xlu0.c.b16.start [1/8] %v1239, 128
      %1393 = vxpose.xlu0.c.b16.cont [2/8] %v1240, 128
      %1394 = vxpose.xlu0.c.b16.cont [3/8] %v1241, 128
      %1395 = vxpose.xlu0.c.b16.cont [4/8] %v1242, 128
      %1396 = vxpose.xlu0.c.b16.cont [5/8] %v1243, 128
      %1397 = vxpose.xlu0.c.b16.cont [6/8] %v1244, 128
      %1398 = vxpose.xlu0.c.b16.cont [7/8] %v1245, 128
      %1399 = vxpose.xlu0.c.b16.end [8/8] %v1246, 128
      %v1400 = vpop.trf.xlu0
      %v1401 = vpop.trf.xlu0
      %v1402 = vpop.trf.xlu0
      %v1403 = vpop.trf.xlu0
      %v1404 = vpop.trf.xlu0
      %v1405 = vpop.trf.xlu0
      %v1406 = vpop.trf.xlu0
      %v1407 = vpop.trf.xlu0
      %1408 = vmatprep.subr.bf16.mxu0 0
      %1409 = vmatpush1.bf16.msra.mxu0 %v1231
      %1410 = vmatprep.subr.bf16.mxu0 0
      %1411 = vmatpush1.bf16.msra.mxu0 %v1232
      %1412 = vmatprep.subr.bf16.mxu0 0
      %1413 = vmatpush1.bf16.msra.mxu0 %v1233
      %1414 = vmatprep.subr.bf16.mxu0 0
      %1415 = vmatpush1.bf16.msra.mxu0 %v1234
      %1416 = vmatprep.subr.bf16.mxu0 0
      %1417 = vmatpush1.bf16.msra.mxu0 %v1235
      %1418 = vmatprep.subr.bf16.mxu0 0
      %1419 = vmatpush1.bf16.msra.mxu0 %v1236
      %1420 = vmatprep.subr.bf16.mxu0 0
      %1421 = vmatpush1.bf16.msra.mxu0 %v1237
      %1422 = vmatprep.subr.bf16.mxu0 0
      %1423 = vmatpush1.bf16.msra.mxu0 %v1238
      %1424 = vmatprep.subr.bf16.mxu0 0
      %1425 = vmatpush1.bf16.msra.mxu0 %v1239
      %1426 = vmatprep.subr.bf16.mxu0 0
      %1427 = vmatpush1.bf16.msra.mxu0 %v1240
      %1428 = vmatprep.subr.bf16.mxu0 0
      %1429 = vmatpush1.bf16.msra.mxu0 %v1241
      %1430 = vmatprep.subr.bf16.mxu0 0
      %1431 = vmatpush1.bf16.msra.mxu0 %v1242
      %1432 = vmatprep.subr.bf16.mxu0 0
      %1433 = vmatpush1.bf16.msra.mxu0 %v1243
      %1434 = vmatprep.subr.bf16.mxu0 0
      %1435 = vmatpush1.bf16.msra.mxu0 %v1244
      %1436 = vmatprep.subr.bf16.mxu0 0
      %1437 = vmatpush1.bf16.msra.mxu0 %v1245
      %1438 = vmatprep.subr.bf16.mxu0 0
      %1439 = vmatpush1.bf16.msra.mxu0 %v1246
      %1440 = vmatprep.mubr.bf16.mxu0 %v1400
      %1441 = vmatmul.mubr.bf16.gmra.mrb[0].mxu0 %v1384
      %v1442 = vpop.f32.mrb[0].mxu0
      %v1443 = vadd.f32 0.0, %v1442
      %v1444 = vpop.f32.mrb[0].mxu0
      %v1445 = vpop.f32.mrb[0].mxu0
      %v1446 = vadd.f32 0.0, %v1445
      %v1447 = vpop.f32.mrb[0].mxu0
      %1448 = vmatprep.mubr.bf16.mxu0 %v1401
      %1449 = vmatmul.mubr.bf16.gmra.mrb[0].mxu0 %v1385
      %v1450 = vpop.f32.mrb[0].mxu0
      %v1451 = vadd.f32 0.0, %v1450
      %v1452 = vpop.f32.mrb[0].mxu0
      %v1453 = vpop.f32.mrb[0].mxu0
      %v1454 = vadd.f32 0.0, %v1453
      %v1455 = vpop.f32.mrb[0].mxu0
      %1456 = vmatprep.mubr.bf16.mxu0 %v1402
      %1457 = vmatmul.mubr.bf16.gmra.mrb[0].mxu0 %v1386
      %v1458 = vpop.f32.mrb[0].mxu0
      %v1459 = vadd.f32 0.0, %v1458
      %v1460 = vpop.f32.mrb[0].mxu0
      %v1461 = vpop.f32.mrb[0].mxu0
      %v1462 = vadd.f32 0.0, %v1461
      %v1463 = vpop.f32.mrb[0].mxu0
      %1464 = vmatprep.mubr.bf16.mxu0 %v1403
      %1465 = vmatmul.mubr.bf16.gmra.mrb[0].mxu0 %v1387
      %v1466 = vpop.f32.mrb[0].mxu0
      %v1467 = vadd.f32 0.0, %v1466
      %v1468 = vpop.f32.mrb[0].mxu0
      %v1469 = vpop.f32.mrb[0].mxu0
      %v1470 = vadd.f32 0.0, %v1469
      %v1471 = vpop.f32.mrb[0].mxu0
      %1472 = vmatprep.mubr.bf16.mxu0 %v1404
      %1473 = vmatmul.mubr.bf16.gmra.mrb[0].mxu0 %v1388
      %v1474 = vpop.f32.mrb[0].mxu0
      %v1475 = vadd.f32 0.0, %v1474
      %v1476 = vpop.f32.mrb[0].mxu0
      %v1477 = vpop.f32.mrb[0].mxu0
      %v1478 = vadd.f32 0.0, %v1477
      %v1479 = vpop.f32.mrb[0].mxu0
      %1480 = vmatprep.mubr.bf16.mxu0 %v1405
      %1481 = vmatmul.mubr.bf16.gmra.mrb[0].mxu0 %v1389
      %v1482 = vpop.f32.mrb[0].mxu0
      %v1483 = vadd.f32 0.0, %v1482
      %v1484 = vpop.f32.mrb[0].mxu0
      %v1485 = vpop.f32.mrb[0].mxu0
      %v1486 = vadd.f32 0.0, %v1485
      %v1487 = vpop.f32.mrb[0].mxu0
      %1488 = vmatprep.mubr.bf16.mxu0 %v1406
      %1489 = vmatmul.mubr.bf16.gmra.mrb[0].mxu0 %v1390
      %v1490 = vpop.f32.mrb[0].mxu0
      %v1491 = vadd.f32 0.0, %v1490
      %v1492 = vpop.f32.mrb[0].mxu0
      %v1493 = vpop.f32.mrb[0].mxu0
      %v1494 = vadd.f32 0.0, %v1493
      %v1495 = vpop.f32.mrb[0].mxu0
      %1496 = vmatprep.mubr.bf16.mxu0 %v1407
      %1497 = vmatmul.mubr.bf16.gmra.mrb[0].mxu0 %v1391
      %v1498 = vpop.f32.mrb[0].mxu0
      %v1499 = vadd.f32 0.0, %v1498
      %v1500 = vpop.f32.mrb[0].mxu0
      %v1501 = vpop.f32.mrb[0].mxu0
      %v1502 = vadd.f32 0.0, %v1501
      %v1503 = vpop.f32.mrb[0].mxu0
      %1504 = vdwg.mxu0
      %v1505 = vadd.f32 %v1314, %v1317
      %v1506 = vadd.f32 %v1505, %v1322
      %v1507 = vadd.f32 %v1506, %v1325
      %v1508 = vadd.f32 %v1507, %v1330
      %v1509 = vadd.f32 %v1508, %v1333
      %v1510 = vadd.f32 %v1509, %v1338
      %v1511 = vadd.f32 %v1510, %v1341
      %v1512 = vadd.f32 %v1511, %v1346
      %v1513 = vadd.f32 %v1512, %v1349
      %v1514 = vadd.f32 %v1513, %v1354
      %v1515 = vadd.f32 %v1514, %v1357
      %v1516 = vadd.f32 %v1515, %v1362
      %v1517 = vadd.f32 %v1516, %v1365
      %v1518 = vadd.f32 %v1517, %v1370
      %v1519 = vadd.f32 %v1518, %v1373
      %1520 = vadd.xlane.f32.xlu0 %v1519
      %v1521 = vpop.xlane.xlu0 %1520
      %v1522 = vrot.slane %v1521, 4
      %v1523 = vadd.f32 %v1521, %v1522
      %v1524 = vrot.slane %v1523, 2
      %v1525 = vadd.f32 %v1523, %v1524
      %v1526 = vrot.slane %v1525, 1
      %v1527 = vadd.f32 %v1525, %v1526
      %s1528 = vtos %v1527
      %v1529 = vstv %s1528
      %v1530 = vrcp.pop 16384.0
      %v1531 = vmul.f32 %v1529, %v1530
      %v1532 = vsub.f32 %v1314, %v1531
      %v1533 = vsub.f32 %v1317, %v1531
      %v1534 = vsub.f32 %v1322, %v1531
      %v1535 = vsub.f32 %v1325, %v1531
      %v1536 = vsub.f32 %v1330, %v1531
      %v1537 = vsub.f32 %v1333, %v1531
      %v1538 = vsub.f32 %v1338, %v1531
      %v1539 = vsub.f32 %v1341, %v1531
      %v1540 = vsub.f32 %v1346, %v1531
      %v1541 = vsub.f32 %v1349, %v1531
      %v1542 = vsub.f32 %v1354, %v1531
      %v1543 = vsub.f32 %v1357, %v1531
      %v1544 = vsub.f32 %v1362, %v1531
      %v1545 = vsub.f32 %v1365, %v1531
      %v1546 = vsub.f32 %v1370, %v1531
      %v1547 = vsub.f32 %v1373, %v1531
      %v1548 = vadd.f32 %v1443, %v1446
      %v1549 = vadd.f32 %v1548, %v1451
      %v1550 = vadd.f32 %v1549, %v1454
      %v1551 = vadd.f32 %v1550, %v1459
      %v1552 = vadd.f32 %v1551, %v1462
      %v1553 = vadd.f32 %v1552, %v1467
      %v1554 = vadd.f32 %v1553, %v1470
      %v1555 = vadd.f32 %v1554, %v1475
      %v1556 = vadd.f32 %v1555, %v1478
      %v1557 = vadd.f32 %v1556, %v1483
      %v1558 = vadd.f32 %v1557, %v1486
      %v1559 = vadd.f32 %v1558, %v1491
      %v1560 = vadd.f32 %v1559, %v1494
      %v1561 = vadd.f32 %v1560, %v1499
      %v1562 = vadd.f32 %v1561, %v1502
      %1563 = vadd.xlane.f32.xlu0 %v1562
      %v1564 = vpop.xlane.xlu0 %1563
      %v1565 = vrot.slane %v1564, 4
      %v1566 = vadd.f32 %v1564, %v1565
      %v1567 = vrot.slane %v1566, 2
      %v1568 = vadd.f32 %v1566, %v1567
      %v1569 = vrot.slane %v1568, 1
      %v1570 = vadd.f32 %v1568, %v1569
      %s1571 = vtos %v1570
      %v1572 = vstv %s1571
      %v1573 = vmul.f32 %v1572, %v1530
      %v1574 = vsub.f32 %v1443, %v1573
      %v1575 = vsub.f32 %v1446, %v1573
      %v1576 = vsub.f32 %v1451, %v1573
      %v1577 = vsub.f32 %v1454, %v1573
      %v1578 = vsub.f32 %v1459, %v1573
      %v1579 = vsub.f32 %v1462, %v1573
      %v1580 = vsub.f32 %v1467, %v1573
      %v1581 = vsub.f32 %v1470, %v1573
      %v1582 = vsub.f32 %v1475, %v1573
      %v1583 = vsub.f32 %v1478, %v1573
      %v1584 = vsub.f32 %v1483, %v1573
      %v1585 = vsub.f32 %v1486, %v1573
      %v1586 = vsub.f32 %v1491, %v1573
      %v1587 = vsub.f32 %v1494, %v1573
      %v1588 = vsub.f32 %v1499, %v1573
      %v1589 = vsub.f32 %v1502, %v1573
      %v1590 = vmul.f32 %v1532, %v479
      %v1591 = vmul.f32 %v1533, %v482
      %v1592 = vmul.f32 %v1534, %v487
      %v1593 = vmul.f32 %v1535, %v490
      %v1594 = vmul.f32 %v1536, %v495
      %v1595 = vmul.f32 %v1537, %v498
      %v1596 = vmul.f32 %v1538, %v503
      %v1597 = vmul.f32 %v1539, %v506
      %v1598 = vmul.f32 %v1540, %v511
      %v1599 = vmul.f32 %v1541, %v514
      %v1600 = vmul.f32 %v1542, %v519
      %v1601 = vmul.f32 %v1543, %v522
      %v1602 = vmul.f32 %v1544, %v527
      %v1603 = vmul.f32 %v1545, %v530
      %v1604 = vmul.f32 %v1546, %v535
      %v1605 = vmul.f32 %v1547, %v538
      %v1606 = vadd.f32 %v1590, %v1591
      %v1607 = vadd.f32 %v1606, %v1592
      %v1608 = vadd.f32 %v1607, %v1593
      %v1609 = vadd.f32 %v1608, %v1594
      %v1610 = vadd.f32 %v1609, %v1595
      %v1611 = vadd.f32 %v1610, %v1596
      %v1612 = vadd.f32 %v1611, %v1597
      %v1613 = vadd.f32 %v1612, %v1598
      %v1614 = vadd.f32 %v1613, %v1599
      %v1615 = vadd.f32 %v1614, %v1600
      %v1616 = vadd.f32 %v1615, %v1601
      %v1617 = vadd.f32 %v1616, %v1602
      %v1618 = vadd.f32 %v1617, %v1603
      %v1619 = vadd.f32 %v1618, %v1604
      %v1620 = vadd.f32 %v1619, %v1605
      %1621 = vadd.xlane.f32.xlu0 %v1620
      %v1622 = vpop.xlane.xlu0 %1621
      %v1623 = vrot.slane %v1622, 4
      %v1624 = vadd.f32 %v1622, %v1623
      %v1625 = vrot.slane %v1624, 2
      %v1626 = vadd.f32 %v1624, %v1625
      %v1627 = vrot.slane %v1626, 1
      %v1628 = vadd.f32 %v1626, %v1627
      %s1629 = vtos %v1628
      %v1630 = vmul.f32 %v1532, %v704
      %v1631 = vmul.f32 %v1533, %v707
      %v1632 = vmul.f32 %v1534, %v712
      %v1633 = vmul.f32 %v1535, %v715
      %v1634 = vmul.f32 %v1536, %v720
      %v1635 = vmul.f32 %v1537, %v723
      %v1636 = vmul.f32 %v1538, %v728
      %v1637 = vmul.f32 %v1539, %v731
      %v1638 = vmul.f32 %v1540, %v736
      %v1639 = vmul.f32 %v1541, %v739
      %v1640 = vmul.f32 %v1542, %v744
      %v1641 = vmul.f32 %v1543, %v747
      %v1642 = vmul.f32 %v1544, %v752
      %v1643 = vmul.f32 %v1545, %v755
      %v1644 = vmul.f32 %v1546, %v760
      %v1645 = vmul.f32 %v1547, %v763
      %v1646 = vadd.f32 %v1630, %v1631
      %v1647 = vadd.f32 %v1646, %v1632
      %v1648 = vadd.f32 %v1647, %v1633
      %v1649 = vadd.f32 %v1648, %v1634
      %v1650 = vadd.f32 %v1649, %v1635
      %v1651 = vadd.f32 %v1650, %v1636
      %v1652 = vadd.f32 %v1651, %v1637
      %v1653 = vadd.f32 %v1652, %v1638
      %v1654 = vadd.f32 %v1653, %v1639
      %v1655 = vadd.f32 %v1654, %v1640
      %v1656 = vadd.f32 %v1655, %v1641
      %v1657 = vadd.f32 %v1656, %v1642
      %v1658 = vadd.f32 %v1657, %v1643
      %v1659 = vadd.f32 %v1658, %v1644
      %v1660 = vadd.f32 %v1659, %v1645
      %1661 = vadd.xlane.f32.xlu0 %v1660
      %v1662 = vpop.xlane.xlu0 %1661
      %v1663 = vrot.slane %v1662, 4
      %v1664 = vadd.f32 %v1662, %v1663
      %v1665 = vrot.slane %v1664, 2
      %v1666 = vadd.f32 %v1664, %v1665
      %v1667 = vrot.slane %v1666, 1
      %v1668 = vadd.f32 %v1666, %v1667
      %s1669 = vtos %v1668
      %v1670 = vmul.f32 %v1532, %v1532
      %v1671 = vmul.f32 %v1533, %v1533
      %v1672 = vmul.f32 %v1534, %v1534
      %v1673 = vmul.f32 %v1535, %v1535
      %v1674 = vmul.f32 %v1536, %v1536
      %v1675 = vmul.f32 %v1537, %v1537
      %v1676 = vmul.f32 %v1538, %v1538
      %v1677 = vmul.f32 %v1539, %v1539
      %v1678 = vmul.f32 %v1540, %v1540
      %v1679 = vmul.f32 %v1541, %v1541
      %v1680 = vmul.f32 %v1542, %v1542
      %v1681 = vmul.f32 %v1543, %v1543
      %v1682 = vmul.f32 %v1544, %v1544
      %v1683 = vmul.f32 %v1545, %v1545
      %v1684 = vmul.f32 %v1546, %v1546
      %v1685 = vmul.f32 %v1547, %v1547
      %v1686 = vadd.f32 %v1670, %v1671
      %v1687 = vadd.f32 %v1686, %v1672
      %v1688 = vadd.f32 %v1687, %v1673
      %v1689 = vadd.f32 %v1688, %v1674
      %v1690 = vadd.f32 %v1689, %v1675
      %v1691 = vadd.f32 %v1690, %v1676
      %v1692 = vadd.f32 %v1691, %v1677
      %v1693 = vadd.f32 %v1692, %v1678
      %v1694 = vadd.f32 %v1693, %v1679
      %v1695 = vadd.f32 %v1694, %v1680
      %v1696 = vadd.f32 %v1695, %v1681
      %v1697 = vadd.f32 %v1696, %v1682
      %v1698 = vadd.f32 %v1697, %v1683
      %v1699 = vadd.f32 %v1698, %v1684
      %v1700 = vadd.f32 %v1699, %v1685
      %1701 = vadd.xlane.f32.xlu0 %v1700
      %v1702 = vpop.xlane.xlu0 %1701
      %v1703 = vrot.slane %v1702, 4
      %v1704 = vadd.f32 %v1702, %v1703
      %v1705 = vrot.slane %v1704, 2
      %v1706 = vadd.f32 %v1704, %v1705
      %v1707 = vrot.slane %v1706, 1
      %v1708 = vadd.f32 %v1706, %v1707
      %s1709 = vtos %v1708
      %v1710 = vmul.f32 %v479, %v479
      %v1711 = vmul.f32 %v482, %v482
      %v1712 = vmul.f32 %v487, %v487
      %v1713 = vmul.f32 %v490, %v490
      %v1714 = vmul.f32 %v495, %v495
      %v1715 = vmul.f32 %v498, %v498
      %v1716 = vmul.f32 %v503, %v503
      %v1717 = vmul.f32 %v506, %v506
      %v1718 = vmul.f32 %v511, %v511
      %v1719 = vmul.f32 %v514, %v514
      %v1720 = vmul.f32 %v519, %v519
      %v1721 = vmul.f32 %v522, %v522
      %v1722 = vmul.f32 %v527, %v527
      %v1723 = vmul.f32 %v530, %v530
      %v1724 = vmul.f32 %v535, %v535
      %v1725 = vmul.f32 %v538, %v538
      %v1726 = vadd.f32 %v1710, %v1711
      %v1727 = vadd.f32 %v1726, %v1712
      %v1728 = vadd.f32 %v1727, %v1713
      %v1729 = vadd.f32 %v1728, %v1714
      %v1730 = vadd.f32 %v1729, %v1715
      %v1731 = vadd.f32 %v1730, %v1716
      %v1732 = vadd.f32 %v1731, %v1717
      %v1733 = vadd.f32 %v1732, %v1718
      %v1734 = vadd.f32 %v1733, %v1719
      %v1735 = vadd.f32 %v1734, %v1720
      %v1736 = vadd.f32 %v1735, %v1721
      %v1737 = vadd.f32 %v1736, %v1722
      %v1738 = vadd.f32 %v1737, %v1723
      %v1739 = vadd.f32 %v1738, %v1724
      %v1740 = vadd.f32 %v1739, %v1725
      %1741 = vadd.xlane.f32.xlu0 %v1740
      %v1742 = vpop.xlane.xlu0 %1741
      %v1743 = vrot.slane %v1742, 4
      %v1744 = vadd.f32 %v1742, %v1743
      %v1745 = vrot.slane %v1744, 2
      %v1746 = vadd.f32 %v1744, %v1745
      %v1747 = vrot.slane %v1746, 1
      %v1748 = vadd.f32 %v1746, %v1747
      %s1749 = vtos %v1748
      %v1750 = vmul.f32 %v704, %v704
      %v1751 = vmul.f32 %v707, %v707
      %v1752 = vmul.f32 %v712, %v712
      %v1753 = vmul.f32 %v715, %v715
      %v1754 = vmul.f32 %v720, %v720
      %v1755 = vmul.f32 %v723, %v723
      %v1756 = vmul.f32 %v728, %v728
      %v1757 = vmul.f32 %v731, %v731
      %v1758 = vmul.f32 %v736, %v736
      %v1759 = vmul.f32 %v739, %v739
      %v1760 = vmul.f32 %v744, %v744
      %v1761 = vmul.f32 %v747, %v747
      %v1762 = vmul.f32 %v752, %v752
      %v1763 = vmul.f32 %v755, %v755
      %v1764 = vmul.f32 %v760, %v760
      %v1765 = vmul.f32 %v763, %v763
      %v1766 = vadd.f32 %v1750, %v1751
      %v1767 = vadd.f32 %v1766, %v1752
      %v1768 = vadd.f32 %v1767, %v1753
      %v1769 = vadd.f32 %v1768, %v1754
      %v1770 = vadd.f32 %v1769, %v1755
      %v1771 = vadd.f32 %v1770, %v1756
      %v1772 = vadd.f32 %v1771, %v1757
      %v1773 = vadd.f32 %v1772, %v1758
      %v1774 = vadd.f32 %v1773, %v1759
      %v1775 = vadd.f32 %v1774, %v1760
      %v1776 = vadd.f32 %v1775, %v1761
      %v1777 = vadd.f32 %v1776, %v1762
      %v1778 = vadd.f32 %v1777, %v1763
      %v1779 = vadd.f32 %v1778, %v1764
      %v1780 = vadd.f32 %v1779, %v1765
      %1781 = vadd.xlane.f32.xlu0 %v1780
      %v1782 = vpop.xlane.xlu0 %1781
      %v1783 = vrot.slane %v1782, 4
      %v1784 = vadd.f32 %v1782, %v1783
      %v1785 = vrot.slane %v1784, 2
      %v1786 = vadd.f32 %v1784, %v1785
      %v1787 = vrot.slane %v1786, 1
      %v1788 = vadd.f32 %v1786, %v1787
      %s1789 = vtos %v1788
      %v1790 = vmul.f32 %v1574, %v479
      %v1791 = vmul.f32 %v1575, %v482
      %v1792 = vmul.f32 %v1576, %v487
      %v1793 = vmul.f32 %v1577, %v490
      %v1794 = vmul.f32 %v1578, %v495
      %v1795 = vmul.f32 %v1579, %v498
      %v1796 = vmul.f32 %v1580, %v503
      %v1797 = vmul.f32 %v1581, %v506
      %v1798 = vmul.f32 %v1582, %v511
      %v1799 = vmul.f32 %v1583, %v514
      %v1800 = vmul.f32 %v1584, %v519
      %v1801 = vmul.f32 %v1585, %v522
      %v1802 = vmul.f32 %v1586, %v527
      %v1803 = vmul.f32 %v1587, %v530
      %v1804 = vmul.f32 %v1588, %v535
      %v1805 = vmul.f32 %v1589, %v538
      %v1806 = vadd.f32 %v1790, %v1791
      %v1807 = vadd.f32 %v1806, %v1792
      %v1808 = vadd.f32 %v1807, %v1793
      %v1809 = vadd.f32 %v1808, %v1794
      %v1810 = vadd.f32 %v1809, %v1795
      %v1811 = vadd.f32 %v1810, %v1796
      %v1812 = vadd.f32 %v1811, %v1797
      %v1813 = vadd.f32 %v1812, %v1798
      %v1814 = vadd.f32 %v1813, %v1799
      %v1815 = vadd.f32 %v1814, %v1800
      %v1816 = vadd.f32 %v1815, %v1801
      %v1817 = vadd.f32 %v1816, %v1802
      %v1818 = vadd.f32 %v1817, %v1803
      %v1819 = vadd.f32 %v1818, %v1804
      %v1820 = vadd.f32 %v1819, %v1805
      %1821 = vadd.xlane.f32.xlu0 %v1820
      %v1822 = vpop.xlane.xlu0 %1821
      %v1823 = vrot.slane %v1822, 4
      %v1824 = vadd.f32 %v1822, %v1823
      %v1825 = vrot.slane %v1824, 2
      %v1826 = vadd.f32 %v1824, %v1825
      %v1827 = vrot.slane %v1826, 1
      %v1828 = vadd.f32 %v1826, %v1827
      %s1829 = vtos %v1828
      %v1830 = vmul.f32 %v1574, %v929
      %v1831 = vmul.f32 %v1575, %v932
      %v1832 = vmul.f32 %v1576, %v937
      %v1833 = vmul.f32 %v1577, %v940
      %v1834 = vmul.f32 %v1578, %v945
      %v1835 = vmul.f32 %v1579, %v948
      %v1836 = vmul.f32 %v1580, %v953
      %v1837 = vmul.f32 %v1581, %v956
      %v1838 = vmul.f32 %v1582, %v961
      %v1839 = vmul.f32 %v1583, %v964
      %v1840 = vmul.f32 %v1584, %v969
      %v1841 = vmul.f32 %v1585, %v972
      %v1842 = vmul.f32 %v1586, %v977
      %v1843 = vmul.f32 %v1587, %v980
      %v1844 = vmul.f32 %v1588, %v985
      %v1845 = vmul.f32 %v1589, %v988
      %v1846 = vadd.f32 %v1830, %v1831
      %v1847 = vadd.f32 %v1846, %v1832
      %v1848 = vadd.f32 %v1847, %v1833
      %v1849 = vadd.f32 %v1848, %v1834
      %v1850 = vadd.f32 %v1849, %v1835
      %v1851 = vadd.f32 %v1850, %v1836
      %v1852 = vadd.f32 %v1851, %v1837
      %v1853 = vadd.f32 %v1852, %v1838
      %v1854 = vadd.f32 %v1853, %v1839
      %v1855 = vadd.f32 %v1854, %v1840
      %v1856 = vadd.f32 %v1855, %v1841
      %v1857 = vadd.f32 %v1856, %v1842
      %v1858 = vadd.f32 %v1857, %v1843
      %v1859 = vadd.f32 %v1858, %v1844
      %v1860 = vadd.f32 %v1859, %v1845
      %1861 = vadd.xlane.f32.xlu0 %v1860
      %v1862 = vpop.xlane.xlu0 %1861
      %v1863 = vrot.slane %v1862, 4
      %v1864 = vadd.f32 %v1862, %v1863
      %v1865 = vrot.slane %v1864, 2
      %v1866 = vadd.f32 %v1864, %v1865
      %v1867 = vrot.slane %v1866, 1
      %v1868 = vadd.f32 %v1866, %v1867
      %s1869 = vtos %v1868
      %v1870 = vmul.f32 %v1574, %v1574
      %v1871 = vmul.f32 %v1575, %v1575
      %v1872 = vmul.f32 %v1576, %v1576
      %v1873 = vmul.f32 %v1577, %v1577
      %v1874 = vmul.f32 %v1578, %v1578
      %v1875 = vmul.f32 %v1579, %v1579
      %v1876 = vmul.f32 %v1580, %v1580
      %v1877 = vmul.f32 %v1581, %v1581
      %v1878 = vmul.f32 %v1582, %v1582
      %v1879 = vmul.f32 %v1583, %v1583
      %v1880 = vmul.f32 %v1584, %v1584
      %v1881 = vmul.f32 %v1585, %v1585
      %v1882 = vmul.f32 %v1586, %v1586
      %v1883 = vmul.f32 %v1587, %v1587
      %v1884 = vmul.f32 %v1588, %v1588
      %v1885 = vmul.f32 %v1589, %v1589
      %v1886 = vadd.f32 %v1870, %v1871
      %v1887 = vadd.f32 %v1886, %v1872
      %v1888 = vadd.f32 %v1887, %v1873
      %v1889 = vadd.f32 %v1888, %v1874
      %v1890 = vadd.f32 %v1889, %v1875
      %v1891 = vadd.f32 %v1890, %v1876
      %v1892 = vadd.f32 %v1891, %v1877
      %v1893 = vadd.f32 %v1892, %v1878
      %v1894 = vadd.f32 %v1893, %v1879
      %v1895 = vadd.f32 %v1894, %v1880
      %v1896 = vadd.f32 %v1895, %v1881
      %v1897 = vadd.f32 %v1896, %v1882
      %v1898 = vadd.f32 %v1897, %v1883
      %v1899 = vadd.f32 %v1898, %v1884
      %v1900 = vadd.f32 %v1899, %v1885
      %1901 = vadd.xlane.f32.xlu0 %v1900
      %v1902 = vpop.xlane.xlu0 %1901
      %v1903 = vrot.slane %v1902, 4
      %v1904 = vadd.f32 %v1902, %v1903
      %v1905 = vrot.slane %v1904, 2
      %v1906 = vadd.f32 %v1904, %v1905
      %v1907 = vrot.slane %v1906, 1
      %v1908 = vadd.f32 %v1906, %v1907
      %s1909 = vtos %v1908
      %v1910 = vmul.f32 %v929, %v929
      %v1911 = vmul.f32 %v932, %v932
      %v1912 = vmul.f32 %v937, %v937
      %v1913 = vmul.f32 %v940, %v940
      %v1914 = vmul.f32 %v945, %v945
      %v1915 = vmul.f32 %v948, %v948
      %v1916 = vmul.f32 %v953, %v953
      %v1917 = vmul.f32 %v956, %v956
      %v1918 = vmul.f32 %v961, %v961
      %v1919 = vmul.f32 %v964, %v964
      %v1920 = vmul.f32 %v969, %v969
      %v1921 = vmul.f32 %v972, %v972
      %v1922 = vmul.f32 %v977, %v977
      %v1923 = vmul.f32 %v980, %v980
      %v1924 = vmul.f32 %v985, %v985
      %v1925 = vmul.f32 %v988, %v988
      %v1926 = vadd.f32 %v1910, %v1911
      %v1927 = vadd.f32 %v1926, %v1912
      %v1928 = vadd.f32 %v1927, %v1913
      %v1929 = vadd.f32 %v1928, %v1914
      %v1930 = vadd.f32 %v1929, %v1915
      %v1931 = vadd.f32 %v1930, %v1916
      %v1932 = vadd.f32 %v1931, %v1917
      %v1933 = vadd.f32 %v1932, %v1918
      %v1934 = vadd.f32 %v1933, %v1919
      %v1935 = vadd.f32 %v1934, %v1920
      %v1936 = vadd.f32 %v1935, %v1921
      %v1937 = vadd.f32 %v1936, %v1922
      %v1938 = vadd.f32 %v1937, %v1923
      %v1939 = vadd.f32 %v1938, %v1924
      %v1940 = vadd.f32 %v1939, %v1925
      %1941 = vadd.xlane.f32.xlu0 %v1940
      %v1942 = vpop.xlane.xlu0 %1941
      %v1943 = vrot.slane %v1942, 4
      %v1944 = vadd.f32 %v1942, %v1943
      %v1945 = vrot.slane %v1944, 2
      %v1946 = vadd.f32 %v1944, %v1945
      %v1947 = vrot.slane %v1946, 1
      %v1948 = vadd.f32 %v1946, %v1947
      %s1949 = vtos %v1948
      %v1950 = vlaneseq
      %v1951 = vand.u32 %v1950, 127
      %vm1952 = vcmp.eq.s32.totalorder %v1951, 0
      %v1953 = vstv %s1629
      %v1954 = vsel %vm1952, %v1953, 0.0
      %v1955 = vadd.f32 %v1954, 0.0
      %vm1956 = vcmp.eq.s32.totalorder %v1951, 1
      %v1957 = vstv %s1669
      %v1958 = vsel %vm1956, %v1957, 0.0
      %v1959 = vadd.f32 %v1955, %v1958
      %vm1960 = vcmp.eq.s32.totalorder %v1951, 2
      %v1961 = vstv %s1709
      %v1962 = vsel %vm1960, %v1961, 0.0
      %v1963 = vadd.f32 %v1959, %v1962
      %vm1964 = vcmp.eq.s32.totalorder %v1951, 3
      %v1965 = vstv %s1749
      %v1966 = vsel %vm1964, %v1965, 0.0
      %v1967 = vadd.f32 %v1963, %v1966
      %vm1968 = vcmp.eq.s32.totalorder %v1951, 4
      %v1969 = vstv %s1789
      %v1970 = vsel %vm1968, %v1969, 0.0
      %v1971 = vadd.f32 %v1967, %v1970
      %vm1972 = vcmp.eq.s32.totalorder %v1951, 5
      %v1973 = vstv %s1829
      %v1974 = vsel %vm1972, %v1973, 0.0
      %v1975 = vadd.f32 %v1971, %v1974
      %vm1976 = vcmp.eq.s32.totalorder %v1951, 6
      %v1977 = vstv %s1869
      %v1978 = vsel %vm1976, %v1977, 0.0
      %v1979 = vadd.f32 %v1975, %v1978
      %vm1980 = vcmp.eq.s32.totalorder %v1951, 7
      %v1981 = vstv %s1909
      %v1982 = vsel %vm1980, %v1981, 0.0
      %v1983 = vadd.f32 %v1979, %v1982
      %vm1984 = vcmp.eq.s32.totalorder %v1951, 8
      %v1985 = vstv %s1949
      %v1986 = vsel %vm1984, %v1985, 0.0
      %v1987 = vadd.f32 %v1983, %v1986
      %vm1988 = vcmask 65536
      %1989 = vst.msk [vmem:[%s218] sm:$0x1] %vm1988, %v1987
      %p1990 = scmp.lt.s32.totalorder %s14, 1
      %s1991 = scalar_select %p1990, %s14, 1
      %s1992 = scalar_lea.vmem %s3, %s1991
      // Predicated region
      $region33: #{ressl_forward.5} parent=31 // pred_check
        %p1993 = pneg %p110
      $region34: #{ressl_forward.5} parent=31 // pred_check_branch
        %1995 = sbr.rel (%p1993) target = $region36
      $region35: #{ressl_forward.5} parent=31 // pred_region
        _
      $region36: #{ressl_forward.5} parent=31 // pred_fallthru
        _
    $region32: #{ressl_forward.5} parent=5 // pred_fallthru
      _
    %p1996 = scmp.le.s32.totalorder 2, %s9
    // Predicated region
    $region37: #{ressl_forward.5} parent=5 // pred_check
      %p1997 = pneg %p1996
    $region38: #{ressl_forward.5} parent=5 // pred_check_branch
      %1999 = sbr.rel (%p1997) target = $region40
    $region39: #{ressl_forward.5} parent=5 // pred_region
      %s2000 = ssub.s32 %s9, 2
      // Predicated region
      $region41: #{ressl_forward.5} parent=39 // pred_check
        %p2001 = pneg %p116
      $region42: #{ressl_forward.5} parent=39 // pred_check_branch
        %2003 = sbr.rel (%p2001) target = $region44
      $region43: #{ressl_forward.5} parent=39 // pred_region
        %p2004 = scmp.lt.s32.totalorder %s15, 1
        %s2005 = scalar_select %p2004, %s15, 1
        %s2006 = scalar_lea.vmem %s3, %s2005
      $region44: #{ressl_forward.5} parent=39 // pred_fallthru
        _
    $region40: #{ressl_forward.5} parent=5 // pred_fallthru
      _
  $region6: #{ressl_forward.5} parent=0 // loop_footer
    %s13 = sadd.s32 1, %s9
  $region7: #{ressl_forward.5} parent=0 // loop_footer_branch
    %8 = sbr.rel target = $region3
  $region8: #{ressl_forward.5} parent=0 // loop_exit
    _

</llo_original>
